<compile_context>
chip_gen: v7x
topology: tpu7x:2x2x1
jax: 0.10.0
libtpu: 0.0.40
codegen_flags: <defaults>
</compile_context>

<pallas_src>
import functools

import jax
import jax.numpy as jnp
from jax.experimental import pallas as pl
from jax.experimental.pallas import tpu as pltpu


# ----------------------------- model config ---------------------------------
VOCAB = 100
MAX_POS = 16
HIDDEN = 32
NUM_HEADS = 2
HEAD_DIM = HIDDEN // NUM_HEADS
FFN = 64
NUM_LAYERS = 2
NUM_CLASSES = 3
LN_EPS = 1e-12
C_PAD = 128      # lane-dense padded classifier width


# --------------------------- in-kernel helpers -------------------------------
def _layer_norm(x, g, b):
    """LayerNorm over the last dim (f32); g, b are [1, H]."""
    mu = jnp.mean(x, axis=-1, keepdims=True)
    var = jnp.mean((x - mu) * (x - mu), axis=-1, keepdims=True)
    return (x - mu) * jax.lax.rsqrt(var + LN_EPS) * g + b


def _gelu(y):
    # TODO(synk): HF BERT uses erf GELU; tanh approximation used here.
    return 0.5 * y * (1.0 + jnp.tanh(0.7978845608028654 * (y + 0.044715 * y * y * y)))


# ------------------------------ fused kernel ---------------------------------
def _encoder_kernel(
    ids_ref,                                             # [n_steps, M] int32, SMEM
    tok_ref, pos_ref, mask_ref,
    emb_g_ref, emb_b_ref,
    wq_ref, bq_ref, wk_ref, bk_ref, wv_ref, bv_ref,
    wo_ref, bo_ref, ln1_g_ref, ln1_b_ref,
    w1_ref, b1_ref, w2_ref, b2_ref, ln2_g_ref, ln2_b_ref,
    pool_w_ref, pool_b_ref, cls_w_ref, cls_b_ref,
    out_ref,
    *, seq_len,
):
    """One grid step == BP packed sequences: embeddings + encoder + pooler + classifier."""
    b = pl.program_id(0)
    M = pos_ref.shape[0]            # BP * seq_len (static)
    BP = M // seq_len
    bf16 = jnp.bfloat16
    f32 = jnp.float32

    # ---- embeddings: in-kernel token gather (VMEM table, SMEM ids) + pos/type ----
    rows = [tok_ref[ids_ref[b, i]] for i in range(M)]     # each [1, H], dynamic row load
    x = jnp.concatenate(rows, axis=0) + pos_ref[...]      # [M, H] f32
    x = _layer_norm(x, emb_g_ref[...], emb_b_ref[...])

    add_mask = mask_ref[...]        # [M, M] block-diagonal + key-padding additive mask

    for l in range(NUM_LAYERS):
        h_in = x                    # [M, H] f32
        h_bf = h_in.astype(bf16)

        # ---- self-attention: per-head weights, no in-vreg lane slicing -----------
        attn = bo_ref[l]            # [1, H] f32, broadcasts over rows
        for hh in range(NUM_HEADS):
            w = l * NUM_HEADS + hh
            q = jnp.dot(h_bf, wq_ref[w], preferred_element_type=f32) + bq_ref[w]  # scale folded
            k = jnp.dot(h_bf, wk_ref[w], preferred_element_type=f32) + bk_ref[w]
            v = jnp.dot(h_bf, wv_ref[w], preferred_element_type=f32) + bv_ref[w]

            s = jax.lax.dot_general(q.astype(bf16), k.astype(bf16),
                                    (((1,), (1,)), ((), ())),
                                    preferred_element_type=f32)                    # [M, M]
            s = s + add_mask
            s = s - jnp.max(s, axis=-1, keepdims=True)
            pr = jnp.exp(s)
            pr = pr * pl.reciprocal(jnp.sum(pr, axis=-1, keepdims=True), approx=True)
            o = jnp.dot(pr.astype(bf16), v.astype(bf16), preferred_element_type=f32)
            # Fold the output projection per head: concat_h(o_h) @ Wo == sum_h o_h @ Wo_h.
            attn = attn + jnp.dot(o.astype(bf16), wo_ref[w], preferred_element_type=f32)

        x = _layer_norm(h_in + attn, ln1_g_ref[l], ln1_b_ref[l])

        # ---- FFN ------------------------------------------------------------------
        x_bf = x.astype(bf16)
        ffn = jnp.dot(x_bf, w1_ref[l], preferred_element_type=f32) + b1_ref[l]
        ffn = _gelu(ffn)
        ffn = jnp.dot(ffn.astype(bf16), w2_ref[l], preferred_element_type=f32) + b2_ref[l]
        x = _layer_norm(x + ffn, ln2_g_ref[l], ln2_b_ref[l])

    # ---- pooler (tanh dense on [CLS] rows, one per packed sequence) + classifier ----
    cls = jnp.concatenate([x[j * seq_len:j * seq_len + 1, :] for j in range(BP)], axis=0)
    pooled = jnp.tanh(jnp.dot(cls.astype(bf16), pool_w_ref[...],
                              preferred_element_type=f32) + pool_b_ref[...])      # [BP, H]
    logits = (jnp.dot(pooled.astype(bf16), cls_w_ref[...],
                      preferred_element_type=f32) + cls_b_ref[...])               # [BP, C_PAD]

    # One sequence per sublane, lane-dense 128-wide store.
    out_ref[...] = logits.astype(out_ref.dtype)


# ------------------------------ parameters -----------------------------------
def init_params(key):
    def nrm(k, shape, std=0.02):
        return std * jax.random.normal(k, shape, dtype=jnp.float32)

    keys = iter(jax.random.split(key, 24))
    L, H, NH, dH = NUM_LAYERS, HIDDEN, NUM_HEADS, HEAD_DIM
    scale = 1.0 / (dH ** 0.5)
    bf = jnp.bfloat16

    wq = nrm(next(keys), (L, NH, H, dH)) * scale   # attention scale folded into Q weights
    wk = nrm(next(keys), (L, NH, H, dH))
    wv = nrm(next(keys), (L, NH, H, dH))
    wo = nrm(next(keys), (L, NH, dH, H))
    cls_w = nrm(next(keys), (H, NUM_CLASSES))
    cls_w_pad = jnp.zeros((H, C_PAD), jnp.float32).at[:, :NUM_CLASSES].set(cls_w)

    return {
        "tok_emb": nrm(next(keys), (VOCAB, H)),
        "pos_emb": nrm(next(keys), (MAX_POS, H)),
        "type_emb": nrm(next(keys), (2, H)),
        "emb_ln_g": jnp.ones((1, H), jnp.float32),
        "emb_ln_b": jnp.zeros((1, H), jnp.float32),
        # Attention weights pre-split per head (relayout at init, not in the kernel).
        "wq": wq.reshape(L * NH, H, dH).astype(bf),
        "wk": wk.reshape(L * NH, H, dH).astype(bf),
        "wv": wv.reshape(L * NH, H, dH).astype(bf),
        "wo": wo.reshape(L * NH, dH, H).astype(bf),
        "bq": jnp.zeros((L * NH, 1, dH), jnp.float32),   # (scale fold: zero bias unaffected)
        "bk": jnp.zeros((L * NH, 1, dH), jnp.float32),
        "bv": jnp.zeros((L * NH, 1, dH), jnp.float32),
        "bo": jnp.zeros((L, 1, H), jnp.float32),
        "ln1_g": jnp.ones((L, 1, H), jnp.float32),
        "ln1_b": jnp.zeros((L, 1, H), jnp.float32),
        "w1": nrm(next(keys), (L, H, FFN)).astype(bf),
        "b1": jnp.zeros((L, 1, FFN), jnp.float32),
        "w2": nrm(next(keys), (L, FFN, H)).astype(bf),
        "b2": jnp.zeros((L, 1, H), jnp.float32),
        "ln2_g": jnp.ones((L, 1, H), jnp.float32),
        "ln2_b": jnp.zeros((L, 1, H), jnp.float32),
        "pool_w": nrm(next(keys), (H, H)).astype(bf),
        "pool_b": jnp.zeros((1, H), jnp.float32),
        "cls_w_pad": cls_w_pad.astype(bf),
        "cls_b_pad": jnp.zeros((1, C_PAD), jnp.float32),
    }


# ------------------------------ forward pass ----------------------------------
def forward(params, ids, msk):
    """ids: int32 [B, S]; msk: float32 [B, S] (1 keep, 0 pad) -> logits [B, NUM_CLASSES]."""
    B, S = ids.shape
    assert S <= MAX_POS

    # ---- batch tiling: pack BP sequences per grid step along the sublane axis ----
    bp_max = max(1, 128 // S)
    BP = min(B, bp_max)
    while (BP * S) % 8 != 0 and BP < bp_max:   # sublane alignment (perf only)
        BP += 1
    n_steps = -(-B // BP)
    B_pad = n_steps * BP
    M = BP * S

    if B_pad != B:
        ids = jnp.pad(ids, ((0, B_pad - B), (0, 0)))
        msk = jnp.pad(msk, ((0, B_pad - B), (0, 0)))   # padded seqs: all keys masked (safe)

    ids_pk = ids.reshape(n_steps, M).astype(jnp.int32)

    # Block-diagonal (per-sequence) + key-padding additive mask, [n_steps, M, M].
    seq_of_row = jnp.repeat(jnp.arange(BP, dtype=jnp.int32), S)
    same = (seq_of_row[:, None] == seq_of_row[None, :]).astype(jnp.float32)
    key_ok = msk.astype(jnp.float32).reshape(n_steps, 1, M)
    add_mask = (1.0 - same[None, :, :] * key_ok) * jnp.float32(-1e9)

    # Position (+ token-type-0) embeddings for one packed block; constant across steps.
    pos_tile = (jnp.tile(params["pos_emb"][:S], (BP, 1))
                + params["type_emb"][0][None, :]).astype(jnp.float32)

    # Token table as [V, 1, H] so each row is its own tile -> tile-aligned dynamic gather.
    tok3 = params["tok_emb"].reshape(VOCAB, 1, HIDDEN)

    p = params

    def const(a):   # weight resident across the whole grid (block index constant)
        return pl.BlockSpec(a.shape, lambda b, i: (0,) * a.ndim)

    grid_spec = pltpu.PrefetchScalarGridSpec(
        num_scalar_prefetch=1,            # ids -> SMEM
        grid=(n_steps,),
        in_specs=[
            const(tok3), const(pos_tile),
            pl.BlockSpec((None, M, M), lambda b, i: (b, 0, 0)),       # per-step mask
            const(p["emb_ln_g"]), const(p["emb_ln_b"]),
            const(p["wq"]), const(p["bq"]),
            const(p["wk"]), const(p["bk"]),
            const(p["wv"]), const(p["bv"]),
            const(p["wo"]), const(p["bo"]),
            const(p["ln1_g"]), const(p["ln1_b"]),
            const(p["w1"]), const(p["b1"]),
            const(p["w2"]), const(p["b2"]),
            const(p["ln2_g"]), const(p["ln2_b"]),
            const(p["pool_w"]), const(p["pool_b"]),
            const(p["cls_w_pad"]), const(p["cls_b_pad"]),
        ],
        out_specs=pl.BlockSpec((None, BP, C_PAD), lambda b, i: (b, 0, 0)),
    )

    out = pl.pallas_call(
        functools.partial(_encoder_kernel, seq_len=S),
        out_shape=jax.ShapeDtypeStruct((n_steps, BP, C_PAD), jnp.float32),
        grid_spec=grid_spec,
        compiler_params=pltpu.CompilerParams(dimension_semantics=("parallel",)),
    )(
        ids_pk,
        tok3, pos_tile, add_mask,
        p["emb_ln_g"], p["emb_ln_b"],
        p["wq"], p["bq"], p["wk"], p["bk"], p["wv"], p["bv"],
        p["wo"], p["bo"], p["ln1_g"], p["ln1_b"],
        p["w1"], p["b1"], p["w2"], p["b2"], p["ln2_g"], p["ln2_b"],
        p["pool_w"], p["pool_b"], p["cls_w_pad"], p["cls_b_pad"],
    )
    return out.reshape(B_pad, C_PAD)[:B, :NUM_CLASSES]


# ----------------------------------- main -------------------------------------
if __name__ == "__main__":
    key = jax.random.PRNGKey(0)
    k_param, k_ids = jax.random.split(key)

    params = init_params(k_param)

    B, S = 2, 8
    ids = jax.random.randint(k_ids, (B, S), 0, VOCAB, dtype=jnp.int32)
    msk = jnp.ones((B, S), jnp.float32).at[1, 6:].set(0.0)   # second example padded

    logits = jax.jit(forward)(params, ids, msk)
    logits = jax.block_until_ready(logits)

    assert logits.shape == (B, NUM_CLASSES), logits.shape
    assert bool(jnp.all(jnp.isfinite(logits)))
    print("KERNEL_OK")
</pallas_src>

<mosaic_0001>
module attributes {stable_mosaic.version = 11 : i64} {
  func.func @_encoder_kernel(%arg0: i32, %arg1: memref<1x16xi32, #tpu.memory_space<smem>>, %arg2: memref<100x1x32xf32, #tpu.memory_space<vmem>>, %arg3: memref<16x32xf32, #tpu.memory_space<vmem>>, %arg4: memref<1x16x16xf32, #tpu.memory_space<vmem>>, %arg5: memref<1x32xf32, #tpu.memory_space<vmem>>, %arg6: memref<1x32xf32, #tpu.memory_space<vmem>>, %arg7: memref<4x32x16xbf16, #tpu.memory_space<vmem>>, %arg8: memref<4x1x16xf32, #tpu.memory_space<vmem>>, %arg9: memref<4x32x16xbf16, #tpu.memory_space<vmem>>, %arg10: memref<4x1x16xf32, #tpu.memory_space<vmem>>, %arg11: memref<4x32x16xbf16, #tpu.memory_space<vmem>>, %arg12: memref<4x1x16xf32, #tpu.memory_space<vmem>>, %arg13: memref<4x16x32xbf16, #tpu.memory_space<vmem>>, %arg14: memref<2x1x32xf32, #tpu.memory_space<vmem>>, %arg15: memref<2x1x32xf32, #tpu.memory_space<vmem>>, %arg16: memref<2x1x32xf32, #tpu.memory_space<vmem>>, %arg17: memref<2x32x64xbf16, #tpu.memory_space<vmem>>, %arg18: memref<2x1x64xf32, #tpu.memory_space<vmem>>, %arg19: memref<2x64x32xbf16, #tpu.memory_space<vmem>>, %arg20: memref<2x1x32xf32, #tpu.memory_space<vmem>>, %arg21: memref<2x1x32xf32, #tpu.memory_space<vmem>>, %arg22: memref<2x1x32xf32, #tpu.memory_space<vmem>>, %arg23: memref<32x32xbf16, #tpu.memory_space<vmem>>, %arg24: memref<1x32xf32, #tpu.memory_space<vmem>>, %arg25: memref<32x128xbf16, #tpu.memory_space<vmem>>, %arg26: memref<1x128xf32, #tpu.memory_space<vmem>>, %arg27: memref<1x2x128xf32, #tpu.memory_space<vmem>>) attributes {dimension_semantics = [#tpu.dimension_semantics<parallel>], iteration_bounds = array<i64: 1>, scalar_prefetch = 1 : i64, scratch_operands = 0 : i64, tpu.core_type = #tpu.core_type<tc>, window_params = [{pipeline_mode = #tpu.pipeline_mode<synchronous>, transform_indices = @transform_0, window_bounds = array<i64: 100, 1, 32>}, {pipeline_mode = #tpu.pipeline_mode<synchronous>, transform_indices = @transform_1, window_bounds = array<i64: 16, 32>}, {transform_indices = @transform_2, window_bounds = array<i64: 1, 16, 16>}, {pipeline_mode = #tpu.pipeline_mode<synchronous>, transform_indices = @transform_3, window_bounds = array<i64: 1, 32>}, {pipeline_mode = #tpu.pipeline_mode<synchronous>, transform_indices = @transform_4, window_bounds = array<i64: 1, 32>}, {pipeline_mode = #tpu.pipeline_mode<synchronous>, transform_indices = @transform_5, window_bounds = array<i64: 4, 32, 16>}, {pipeline_mode = #tpu.pipeline_mode<synchronous>, transform_indices = @transform_6, window_bounds = array<i64: 4, 1, 16>}, {pipeline_mode = #tpu.pipeline_mode<synchronous>, transform_indices = @transform_7, window_bounds = array<i64: 4, 32, 16>}, {pipeline_mode = #tpu.pipeline_mode<synchronous>, transform_indices = @transform_8, window_bounds = array<i64: 4, 1, 16>}, {pipeline_mode = #tpu.pipeline_mode<synchronous>, transform_indices = @transform_9, window_bounds = array<i64: 4, 32, 16>}, {pipeline_mode = #tpu.pipeline_mode<synchronous>, transform_indices = @transform_10, window_bounds = array<i64: 4, 1, 16>}, {pipeline_mode = #tpu.pipeline_mode<synchronous>, transform_indices = @transform_11, window_bounds = array<i64: 4, 16, 32>}, {pipeline_mode = #tpu.pipeline_mode<synchronous>, transform_indices = @transform_12, window_bounds = array<i64: 2, 1, 32>}, {pipeline_mode = #tpu.pipeline_mode<synchronous>, transform_indices = @transform_13, window_bounds = array<i64: 2, 1, 32>}, {pipeline_mode = #tpu.pipeline_mode<synchronous>, transform_indices = @transform_14, window_bounds = array<i64: 2, 1, 32>}, {pipeline_mode = #tpu.pipeline_mode<synchronous>, transform_indices = @transform_15, window_bounds = array<i64: 2, 32, 64>}, {pipeline_mode = #tpu.pipeline_mode<synchronous>, transform_indices = @transform_16, window_bounds = array<i64: 2, 1, 64>}, {pipeline_mode = #tpu.pipeline_mode<synchronous>, transform_indices = @transform_17, window_bounds = array<i64: 2, 64, 32>}, {pipeline_mode = #tpu.pipeline_mode<synchronous>, transform_indices = @transform_18, window_bounds = array<i64: 2, 1, 32>}, {pipeline_mode = #tpu.pipeline_mode<synchronous>, transform_indices = @transform_19, window_bounds = array<i64: 2, 1, 32>}, {pipeline_mode = #tpu.pipeline_mode<synchronous>, transform_indices = @transform_20, window_bounds = array<i64: 2, 1, 32>}, {pipeline_mode = #tpu.pipeline_mode<synchronous>, transform_indices = @transform_21, window_bounds = array<i64: 32, 32>}, {pipeline_mode = #tpu.pipeline_mode<synchronous>, transform_indices = @transform_22, window_bounds = array<i64: 1, 32>}, {pipeline_mode = #tpu.pipeline_mode<synchronous>, transform_indices = @transform_23, window_bounds = array<i64: 32, 128>}, {pipeline_mode = #tpu.pipeline_mode<synchronous>, transform_indices = @transform_24, window_bounds = array<i64: 1, 128>}, {transform_indices = @transform_25, window_bounds = array<i64: 1, 2, 128>}]} {
    %0 = arith.index_cast %arg0 : i32 to index
    %c0 = arith.constant 0 : index
    %1 = memref.load %arg1[%0, %c0] : memref<1x16xi32, #tpu.memory_space<smem>>
    %2 = arith.index_cast %1 : i32 to index
    %c0_0 = arith.constant 0 : index
    %c0_1 = arith.constant 0 : index
    %3 = vector.load %arg2[%2, %c0_0, %c0_1] : memref<100x1x32xf32, #tpu.memory_space<vmem>>, vector<1x1x32xf32>
    %4 = vector.shape_cast %3 : vector<1x1x32xf32> to vector<1x32xf32>
    %5 = arith.index_cast %arg0 : i32 to index
    %c1 = arith.constant 1 : index
    %6 = memref.load %arg1[%5, %c1] : memref<1x16xi32, #tpu.memory_space<smem>>
    %7 = arith.index_cast %6 : i32 to index
    %c0_2 = arith.constant 0 : index
    %c0_3 = arith.constant 0 : index
    %8 = vector.load %arg2[%7, %c0_2, %c0_3] : memref<100x1x32xf32, #tpu.memory_space<vmem>>, vector<1x1x32xf32>
    %9 = vector.shape_cast %8 : vector<1x1x32xf32> to vector<1x32xf32>
    %10 = arith.index_cast %arg0 : i32 to index
    %c2 = arith.constant 2 : index
    %11 = memref.load %arg1[%10, %c2] : memref<1x16xi32, #tpu.memory_space<smem>>
    %12 = arith.index_cast %11 : i32 to index
    %c0_4 = arith.constant 0 : index
    %c0_5 = arith.constant 0 : index
    %13 = vector.load %arg2[%12, %c0_4, %c0_5] : memref<100x1x32xf32, #tpu.memory_space<vmem>>, vector<1x1x32xf32>
    %14 = vector.shape_cast %13 : vector<1x1x32xf32> to vector<1x32xf32>
    %15 = arith.index_cast %arg0 : i32 to index
    %c3 = arith.constant 3 : index
    %16 = memref.load %arg1[%15, %c3] : memref<1x16xi32, #tpu.memory_space<smem>>
    %17 = arith.index_cast %16 : i32 to index
    %c0_6 = arith.constant 0 : index
    %c0_7 = arith.constant 0 : index
    %18 = vector.load %arg2[%17, %c0_6, %c0_7] : memref<100x1x32xf32, #tpu.memory_space<vmem>>, vector<1x1x32xf32>
    %19 = vector.shape_cast %18 : vector<1x1x32xf32> to vector<1x32xf32>
    %20 = arith.index_cast %arg0 : i32 to index
    %c4 = arith.constant 4 : index
    %21 = memref.load %arg1[%20, %c4] : memref<1x16xi32, #tpu.memory_space<smem>>
    %22 = arith.index_cast %21 : i32 to index
    %c0_8 = arith.constant 0 : index
    %c0_9 = arith.constant 0 : index
    %23 = vector.load %arg2[%22, %c0_8, %c0_9] : memref<100x1x32xf32, #tpu.memory_space<vmem>>, vector<1x1x32xf32>
    %24 = vector.shape_cast %23 : vector<1x1x32xf32> to vector<1x32xf32>
    %25 = arith.index_cast %arg0 : i32 to index
    %c5 = arith.constant 5 : index
    %26 = memref.load %arg1[%25, %c5] : memref<1x16xi32, #tpu.memory_space<smem>>
    %27 = arith.index_cast %26 : i32 to index
    %c0_10 = arith.constant 0 : index
    %c0_11 = arith.constant 0 : index
    %28 = vector.load %arg2[%27, %c0_10, %c0_11] : memref<100x1x32xf32, #tpu.memory_space<vmem>>, vector<1x1x32xf32>
    %29 = vector.shape_cast %28 : vector<1x1x32xf32> to vector<1x32xf32>
    %30 = arith.index_cast %arg0 : i32 to index
    %c6 = arith.constant 6 : index
    %31 = memref.load %arg1[%30, %c6] : memref<1x16xi32, #tpu.memory_space<smem>>
    %32 = arith.index_cast %31 : i32 to index
    %c0_12 = arith.constant 0 : index
    %c0_13 = arith.constant 0 : index
    %33 = vector.load %arg2[%32, %c0_12, %c0_13] : memref<100x1x32xf32, #tpu.memory_space<vmem>>, vector<1x1x32xf32>
    %34 = vector.shape_cast %33 : vector<1x1x32xf32> to vector<1x32xf32>
    %35 = arith.index_cast %arg0 : i32 to index
    %c7 = arith.constant 7 : index
    %36 = memref.load %arg1[%35, %c7] : memref<1x16xi32, #tpu.memory_space<smem>>
    %37 = arith.index_cast %36 : i32 to index
    %c0_14 = arith.constant 0 : index
    %c0_15 = arith.constant 0 : index
    %38 = vector.load %arg2[%37, %c0_14, %c0_15] : memref<100x1x32xf32, #tpu.memory_space<vmem>>, vector<1x1x32xf32>
    %39 = vector.shape_cast %38 : vector<1x1x32xf32> to vector<1x32xf32>
    %40 = arith.index_cast %arg0 : i32 to index
    %c8 = arith.constant 8 : index
    %41 = memref.load %arg1[%40, %c8] : memref<1x16xi32, #tpu.memory_space<smem>>
    %42 = arith.index_cast %41 : i32 to index
    %c0_16 = arith.constant 0 : index
    %c0_17 = arith.constant 0 : index
    %43 = vector.load %arg2[%42, %c0_16, %c0_17] : memref<100x1x32xf32, #tpu.memory_space<vmem>>, vector<1x1x32xf32>
    %44 = vector.shape_cast %43 : vector<1x1x32xf32> to vector<1x32xf32>
    %45 = arith.index_cast %arg0 : i32 to index
    %c9 = arith.constant 9 : index
    %46 = memref.load %arg1[%45, %c9] : memref<1x16xi32, #tpu.memory_space<smem>>
    %47 = arith.index_cast %46 : i32 to index
    %c0_18 = arith.constant 0 : index
    %c0_19 = arith.constant 0 : index
    %48 = vector.load %arg2[%47, %c0_18, %c0_19] : memref<100x1x32xf32, #tpu.memory_space<vmem>>, vector<1x1x32xf32>
    %49 = vector.shape_cast %48 : vector<1x1x32xf32> to vector<1x32xf32>
    %50 = arith.index_cast %arg0 : i32 to index
    %c10 = arith.constant 10 : index
    %51 = memref.load %arg1[%50, %c10] : memref<1x16xi32, #tpu.memory_space<smem>>
    %52 = arith.index_cast %51 : i32 to index
    %c0_20 = arith.constant 0 : index
    %c0_21 = arith.constant 0 : index
    %53 = vector.load %arg2[%52, %c0_20, %c0_21] : memref<100x1x32xf32, #tpu.memory_space<vmem>>, vector<1x1x32xf32>
    %54 = vector.shape_cast %53 : vector<1x1x32xf32> to vector<1x32xf32>
    %55 = arith.index_cast %arg0 : i32 to index
    %c11 = arith.constant 11 : index
    %56 = memref.load %arg1[%55, %c11] : memref<1x16xi32, #tpu.memory_space<smem>>
    %57 = arith.index_cast %56 : i32 to index
    %c0_22 = arith.constant 0 : index
    %c0_23 = arith.constant 0 : index
    %58 = vector.load %arg2[%57, %c0_22, %c0_23] : memref<100x1x32xf32, #tpu.memory_space<vmem>>, vector<1x1x32xf32>
    %59 = vector.shape_cast %58 : vector<1x1x32xf32> to vector<1x32xf32>
    %60 = arith.index_cast %arg0 : i32 to index
    %c12 = arith.constant 12 : index
    %61 = memref.load %arg1[%60, %c12] : memref<1x16xi32, #tpu.memory_space<smem>>
    %62 = arith.index_cast %61 : i32 to index
    %c0_24 = arith.constant 0 : index
    %c0_25 = arith.constant 0 : index
    %63 = vector.load %arg2[%62, %c0_24, %c0_25] : memref<100x1x32xf32, #tpu.memory_space<vmem>>, vector<1x1x32xf32>
    %64 = vector.shape_cast %63 : vector<1x1x32xf32> to vector<1x32xf32>
    %65 = arith.index_cast %arg0 : i32 to index
    %c13 = arith.constant 13 : index
    %66 = memref.load %arg1[%65, %c13] : memref<1x16xi32, #tpu.memory_space<smem>>
    %67 = arith.index_cast %66 : i32 to index
    %c0_26 = arith.constant 0 : index
    %c0_27 = arith.constant 0 : index
    %68 = vector.load %arg2[%67, %c0_26, %c0_27] : memref<100x1x32xf32, #tpu.memory_space<vmem>>, vector<1x1x32xf32>
    %69 = vector.shape_cast %68 : vector<1x1x32xf32> to vector<1x32xf32>
    %70 = arith.index_cast %arg0 : i32 to index
    %c14 = arith.constant 14 : index
    %71 = memref.load %arg1[%70, %c14] : memref<1x16xi32, #tpu.memory_space<smem>>
    %72 = arith.index_cast %71 : i32 to index
    %c0_28 = arith.constant 0 : index
    %c0_29 = arith.constant 0 : index
    %73 = vector.load %arg2[%72, %c0_28, %c0_29] : memref<100x1x32xf32, #tpu.memory_space<vmem>>, vector<1x1x32xf32>
    %74 = vector.shape_cast %73 : vector<1x1x32xf32> to vector<1x32xf32>
    %75 = arith.index_cast %arg0 : i32 to index
    %c15 = arith.constant 15 : index
    %76 = memref.load %arg1[%75, %c15] : memref<1x16xi32, #tpu.memory_space<smem>>
    %77 = arith.index_cast %76 : i32 to index
    %c0_30 = arith.constant 0 : index
    %c0_31 = arith.constant 0 : index
    %78 = vector.load %arg2[%77, %c0_30, %c0_31] : memref<100x1x32xf32, #tpu.memory_space<vmem>>, vector<1x1x32xf32>
    %79 = vector.shape_cast %78 : vector<1x1x32xf32> to vector<1x32xf32>
    %80 = tpu.concatenate %4, %9, %14, %19, %24, %29, %34, %39, %44, %49, %54, %59, %64, %69, %74, %79 in 0 : vector<1x32xf32>, vector<1x32xf32>, vector<1x32xf32>, vector<1x32xf32>, vector<1x32xf32>, vector<1x32xf32>, vector<1x32xf32>, vector<1x32xf32>, vector<1x32xf32>, vector<1x32xf32>, vector<1x32xf32>, vector<1x32xf32>, vector<1x32xf32>, vector<1x32xf32>, vector<1x32xf32>, vector<1x32xf32> -> vector<16x32xf32>
    %c0_32 = arith.constant 0 : index
    %c0_33 = arith.constant 0 : index
    %81 = vector.load %arg3[%c0_32, %c0_33] : memref<16x32xf32, #tpu.memory_space<vmem>>, vector<16x32xf32>
    %82 = arith.addf %80, %81 : vector<16x32xf32>
    %c0_34 = arith.constant 0 : index
    %c0_35 = arith.constant 0 : index
    %83 = vector.load %arg5[%c0_34, %c0_35] : memref<1x32xf32, #tpu.memory_space<vmem>>, vector<1x32xf32>
    %c0_36 = arith.constant 0 : index
    %c0_37 = arith.constant 0 : index
    %84 = vector.load %arg6[%c0_36, %c0_37] : memref<1x32xf32, #tpu.memory_space<vmem>>, vector<1x32xf32>
    %cst = arith.constant dense<0.000000e+00> : vector<16xf32>
    %85 = vector.multi_reduction <add>, %82, %cst [1] : vector<16x32xf32> to vector<16xf32>
    %86 = vector.shape_cast %85 : vector<16xf32> to vector<16x1xf32>
    %cst_38 = arith.constant 3.200000e+01 : f32
    %87 = vector.broadcast %cst_38 : f32 to vector<16x1xf32>
    %88 = arith.divf %86, %87 : vector<16x1xf32>
    %89 = vector.broadcast %88 : vector<16x1xf32> to vector<16x32xf32>
    %90 = arith.subf %82, %89 : vector<16x32xf32>
    %91 = vector.broadcast %88 : vector<16x1xf32> to vector<16x32xf32>
    %92 = arith.subf %82, %91 : vector<16x32xf32>
    %93 = arith.mulf %90, %92 : vector<16x32xf32>
    %cst_39 = arith.constant dense<0.000000e+00> : vector<16xf32>
    %94 = vector.multi_reduction <add>, %93, %cst_39 [1] : vector<16x32xf32> to vector<16xf32>
    %95 = vector.shape_cast %94 : vector<16xf32> to vector<16x1xf32>
    %cst_40 = arith.constant 3.200000e+01 : f32
    %96 = vector.broadcast %cst_40 : f32 to vector<16x1xf32>
    %97 = arith.divf %95, %96 : vector<16x1xf32>
    %98 = vector.broadcast %88 : vector<16x1xf32> to vector<16x32xf32>
    %99 = arith.subf %82, %98 : vector<16x32xf32>
    %cst_41 = arith.constant 9.99999996E-13 : f32
    %100 = vector.broadcast %cst_41 : f32 to vector<16x1xf32>
    %101 = arith.addf %97, %100 : vector<16x1xf32>
    %102 = math.rsqrt %101 : vector<16x1xf32>
    %103 = vector.broadcast %102 : vector<16x1xf32> to vector<16x32xf32>
    %104 = arith.mulf %99, %103 : vector<16x32xf32>
    %105 = vector.broadcast %83 : vector<1x32xf32> to vector<16x32xf32>
    %106 = arith.mulf %104, %105 : vector<16x32xf32>
    %107 = vector.broadcast %84 : vector<1x32xf32> to vector<16x32xf32>
    %108 = arith.addf %106, %107 : vector<16x32xf32>
    %c0_42 = arith.constant 0 : index
    %c0_43 = arith.constant 0 : index
    %c0_44 = arith.constant 0 : index
    %109 = vector.load %arg4[%c0_42, %c0_43, %c0_44] : memref<1x16x16xf32, #tpu.memory_space<vmem>>, vector<1x16x16xf32>
    %110 = vector.shape_cast %109 : vector<1x16x16xf32> to vector<16x16xf32>
    %111 = arith.truncf %108 : vector<16x32xf32> to vector<16x32xbf16>
    %c0_45 = arith.constant 0 : index
    %c0_46 = arith.constant 0 : index
    %c0_47 = arith.constant 0 : index
    %112 = vector.load %arg14[%c0_45, %c0_46, %c0_47] : memref<2x1x32xf32, #tpu.memory_space<vmem>>, vector<1x1x32xf32>
    %113 = vector.shape_cast %112 : vector<1x1x32xf32> to vector<1x32xf32>
    %c0_48 = arith.constant 0 : index
    %c0_49 = arith.constant 0 : index
    %c0_50 = arith.constant 0 : index
    %114 = vector.load %arg7[%c0_48, %c0_49, %c0_50] : memref<4x32x16xbf16, #tpu.memory_space<vmem>>, vector<1x32x16xbf16>
    %115 = vector.shape_cast %114 : vector<1x32x16xbf16> to vector<32x16xbf16>
    %cst_51 = arith.constant dense<0.000000e+00> : vector<16x16xf32>
    %116 = tpu.matmul %111, %115, %cst_51 {dimension_numbers = #tpu.dot_dimension_numbers<[1], [0], [0], [1], [0, 0, 1, 1], [], []>} : vector<16x32xbf16>, vector<32x16xbf16>, vector<16x16xf32> -> vector<16x16xf32>
    %c0_52 = arith.constant 0 : index
    %c0_53 = arith.constant 0 : index
    %c0_54 = arith.constant 0 : index
    %117 = vector.load %arg8[%c0_52, %c0_53, %c0_54] : memref<4x1x16xf32, #tpu.memory_space<vmem>>, vector<1x1x16xf32>
    %118 = vector.shape_cast %117 : vector<1x1x16xf32> to vector<1x16xf32>
    %119 = vector.broadcast %118 : vector<1x16xf32> to vector<16x16xf32>
    %120 = arith.addf %116, %119 : vector<16x16xf32>
    %c0_55 = arith.constant 0 : index
    %c0_56 = arith.constant 0 : index
    %c0_57 = arith.constant 0 : index
    %121 = vector.load %arg9[%c0_55, %c0_56, %c0_57] : memref<4x32x16xbf16, #tpu.memory_space<vmem>>, vector<1x32x16xbf16>
    %122 = vector.shape_cast %121 : vector<1x32x16xbf16> to vector<32x16xbf16>
    %cst_58 = arith.constant dense<0.000000e+00> : vector<16x16xf32>
    %123 = tpu.matmul %111, %122, %cst_58 {dimension_numbers = #tpu.dot_dimension_numbers<[1], [0], [0], [1], [0, 0, 1, 1], [], []>} : vector<16x32xbf16>, vector<32x16xbf16>, vector<16x16xf32> -> vector<16x16xf32>
    %c0_59 = arith.constant 0 : index
    %c0_60 = arith.constant 0 : index
    %c0_61 = arith.constant 0 : index
    %124 = vector.load %arg10[%c0_59, %c0_60, %c0_61] : memref<4x1x16xf32, #tpu.memory_space<vmem>>, vector<1x1x16xf32>
    %125 = vector.shape_cast %124 : vector<1x1x16xf32> to vector<1x16xf32>
    %126 = vector.broadcast %125 : vector<1x16xf32> to vector<16x16xf32>
    %127 = arith.addf %123, %126 : vector<16x16xf32>
    %c0_62 = arith.constant 0 : index
    %c0_63 = arith.constant 0 : index
    %c0_64 = arith.constant 0 : index
    %128 = vector.load %arg11[%c0_62, %c0_63, %c0_64] : memref<4x32x16xbf16, #tpu.memory_space<vmem>>, vector<1x32x16xbf16>
    %129 = vector.shape_cast %128 : vector<1x32x16xbf16> to vector<32x16xbf16>
    %cst_65 = arith.constant dense<0.000000e+00> : vector<16x16xf32>
    %130 = tpu.matmul %111, %129, %cst_65 {dimension_numbers = #tpu.dot_dimension_numbers<[1], [0], [0], [1], [0, 0, 1, 1], [], []>} : vector<16x32xbf16>, vector<32x16xbf16>, vector<16x16xf32> -> vector<16x16xf32>
    %c0_66 = arith.constant 0 : index
    %c0_67 = arith.constant 0 : index
    %c0_68 = arith.constant 0 : index
    %131 = vector.load %arg12[%c0_66, %c0_67, %c0_68] : memref<4x1x16xf32, #tpu.memory_space<vmem>>, vector<1x1x16xf32>
    %132 = vector.shape_cast %131 : vector<1x1x16xf32> to vector<1x16xf32>
    %133 = vector.broadcast %132 : vector<1x16xf32> to vector<16x16xf32>
    %134 = arith.addf %130, %133 : vector<16x16xf32>
    %135 = arith.truncf %120 : vector<16x16xf32> to vector<16x16xbf16>
    %136 = arith.truncf %127 : vector<16x16xf32> to vector<16x16xbf16>
    %cst_69 = arith.constant dense<0.000000e+00> : vector<16x16xf32>
    %137 = tpu.matmul %135, %136, %cst_69 {dimension_numbers = #tpu.dot_dimension_numbers<[1], [1], [0], [0], [0, 0, 1, 0], [], []>} : vector<16x16xbf16>, vector<16x16xbf16>, vector<16x16xf32> -> vector<16x16xf32>
    %138 = arith.addf %137, %110 : vector<16x16xf32>
    %cst_70 = arith.constant dense<0xFF800000> : vector<16xf32>
    %139 = vector.multi_reduction <maximumf>, %138, %cst_70 [1] : vector<16x16xf32> to vector<16xf32>
    %140 = vector.shape_cast %139 : vector<16xf32> to vector<16x1xf32>
    %141 = vector.broadcast %140 : vector<16x1xf32> to vector<16x16xf32>
    %142 = arith.subf %138, %141 : vector<16x16xf32>
    %143 = math.exp %142 : vector<16x16xf32>
    %cst_71 = arith.constant dense<0.000000e+00> : vector<16xf32>
    %144 = vector.multi_reduction <add>, %143, %cst_71 [1] : vector<16x16xf32> to vector<16xf32>
    %145 = vector.shape_cast %144 : vector<16xf32> to vector<16x1xf32>
    %146 = tpu.reciprocal %145 {approx = true} : vector<16x1xf32> -> vector<16x1xf32>
    %147 = vector.broadcast %146 : vector<16x1xf32> to vector<16x16xf32>
    %148 = arith.mulf %143, %147 : vector<16x16xf32>
    %149 = arith.truncf %148 : vector<16x16xf32> to vector<16x16xbf16>
    %150 = arith.truncf %134 : vector<16x16xf32> to vector<16x16xbf16>
    %cst_72 = arith.constant dense<0.000000e+00> : vector<16x16xf32>
    %151 = tpu.matmul %149, %150, %cst_72 {dimension_numbers = #tpu.dot_dimension_numbers<[1], [0], [0], [1], [0, 0, 1, 1], [], []>} : vector<16x16xbf16>, vector<16x16xbf16>, vector<16x16xf32> -> vector<16x16xf32>
    %152 = arith.truncf %151 : vector<16x16xf32> to vector<16x16xbf16>
    %c0_73 = arith.constant 0 : index
    %c0_74 = arith.constant 0 : index
    %c0_75 = arith.constant 0 : index
    %153 = vector.load %arg13[%c0_73, %c0_74, %c0_75] : memref<4x16x32xbf16, #tpu.memory_space<vmem>>, vector<1x16x32xbf16>
    %154 = vector.shape_cast %153 : vector<1x16x32xbf16> to vector<16x32xbf16>
    %cst_76 = arith.constant dense<0.000000e+00> : vector<16x32xf32>
    %155 = tpu.matmul %152, %154, %cst_76 {dimension_numbers = #tpu.dot_dimension_numbers<[1], [0], [0], [1], [0, 0, 1, 1], [], []>} : vector<16x16xbf16>, vector<16x32xbf16>, vector<16x32xf32> -> vector<16x32xf32>
    %156 = vector.broadcast %113 : vector<1x32xf32> to vector<16x32xf32>
    %157 = arith.addf %156, %155 : vector<16x32xf32>
    %c1_77 = arith.constant 1 : index
    %c0_78 = arith.constant 0 : index
    %c0_79 = arith.constant 0 : index
    %158 = vector.load %arg7[%c1_77, %c0_78, %c0_79] : memref<4x32x16xbf16, #tpu.memory_space<vmem>>, vector<1x32x16xbf16>
    %159 = vector.shape_cast %158 : vector<1x32x16xbf16> to vector<32x16xbf16>
    %cst_80 = arith.constant dense<0.000000e+00> : vector<16x16xf32>
    %160 = tpu.matmul %111, %159, %cst_80 {dimension_numbers = #tpu.dot_dimension_numbers<[1], [0], [0], [1], [0, 0, 1, 1], [], []>} : vector<16x32xbf16>, vector<32x16xbf16>, vector<16x16xf32> -> vector<16x16xf32>
    %c1_81 = arith.constant 1 : index
    %c0_82 = arith.constant 0 : index
    %c0_83 = arith.constant 0 : index
    %161 = vector.load %arg8[%c1_81, %c0_82, %c0_83] : memref<4x1x16xf32, #tpu.memory_space<vmem>>, vector<1x1x16xf32>
    %162 = vector.shape_cast %161 : vector<1x1x16xf32> to vector<1x16xf32>
    %163 = vector.broadcast %162 : vector<1x16xf32> to vector<16x16xf32>
    %164 = arith.addf %160, %163 : vector<16x16xf32>
    %c1_84 = arith.constant 1 : index
    %c0_85 = arith.constant 0 : index
    %c0_86 = arith.constant 0 : index
    %165 = vector.load %arg9[%c1_84, %c0_85, %c0_86] : memref<4x32x16xbf16, #tpu.memory_space<vmem>>, vector<1x32x16xbf16>
    %166 = vector.shape_cast %165 : vector<1x32x16xbf16> to vector<32x16xbf16>
    %cst_87 = arith.constant dense<0.000000e+00> : vector<16x16xf32>
    %167 = tpu.matmul %111, %166, %cst_87 {dimension_numbers = #tpu.dot_dimension_numbers<[1], [0], [0], [1], [0, 0, 1, 1], [], []>} : vector<16x32xbf16>, vector<32x16xbf16>, vector<16x16xf32> -> vector<16x16xf32>
    %c1_88 = arith.constant 1 : index
    %c0_89 = arith.constant 0 : index
    %c0_90 = arith.constant 0 : index
    %168 = vector.load %arg10[%c1_88, %c0_89, %c0_90] : memref<4x1x16xf32, #tpu.memory_space<vmem>>, vector<1x1x16xf32>
    %169 = vector.shape_cast %168 : vector<1x1x16xf32> to vector<1x16xf32>
    %170 = vector.broadcast %169 : vector<1x16xf32> to vector<16x16xf32>
    %171 = arith.addf %167, %170 : vector<16x16xf32>
    %c1_91 = arith.constant 1 : index
    %c0_92 = arith.constant 0 : index
    %c0_93 = arith.constant 0 : index
    %172 = vector.load %arg11[%c1_91, %c0_92, %c0_93] : memref<4x32x16xbf16, #tpu.memory_space<vmem>>, vector<1x32x16xbf16>
    %173 = vector.shape_cast %172 : vector<1x32x16xbf16> to vector<32x16xbf16>
    %cst_94 = arith.constant dense<0.000000e+00> : vector<16x16xf32>
    %174 = tpu.matmul %111, %173, %cst_94 {dimension_numbers = #tpu.dot_dimension_numbers<[1], [0], [0], [1], [0, 0, 1, 1], [], []>} : vector<16x32xbf16>, vector<32x16xbf16>, vector<16x16xf32> -> vector<16x16xf32>
    %c1_95 = arith.constant 1 : index
    %c0_96 = arith.constant 0 : index
    %c0_97 = arith.constant 0 : index
    %175 = vector.load %arg12[%c1_95, %c0_96, %c0_97] : memref<4x1x16xf32, #tpu.memory_space<vmem>>, vector<1x1x16xf32>
    %176 = vector.shape_cast %175 : vector<1x1x16xf32> to vector<1x16xf32>
    %177 = vector.broadcast %176 : vector<1x16xf32> to vector<16x16xf32>
    %178 = arith.addf %174, %177 : vector<16x16xf32>
    %179 = arith.truncf %164 : vector<16x16xf32> to vector<16x16xbf16>
    %180 = arith.truncf %171 : vector<16x16xf32> to vector<16x16xbf16>
    %cst_98 = arith.constant dense<0.000000e+00> : vector<16x16xf32>
    %181 = tpu.matmul %179, %180, %cst_98 {dimension_numbers = #tpu.dot_dimension_numbers<[1], [1], [0], [0], [0, 0, 1, 0], [], []>} : vector<16x16xbf16>, vector<16x16xbf16>, vector<16x16xf32> -> vector<16x16xf32>
    %182 = arith.addf %181, %110 : vector<16x16xf32>
    %cst_99 = arith.constant dense<0xFF800000> : vector<16xf32>
    %183 = vector.multi_reduction <maximumf>, %182, %cst_99 [1] : vector<16x16xf32> to vector<16xf32>
    %184 = vector.shape_cast %183 : vector<16xf32> to vector<16x1xf32>
    %185 = vector.broadcast %184 : vector<16x1xf32> to vector<16x16xf32>
    %186 = arith.subf %182, %185 : vector<16x16xf32>
    %187 = math.exp %186 : vector<16x16xf32>
    %cst_100 = arith.constant dense<0.000000e+00> : vector<16xf32>
    %188 = vector.multi_reduction <add>, %187, %cst_100 [1] : vector<16x16xf32> to vector<16xf32>
    %189 = vector.shape_cast %188 : vector<16xf32> to vector<16x1xf32>
    %190 = tpu.reciprocal %189 {approx = true} : vector<16x1xf32> -> vector<16x1xf32>
    %191 = vector.broadcast %190 : vector<16x1xf32> to vector<16x16xf32>
    %192 = arith.mulf %187, %191 : vector<16x16xf32>
    %193 = arith.truncf %192 : vector<16x16xf32> to vector<16x16xbf16>
    %194 = arith.truncf %178 : vector<16x16xf32> to vector<16x16xbf16>
    %cst_101 = arith.constant dense<0.000000e+00> : vector<16x16xf32>
    %195 = tpu.matmul %193, %194, %cst_101 {dimension_numbers = #tpu.dot_dimension_numbers<[1], [0], [0], [1], [0, 0, 1, 1], [], []>} : vector<16x16xbf16>, vector<16x16xbf16>, vector<16x16xf32> -> vector<16x16xf32>
    %196 = arith.truncf %195 : vector<16x16xf32> to vector<16x16xbf16>
    %c1_102 = arith.constant 1 : index
    %c0_103 = arith.constant 0 : index
    %c0_104 = arith.constant 0 : index
    %197 = vector.load %arg13[%c1_102, %c0_103, %c0_104] : memref<4x16x32xbf16, #tpu.memory_space<vmem>>, vector<1x16x32xbf16>
    %198 = vector.shape_cast %197 : vector<1x16x32xbf16> to vector<16x32xbf16>
    %cst_105 = arith.constant dense<0.000000e+00> : vector<16x32xf32>
    %199 = tpu.matmul %196, %198, %cst_105 {dimension_numbers = #tpu.dot_dimension_numbers<[1], [0], [0], [1], [0, 0, 1, 1], [], []>} : vector<16x16xbf16>, vector<16x32xbf16>, vector<16x32xf32> -> vector<16x32xf32>
    %200 = arith.addf %157, %199 : vector<16x32xf32>
    %201 = arith.addf %108, %200 : vector<16x32xf32>
    %c0_106 = arith.constant 0 : index
    %c0_107 = arith.constant 0 : index
    %c0_108 = arith.constant 0 : index
    %202 = vector.load %arg15[%c0_106, %c0_107, %c0_108] : memref<2x1x32xf32, #tpu.memory_space<vmem>>, vector<1x1x32xf32>
    %203 = vector.shape_cast %202 : vector<1x1x32xf32> to vector<1x32xf32>
    %c0_109 = arith.constant 0 : index
    %c0_110 = arith.constant 0 : index
    %c0_111 = arith.constant 0 : index
    %204 = vector.load %arg16[%c0_109, %c0_110, %c0_111] : memref<2x1x32xf32, #tpu.memory_space<vmem>>, vector<1x1x32xf32>
    %205 = vector.shape_cast %204 : vector<1x1x32xf32> to vector<1x32xf32>
    %cst_112 = arith.constant dense<0.000000e+00> : vector<16xf32>
    %206 = vector.multi_reduction <add>, %201, %cst_112 [1] : vector<16x32xf32> to vector<16xf32>
    %207 = vector.shape_cast %206 : vector<16xf32> to vector<16x1xf32>
    %cst_113 = arith.constant 3.200000e+01 : f32
    %208 = vector.broadcast %cst_113 : f32 to vector<16x1xf32>
    %209 = arith.divf %207, %208 : vector<16x1xf32>
    %210 = vector.broadcast %209 : vector<16x1xf32> to vector<16x32xf32>
    %211 = arith.subf %201, %210 : vector<16x32xf32>
    %212 = vector.broadcast %209 : vector<16x1xf32> to vector<16x32xf32>
    %213 = arith.subf %201, %212 : vector<16x32xf32>
    %214 = arith.mulf %211, %213 : vector<16x32xf32>
    %cst_114 = arith.constant dense<0.000000e+00> : vector<16xf32>
    %215 = vector.multi_reduction <add>, %214, %cst_114 [1] : vector<16x32xf32> to vector<16xf32>
    %216 = vector.shape_cast %215 : vector<16xf32> to vector<16x1xf32>
    %cst_115 = arith.constant 3.200000e+01 : f32
    %217 = vector.broadcast %cst_115 : f32 to vector<16x1xf32>
    %218 = arith.divf %216, %217 : vector<16x1xf32>
    %219 = vector.broadcast %209 : vector<16x1xf32> to vector<16x32xf32>
    %220 = arith.subf %201, %219 : vector<16x32xf32>
    %cst_116 = arith.constant 9.99999996E-13 : f32
    %221 = vector.broadcast %cst_116 : f32 to vector<16x1xf32>
    %222 = arith.addf %218, %221 : vector<16x1xf32>
    %223 = math.rsqrt %222 : vector<16x1xf32>
    %224 = vector.broadcast %223 : vector<16x1xf32> to vector<16x32xf32>
    %225 = arith.mulf %220, %224 : vector<16x32xf32>
    %226 = vector.broadcast %203 : vector<1x32xf32> to vector<16x32xf32>
    %227 = arith.mulf %225, %226 : vector<16x32xf32>
    %228 = vector.broadcast %205 : vector<1x32xf32> to vector<16x32xf32>
    %229 = arith.addf %227, %228 : vector<16x32xf32>
    %230 = arith.truncf %229 : vector<16x32xf32> to vector<16x32xbf16>
    %c0_117 = arith.constant 0 : index
    %c0_118 = arith.constant 0 : index
    %c0_119 = arith.constant 0 : index
    %231 = vector.load %arg17[%c0_117, %c0_118, %c0_119] : memref<2x32x64xbf16, #tpu.memory_space<vmem>>, vector<1x32x64xbf16>
    %232 = vector.shape_cast %231 : vector<1x32x64xbf16> to vector<32x64xbf16>
    %cst_120 = arith.constant dense<0.000000e+00> : vector<16x64xf32>
    %233 = tpu.matmul %230, %232, %cst_120 {dimension_numbers = #tpu.dot_dimension_numbers<[1], [0], [0], [1], [0, 0, 1, 1], [], []>} : vector<16x32xbf16>, vector<32x64xbf16>, vector<16x64xf32> -> vector<16x64xf32>
    %c0_121 = arith.constant 0 : index
    %c0_122 = arith.constant 0 : index
    %c0_123 = arith.constant 0 : index
    %234 = vector.load %arg18[%c0_121, %c0_122, %c0_123] : memref<2x1x64xf32, #tpu.memory_space<vmem>>, vector<1x1x64xf32>
    %235 = vector.shape_cast %234 : vector<1x1x64xf32> to vector<1x64xf32>
    %236 = vector.broadcast %235 : vector<1x64xf32> to vector<16x64xf32>
    %237 = arith.addf %233, %236 : vector<16x64xf32>
    %cst_124 = arith.constant 5.000000e-01 : f32
    %238 = vector.broadcast %cst_124 : f32 to vector<16x64xf32>
    %239 = arith.mulf %238, %237 : vector<16x64xf32>
    %cst_125 = arith.constant 4.471500e-02 : f32
    %240 = vector.broadcast %cst_125 : f32 to vector<16x64xf32>
    %241 = arith.mulf %240, %237 : vector<16x64xf32>
    %242 = arith.mulf %241, %237 : vector<16x64xf32>
    %243 = arith.mulf %242, %237 : vector<16x64xf32>
    %244 = arith.addf %237, %243 : vector<16x64xf32>
    %cst_126 = arith.constant 0.797884583 : f32
    %245 = vector.broadcast %cst_126 : f32 to vector<16x64xf32>
    %246 = arith.mulf %245, %244 : vector<16x64xf32>
    %247 = math.tanh %246 : vector<16x64xf32>
    %cst_127 = arith.constant 1.000000e+00 : f32
    %248 = vector.broadcast %cst_127 : f32 to vector<16x64xf32>
    %249 = arith.addf %248, %247 : vector<16x64xf32>
    %250 = arith.mulf %239, %249 : vector<16x64xf32>
    %251 = arith.truncf %250 : vector<16x64xf32> to vector<16x64xbf16>
    %c0_128 = arith.constant 0 : index
    %c0_129 = arith.constant 0 : index
    %c0_130 = arith.constant 0 : index
    %252 = vector.load %arg19[%c0_128, %c0_129, %c0_130] : memref<2x64x32xbf16, #tpu.memory_space<vmem>>, vector<1x64x32xbf16>
    %253 = vector.shape_cast %252 : vector<1x64x32xbf16> to vector<64x32xbf16>
    %cst_131 = arith.constant dense<0.000000e+00> : vector<16x32xf32>
    %254 = tpu.matmul %251, %253, %cst_131 {dimension_numbers = #tpu.dot_dimension_numbers<[1], [0], [0], [1], [0, 0, 1, 1], [], []>} : vector<16x64xbf16>, vector<64x32xbf16>, vector<16x32xf32> -> vector<16x32xf32>
    %c0_132 = arith.constant 0 : index
    %c0_133 = arith.constant 0 : index
    %c0_134 = arith.constant 0 : index
    %255 = vector.load %arg20[%c0_132, %c0_133, %c0_134] : memref<2x1x32xf32, #tpu.memory_space<vmem>>, vector<1x1x32xf32>
    %256 = vector.shape_cast %255 : vector<1x1x32xf32> to vector<1x32xf32>
    %257 = vector.broadcast %256 : vector<1x32xf32> to vector<16x32xf32>
    %258 = arith.addf %254, %257 : vector<16x32xf32>
    %259 = arith.addf %229, %258 : vector<16x32xf32>
    %c0_135 = arith.constant 0 : index
    %c0_136 = arith.constant 0 : index
    %c0_137 = arith.constant 0 : index
    %260 = vector.load %arg21[%c0_135, %c0_136, %c0_137] : memref<2x1x32xf32, #tpu.memory_space<vmem>>, vector<1x1x32xf32>
    %261 = vector.shape_cast %260 : vector<1x1x32xf32> to vector<1x32xf32>
    %c0_138 = arith.constant 0 : index
    %c0_139 = arith.constant 0 : index
    %c0_140 = arith.constant 0 : index
    %262 = vector.load %arg22[%c0_138, %c0_139, %c0_140] : memref<2x1x32xf32, #tpu.memory_space<vmem>>, vector<1x1x32xf32>
    %263 = vector.shape_cast %262 : vector<1x1x32xf32> to vector<1x32xf32>
    %cst_141 = arith.constant dense<0.000000e+00> : vector<16xf32>
    %264 = vector.multi_reduction <add>, %259, %cst_141 [1] : vector<16x32xf32> to vector<16xf32>
    %265 = vector.shape_cast %264 : vector<16xf32> to vector<16x1xf32>
    %cst_142 = arith.constant 3.200000e+01 : f32
    %266 = vector.broadcast %cst_142 : f32 to vector<16x1xf32>
    %267 = arith.divf %265, %266 : vector<16x1xf32>
    %268 = vector.broadcast %267 : vector<16x1xf32> to vector<16x32xf32>
    %269 = arith.subf %259, %268 : vector<16x32xf32>
    %270 = vector.broadcast %267 : vector<16x1xf32> to vector<16x32xf32>
    %271 = arith.subf %259, %270 : vector<16x32xf32>
    %272 = arith.mulf %269, %271 : vector<16x32xf32>
    %cst_143 = arith.constant dense<0.000000e+00> : vector<16xf32>
    %273 = vector.multi_reduction <add>, %272, %cst_143 [1] : vector<16x32xf32> to vector<16xf32>
    %274 = vector.shape_cast %273 : vector<16xf32> to vector<16x1xf32>
    %cst_144 = arith.constant 3.200000e+01 : f32
    %275 = vector.broadcast %cst_144 : f32 to vector<16x1xf32>
    %276 = arith.divf %274, %275 : vector<16x1xf32>
    %277 = vector.broadcast %267 : vector<16x1xf32> to vector<16x32xf32>
    %278 = arith.subf %259, %277 : vector<16x32xf32>
    %cst_145 = arith.constant 9.99999996E-13 : f32
    %279 = vector.broadcast %cst_145 : f32 to vector<16x1xf32>
    %280 = arith.addf %276, %279 : vector<16x1xf32>
    %281 = math.rsqrt %280 : vector<16x1xf32>
    %282 = vector.broadcast %281 : vector<16x1xf32> to vector<16x32xf32>
    %283 = arith.mulf %278, %282 : vector<16x32xf32>
    %284 = vector.broadcast %261 : vector<1x32xf32> to vector<16x32xf32>
    %285 = arith.mulf %283, %284 : vector<16x32xf32>
    %286 = vector.broadcast %263 : vector<1x32xf32> to vector<16x32xf32>
    %287 = arith.addf %285, %286 : vector<16x32xf32>
    %288 = arith.truncf %287 : vector<16x32xf32> to vector<16x32xbf16>
    %c1_146 = arith.constant 1 : index
    %c0_147 = arith.constant 0 : index
    %c0_148 = arith.constant 0 : index
    %289 = vector.load %arg14[%c1_146, %c0_147, %c0_148] : memref<2x1x32xf32, #tpu.memory_space<vmem>>, vector<1x1x32xf32>
    %290 = vector.shape_cast %289 : vector<1x1x32xf32> to vector<1x32xf32>
    %c2_149 = arith.constant 2 : index
    %c0_150 = arith.constant 0 : index
    %c0_151 = arith.constant 0 : index
    %291 = vector.load %arg7[%c2_149, %c0_150, %c0_151] : memref<4x32x16xbf16, #tpu.memory_space<vmem>>, vector<1x32x16xbf16>
    %292 = vector.shape_cast %291 : vector<1x32x16xbf16> to vector<32x16xbf16>
    %cst_152 = arith.constant dense<0.000000e+00> : vector<16x16xf32>
    %293 = tpu.matmul %288, %292, %cst_152 {dimension_numbers = #tpu.dot_dimension_numbers<[1], [0], [0], [1], [0, 0, 1, 1], [], []>} : vector<16x32xbf16>, vector<32x16xbf16>, vector<16x16xf32> -> vector<16x16xf32>
    %c2_153 = arith.constant 2 : index
    %c0_154 = arith.constant 0 : index
    %c0_155 = arith.constant 0 : index
    %294 = vector.load %arg8[%c2_153, %c0_154, %c0_155] : memref<4x1x16xf32, #tpu.memory_space<vmem>>, vector<1x1x16xf32>
    %295 = vector.shape_cast %294 : vector<1x1x16xf32> to vector<1x16xf32>
    %296 = vector.broadcast %295 : vector<1x16xf32> to vector<16x16xf32>
    %297 = arith.addf %293, %296 : vector<16x16xf32>
    %c2_156 = arith.constant 2 : index
    %c0_157 = arith.constant 0 : index
    %c0_158 = arith.constant 0 : index
    %298 = vector.load %arg9[%c2_156, %c0_157, %c0_158] : memref<4x32x16xbf16, #tpu.memory_space<vmem>>, vector<1x32x16xbf16>
    %299 = vector.shape_cast %298 : vector<1x32x16xbf16> to vector<32x16xbf16>
    %cst_159 = arith.constant dense<0.000000e+00> : vector<16x16xf32>
    %300 = tpu.matmul %288, %299, %cst_159 {dimension_numbers = #tpu.dot_dimension_numbers<[1], [0], [0], [1], [0, 0, 1, 1], [], []>} : vector<16x32xbf16>, vector<32x16xbf16>, vector<16x16xf32> -> vector<16x16xf32>
    %c2_160 = arith.constant 2 : index
    %c0_161 = arith.constant 0 : index
    %c0_162 = arith.constant 0 : index
    %301 = vector.load %arg10[%c2_160, %c0_161, %c0_162] : memref<4x1x16xf32, #tpu.memory_space<vmem>>, vector<1x1x16xf32>
    %302 = vector.shape_cast %301 : vector<1x1x16xf32> to vector<1x16xf32>
    %303 = vector.broadcast %302 : vector<1x16xf32> to vector<16x16xf32>
    %304 = arith.addf %300, %303 : vector<16x16xf32>
    %c2_163 = arith.constant 2 : index
    %c0_164 = arith.constant 0 : index
    %c0_165 = arith.constant 0 : index
    %305 = vector.load %arg11[%c2_163, %c0_164, %c0_165] : memref<4x32x16xbf16, #tpu.memory_space<vmem>>, vector<1x32x16xbf16>
    %306 = vector.shape_cast %305 : vector<1x32x16xbf16> to vector<32x16xbf16>
    %cst_166 = arith.constant dense<0.000000e+00> : vector<16x16xf32>
    %307 = tpu.matmul %288, %306, %cst_166 {dimension_numbers = #tpu.dot_dimension_numbers<[1], [0], [0], [1], [0, 0, 1, 1], [], []>} : vector<16x32xbf16>, vector<32x16xbf16>, vector<16x16xf32> -> vector<16x16xf32>
    %c2_167 = arith.constant 2 : index
    %c0_168 = arith.constant 0 : index
    %c0_169 = arith.constant 0 : index
    %308 = vector.load %arg12[%c2_167, %c0_168, %c0_169] : memref<4x1x16xf32, #tpu.memory_space<vmem>>, vector<1x1x16xf32>
    %309 = vector.shape_cast %308 : vector<1x1x16xf32> to vector<1x16xf32>
    %310 = vector.broadcast %309 : vector<1x16xf32> to vector<16x16xf32>
    %311 = arith.addf %307, %310 : vector<16x16xf32>
    %312 = arith.truncf %297 : vector<16x16xf32> to vector<16x16xbf16>
    %313 = arith.truncf %304 : vector<16x16xf32> to vector<16x16xbf16>
    %cst_170 = arith.constant dense<0.000000e+00> : vector<16x16xf32>
    %314 = tpu.matmul %312, %313, %cst_170 {dimension_numbers = #tpu.dot_dimension_numbers<[1], [1], [0], [0], [0, 0, 1, 0], [], []>} : vector<16x16xbf16>, vector<16x16xbf16>, vector<16x16xf32> -> vector<16x16xf32>
    %315 = arith.addf %314, %110 : vector<16x16xf32>
    %cst_171 = arith.constant dense<0xFF800000> : vector<16xf32>
    %316 = vector.multi_reduction <maximumf>, %315, %cst_171 [1] : vector<16x16xf32> to vector<16xf32>
    %317 = vector.shape_cast %316 : vector<16xf32> to vector<16x1xf32>
    %318 = vector.broadcast %317 : vector<16x1xf32> to vector<16x16xf32>
    %319 = arith.subf %315, %318 : vector<16x16xf32>
    %320 = math.exp %319 : vector<16x16xf32>
    %cst_172 = arith.constant dense<0.000000e+00> : vector<16xf32>
    %321 = vector.multi_reduction <add>, %320, %cst_172 [1] : vector<16x16xf32> to vector<16xf32>
    %322 = vector.shape_cast %321 : vector<16xf32> to vector<16x1xf32>
    %323 = tpu.reciprocal %322 {approx = true} : vector<16x1xf32> -> vector<16x1xf32>
    %324 = vector.broadcast %323 : vector<16x1xf32> to vector<16x16xf32>
    %325 = arith.mulf %320, %324 : vector<16x16xf32>
    %326 = arith.truncf %325 : vector<16x16xf32> to vector<16x16xbf16>
    %327 = arith.truncf %311 : vector<16x16xf32> to vector<16x16xbf16>
    %cst_173 = arith.constant dense<0.000000e+00> : vector<16x16xf32>
    %328 = tpu.matmul %326, %327, %cst_173 {dimension_numbers = #tpu.dot_dimension_numbers<[1], [0], [0], [1], [0, 0, 1, 1], [], []>} : vector<16x16xbf16>, vector<16x16xbf16>, vector<16x16xf32> -> vector<16x16xf32>
    %329 = arith.truncf %328 : vector<16x16xf32> to vector<16x16xbf16>
    %c2_174 = arith.constant 2 : index
    %c0_175 = arith.constant 0 : index
    %c0_176 = arith.constant 0 : index
    %330 = vector.load %arg13[%c2_174, %c0_175, %c0_176] : memref<4x16x32xbf16, #tpu.memory_space<vmem>>, vector<1x16x32xbf16>
    %331 = vector.shape_cast %330 : vector<1x16x32xbf16> to vector<16x32xbf16>
    %cst_177 = arith.constant dense<0.000000e+00> : vector<16x32xf32>
    %332 = tpu.matmul %329, %331, %cst_177 {dimension_numbers = #tpu.dot_dimension_numbers<[1], [0], [0], [1], [0, 0, 1, 1], [], []>} : vector<16x16xbf16>, vector<16x32xbf16>, vector<16x32xf32> -> vector<16x32xf32>
    %333 = vector.broadcast %290 : vector<1x32xf32> to vector<16x32xf32>
    %334 = arith.addf %333, %332 : vector<16x32xf32>
    %c3_178 = arith.constant 3 : index
    %c0_179 = arith.constant 0 : index
    %c0_180 = arith.constant 0 : index
    %335 = vector.load %arg7[%c3_178, %c0_179, %c0_180] : memref<4x32x16xbf16, #tpu.memory_space<vmem>>, vector<1x32x16xbf16>
    %336 = vector.shape_cast %335 : vector<1x32x16xbf16> to vector<32x16xbf16>
    %cst_181 = arith.constant dense<0.000000e+00> : vector<16x16xf32>
    %337 = tpu.matmul %288, %336, %cst_181 {dimension_numbers = #tpu.dot_dimension_numbers<[1], [0], [0], [1], [0, 0, 1, 1], [], []>} : vector<16x32xbf16>, vector<32x16xbf16>, vector<16x16xf32> -> vector<16x16xf32>
    %c3_182 = arith.constant 3 : index
    %c0_183 = arith.constant 0 : index
    %c0_184 = arith.constant 0 : index
    %338 = vector.load %arg8[%c3_182, %c0_183, %c0_184] : memref<4x1x16xf32, #tpu.memory_space<vmem>>, vector<1x1x16xf32>
    %339 = vector.shape_cast %338 : vector<1x1x16xf32> to vector<1x16xf32>
    %340 = vector.broadcast %339 : vector<1x16xf32> to vector<16x16xf32>
    %341 = arith.addf %337, %340 : vector<16x16xf32>
    %c3_185 = arith.constant 3 : index
    %c0_186 = arith.constant 0 : index
    %c0_187 = arith.constant 0 : index
    %342 = vector.load %arg9[%c3_185, %c0_186, %c0_187] : memref<4x32x16xbf16, #tpu.memory_space<vmem>>, vector<1x32x16xbf16>
    %343 = vector.shape_cast %342 : vector<1x32x16xbf16> to vector<32x16xbf16>
    %cst_188 = arith.constant dense<0.000000e+00> : vector<16x16xf32>
    %344 = tpu.matmul %288, %343, %cst_188 {dimension_numbers = #tpu.dot_dimension_numbers<[1], [0], [0], [1], [0, 0, 1, 1], [], []>} : vector<16x32xbf16>, vector<32x16xbf16>, vector<16x16xf32> -> vector<16x16xf32>
    %c3_189 = arith.constant 3 : index
    %c0_190 = arith.constant 0 : index
    %c0_191 = arith.constant 0 : index
    %345 = vector.load %arg10[%c3_189, %c0_190, %c0_191] : memref<4x1x16xf32, #tpu.memory_space<vmem>>, vector<1x1x16xf32>
    %346 = vector.shape_cast %345 : vector<1x1x16xf32> to vector<1x16xf32>
    %347 = vector.broadcast %346 : vector<1x16xf32> to vector<16x16xf32>
    %348 = arith.addf %344, %347 : vector<16x16xf32>
    %c3_192 = arith.constant 3 : index
    %c0_193 = arith.constant 0 : index
    %c0_194 = arith.constant 0 : index
    %349 = vector.load %arg11[%c3_192, %c0_193, %c0_194] : memref<4x32x16xbf16, #tpu.memory_space<vmem>>, vector<1x32x16xbf16>
    %350 = vector.shape_cast %349 : vector<1x32x16xbf16> to vector<32x16xbf16>
    %cst_195 = arith.constant dense<0.000000e+00> : vector<16x16xf32>
    %351 = tpu.matmul %288, %350, %cst_195 {dimension_numbers = #tpu.dot_dimension_numbers<[1], [0], [0], [1], [0, 0, 1, 1], [], []>} : vector<16x32xbf16>, vector<32x16xbf16>, vector<16x16xf32> -> vector<16x16xf32>
    %c3_196 = arith.constant 3 : index
    %c0_197 = arith.constant 0 : index
    %c0_198 = arith.constant 0 : index
    %352 = vector.load %arg12[%c3_196, %c0_197, %c0_198] : memref<4x1x16xf32, #tpu.memory_space<vmem>>, vector<1x1x16xf32>
    %353 = vector.shape_cast %352 : vector<1x1x16xf32> to vector<1x16xf32>
    %354 = vector.broadcast %353 : vector<1x16xf32> to vector<16x16xf32>
    %355 = arith.addf %351, %354 : vector<16x16xf32>
    %356 = arith.truncf %341 : vector<16x16xf32> to vector<16x16xbf16>
    %357 = arith.truncf %348 : vector<16x16xf32> to vector<16x16xbf16>
    %cst_199 = arith.constant dense<0.000000e+00> : vector<16x16xf32>
    %358 = tpu.matmul %356, %357, %cst_199 {dimension_numbers = #tpu.dot_dimension_numbers<[1], [1], [0], [0], [0, 0, 1, 0], [], []>} : vector<16x16xbf16>, vector<16x16xbf16>, vector<16x16xf32> -> vector<16x16xf32>
    %359 = arith.addf %358, %110 : vector<16x16xf32>
    %cst_200 = arith.constant dense<0xFF800000> : vector<16xf32>
    %360 = vector.multi_reduction <maximumf>, %359, %cst_200 [1] : vector<16x16xf32> to vector<16xf32>
    %361 = vector.shape_cast %360 : vector<16xf32> to vector<16x1xf32>
    %362 = vector.broadcast %361 : vector<16x1xf32> to vector<16x16xf32>
    %363 = arith.subf %359, %362 : vector<16x16xf32>
    %364 = math.exp %363 : vector<16x16xf32>
    %cst_201 = arith.constant dense<0.000000e+00> : vector<16xf32>
    %365 = vector.multi_reduction <add>, %364, %cst_201 [1] : vector<16x16xf32> to vector<16xf32>
    %366 = vector.shape_cast %365 : vector<16xf32> to vector<16x1xf32>
    %367 = tpu.reciprocal %366 {approx = true} : vector<16x1xf32> -> vector<16x1xf32>
    %368 = vector.broadcast %367 : vector<16x1xf32> to vector<16x16xf32>
    %369 = arith.mulf %364, %368 : vector<16x16xf32>
    %370 = arith.truncf %369 : vector<16x16xf32> to vector<16x16xbf16>
    %371 = arith.truncf %355 : vector<16x16xf32> to vector<16x16xbf16>
    %cst_202 = arith.constant dense<0.000000e+00> : vector<16x16xf32>
    %372 = tpu.matmul %370, %371, %cst_202 {dimension_numbers = #tpu.dot_dimension_numbers<[1], [0], [0], [1], [0, 0, 1, 1], [], []>} : vector<16x16xbf16>, vector<16x16xbf16>, vector<16x16xf32> -> vector<16x16xf32>
    %373 = arith.truncf %372 : vector<16x16xf32> to vector<16x16xbf16>
    %c3_203 = arith.constant 3 : index
    %c0_204 = arith.constant 0 : index
    %c0_205 = arith.constant 0 : index
    %374 = vector.load %arg13[%c3_203, %c0_204, %c0_205] : memref<4x16x32xbf16, #tpu.memory_space<vmem>>, vector<1x16x32xbf16>
    %375 = vector.shape_cast %374 : vector<1x16x32xbf16> to vector<16x32xbf16>
    %cst_206 = arith.constant dense<0.000000e+00> : vector<16x32xf32>
    %376 = tpu.matmul %373, %375, %cst_206 {dimension_numbers = #tpu.dot_dimension_numbers<[1], [0], [0], [1], [0, 0, 1, 1], [], []>} : vector<16x16xbf16>, vector<16x32xbf16>, vector<16x32xf32> -> vector<16x32xf32>
    %377 = arith.addf %334, %376 : vector<16x32xf32>
    %378 = arith.addf %287, %377 : vector<16x32xf32>
    %c1_207 = arith.constant 1 : index
    %c0_208 = arith.constant 0 : index
    %c0_209 = arith.constant 0 : index
    %379 = vector.load %arg15[%c1_207, %c0_208, %c0_209] : memref<2x1x32xf32, #tpu.memory_space<vmem>>, vector<1x1x32xf32>
    %380 = vector.shape_cast %379 : vector<1x1x32xf32> to vector<1x32xf32>
    %c1_210 = arith.constant 1 : index
    %c0_211 = arith.constant 0 : index
    %c0_212 = arith.constant 0 : index
    %381 = vector.load %arg16[%c1_210, %c0_211, %c0_212] : memref<2x1x32xf32, #tpu.memory_space<vmem>>, vector<1x1x32xf32>
    %382 = vector.shape_cast %381 : vector<1x1x32xf32> to vector<1x32xf32>
    %cst_213 = arith.constant dense<0.000000e+00> : vector<16xf32>
    %383 = vector.multi_reduction <add>, %378, %cst_213 [1] : vector<16x32xf32> to vector<16xf32>
    %384 = vector.shape_cast %383 : vector<16xf32> to vector<16x1xf32>
    %cst_214 = arith.constant 3.200000e+01 : f32
    %385 = vector.broadcast %cst_214 : f32 to vector<16x1xf32>
    %386 = arith.divf %384, %385 : vector<16x1xf32>
    %387 = vector.broadcast %386 : vector<16x1xf32> to vector<16x32xf32>
    %388 = arith.subf %378, %387 : vector<16x32xf32>
    %389 = vector.broadcast %386 : vector<16x1xf32> to vector<16x32xf32>
    %390 = arith.subf %378, %389 : vector<16x32xf32>
    %391 = arith.mulf %388, %390 : vector<16x32xf32>
    %cst_215 = arith.constant dense<0.000000e+00> : vector<16xf32>
    %392 = vector.multi_reduction <add>, %391, %cst_215 [1] : vector<16x32xf32> to vector<16xf32>
    %393 = vector.shape_cast %392 : vector<16xf32> to vector<16x1xf32>
    %cst_216 = arith.constant 3.200000e+01 : f32
    %394 = vector.broadcast %cst_216 : f32 to vector<16x1xf32>
    %395 = arith.divf %393, %394 : vector<16x1xf32>
    %396 = vector.broadcast %386 : vector<16x1xf32> to vector<16x32xf32>
    %397 = arith.subf %378, %396 : vector<16x32xf32>
    %cst_217 = arith.constant 9.99999996E-13 : f32
    %398 = vector.broadcast %cst_217 : f32 to vector<16x1xf32>
    %399 = arith.addf %395, %398 : vector<16x1xf32>
    %400 = math.rsqrt %399 : vector<16x1xf32>
    %401 = vector.broadcast %400 : vector<16x1xf32> to vector<16x32xf32>
    %402 = arith.mulf %397, %401 : vector<16x32xf32>
    %403 = vector.broadcast %380 : vector<1x32xf32> to vector<16x32xf32>
    %404 = arith.mulf %402, %403 : vector<16x32xf32>
    %405 = vector.broadcast %382 : vector<1x32xf32> to vector<16x32xf32>
    %406 = arith.addf %404, %405 : vector<16x32xf32>
    %407 = arith.truncf %406 : vector<16x32xf32> to vector<16x32xbf16>
    %c1_218 = arith.constant 1 : index
    %c0_219 = arith.constant 0 : index
    %c0_220 = arith.constant 0 : index
    %408 = vector.load %arg17[%c1_218, %c0_219, %c0_220] : memref<2x32x64xbf16, #tpu.memory_space<vmem>>, vector<1x32x64xbf16>
    %409 = vector.shape_cast %408 : vector<1x32x64xbf16> to vector<32x64xbf16>
    %cst_221 = arith.constant dense<0.000000e+00> : vector<16x64xf32>
    %410 = tpu.matmul %407, %409, %cst_221 {dimension_numbers = #tpu.dot_dimension_numbers<[1], [0], [0], [1], [0, 0, 1, 1], [], []>} : vector<16x32xbf16>, vector<32x64xbf16>, vector<16x64xf32> -> vector<16x64xf32>
    %c1_222 = arith.constant 1 : index
    %c0_223 = arith.constant 0 : index
    %c0_224 = arith.constant 0 : index
    %411 = vector.load %arg18[%c1_222, %c0_223, %c0_224] : memref<2x1x64xf32, #tpu.memory_space<vmem>>, vector<1x1x64xf32>
    %412 = vector.shape_cast %411 : vector<1x1x64xf32> to vector<1x64xf32>
    %413 = vector.broadcast %412 : vector<1x64xf32> to vector<16x64xf32>
    %414 = arith.addf %410, %413 : vector<16x64xf32>
    %cst_225 = arith.constant 5.000000e-01 : f32
    %415 = vector.broadcast %cst_225 : f32 to vector<16x64xf32>
    %416 = arith.mulf %415, %414 : vector<16x64xf32>
    %cst_226 = arith.constant 4.471500e-02 : f32
    %417 = vector.broadcast %cst_226 : f32 to vector<16x64xf32>
    %418 = arith.mulf %417, %414 : vector<16x64xf32>
    %419 = arith.mulf %418, %414 : vector<16x64xf32>
    %420 = arith.mulf %419, %414 : vector<16x64xf32>
    %421 = arith.addf %414, %420 : vector<16x64xf32>
    %cst_227 = arith.constant 0.797884583 : f32
    %422 = vector.broadcast %cst_227 : f32 to vector<16x64xf32>
    %423 = arith.mulf %422, %421 : vector<16x64xf32>
    %424 = math.tanh %423 : vector<16x64xf32>
    %cst_228 = arith.constant 1.000000e+00 : f32
    %425 = vector.broadcast %cst_228 : f32 to vector<16x64xf32>
    %426 = arith.addf %425, %424 : vector<16x64xf32>
    %427 = arith.mulf %416, %426 : vector<16x64xf32>
    %428 = arith.truncf %427 : vector<16x64xf32> to vector<16x64xbf16>
    %c1_229 = arith.constant 1 : index
    %c0_230 = arith.constant 0 : index
    %c0_231 = arith.constant 0 : index
    %429 = vector.load %arg19[%c1_229, %c0_230, %c0_231] : memref<2x64x32xbf16, #tpu.memory_space<vmem>>, vector<1x64x32xbf16>
    %430 = vector.shape_cast %429 : vector<1x64x32xbf16> to vector<64x32xbf16>
    %cst_232 = arith.constant dense<0.000000e+00> : vector<16x32xf32>
    %431 = tpu.matmul %428, %430, %cst_232 {dimension_numbers = #tpu.dot_dimension_numbers<[1], [0], [0], [1], [0, 0, 1, 1], [], []>} : vector<16x64xbf16>, vector<64x32xbf16>, vector<16x32xf32> -> vector<16x32xf32>
    %c1_233 = arith.constant 1 : index
    %c0_234 = arith.constant 0 : index
    %c0_235 = arith.constant 0 : index
    %432 = vector.load %arg20[%c1_233, %c0_234, %c0_235] : memref<2x1x32xf32, #tpu.memory_space<vmem>>, vector<1x1x32xf32>
    %433 = vector.shape_cast %432 : vector<1x1x32xf32> to vector<1x32xf32>
    %434 = vector.broadcast %433 : vector<1x32xf32> to vector<16x32xf32>
    %435 = arith.addf %431, %434 : vector<16x32xf32>
    %436 = arith.addf %406, %435 : vector<16x32xf32>
    %c1_236 = arith.constant 1 : index
    %c0_237 = arith.constant 0 : index
    %c0_238 = arith.constant 0 : index
    %437 = vector.load %arg21[%c1_236, %c0_237, %c0_238] : memref<2x1x32xf32, #tpu.memory_space<vmem>>, vector<1x1x32xf32>
    %438 = vector.shape_cast %437 : vector<1x1x32xf32> to vector<1x32xf32>
    %c1_239 = arith.constant 1 : index
    %c0_240 = arith.constant 0 : index
    %c0_241 = arith.constant 0 : index
    %439 = vector.load %arg22[%c1_239, %c0_240, %c0_241] : memref<2x1x32xf32, #tpu.memory_space<vmem>>, vector<1x1x32xf32>
    %440 = vector.shape_cast %439 : vector<1x1x32xf32> to vector<1x32xf32>
    %cst_242 = arith.constant dense<0.000000e+00> : vector<16xf32>
    %441 = vector.multi_reduction <add>, %436, %cst_242 [1] : vector<16x32xf32> to vector<16xf32>
    %442 = vector.shape_cast %441 : vector<16xf32> to vector<16x1xf32>
    %cst_243 = arith.constant 3.200000e+01 : f32
    %443 = vector.broadcast %cst_243 : f32 to vector<16x1xf32>
    %444 = arith.divf %442, %443 : vector<16x1xf32>
    %445 = vector.broadcast %444 : vector<16x1xf32> to vector<16x32xf32>
    %446 = arith.subf %436, %445 : vector<16x32xf32>
    %447 = vector.broadcast %444 : vector<16x1xf32> to vector<16x32xf32>
    %448 = arith.subf %436, %447 : vector<16x32xf32>
    %449 = arith.mulf %446, %448 : vector<16x32xf32>
    %cst_244 = arith.constant dense<0.000000e+00> : vector<16xf32>
    %450 = vector.multi_reduction <add>, %449, %cst_244 [1] : vector<16x32xf32> to vector<16xf32>
    %451 = vector.shape_cast %450 : vector<16xf32> to vector<16x1xf32>
    %cst_245 = arith.constant 3.200000e+01 : f32
    %452 = vector.broadcast %cst_245 : f32 to vector<16x1xf32>
    %453 = arith.divf %451, %452 : vector<16x1xf32>
    %454 = vector.broadcast %444 : vector<16x1xf32> to vector<16x32xf32>
    %455 = arith.subf %436, %454 : vector<16x32xf32>
    %cst_246 = arith.constant 9.99999996E-13 : f32
    %456 = vector.broadcast %cst_246 : f32 to vector<16x1xf32>
    %457 = arith.addf %453, %456 : vector<16x1xf32>
    %458 = math.rsqrt %457 : vector<16x1xf32>
    %459 = vector.broadcast %458 : vector<16x1xf32> to vector<16x32xf32>
    %460 = arith.mulf %455, %459 : vector<16x32xf32>
    %461 = vector.broadcast %438 : vector<1x32xf32> to vector<16x32xf32>
    %462 = arith.mulf %460, %461 : vector<16x32xf32>
    %463 = vector.broadcast %440 : vector<1x32xf32> to vector<16x32xf32>
    %464 = arith.addf %462, %463 : vector<16x32xf32>
    %465 = vector.extract_strided_slice %464 {offsets = [0, 0], sizes = [1, 32], strides = [1, 1]} : vector<16x32xf32> to vector<1x32xf32>
    %466 = vector.extract_strided_slice %464 {offsets = [8, 0], sizes = [1, 32], strides = [1, 1]} : vector<16x32xf32> to vector<1x32xf32>
    %467 = tpu.concatenate %465, %466 in 0 : vector<1x32xf32>, vector<1x32xf32> -> vector<2x32xf32>
    %468 = arith.truncf %467 : vector<2x32xf32> to vector<2x32xbf16>
    %c0_247 = arith.constant 0 : index
    %c0_248 = arith.constant 0 : index
    %469 = vector.load %arg23[%c0_247, %c0_248] : memref<32x32xbf16, #tpu.memory_space<vmem>>, vector<32x32xbf16>
    %cst_249 = arith.constant dense<0.000000e+00> : vector<2x32xf32>
    %470 = tpu.matmul %468, %469, %cst_249 {dimension_numbers = #tpu.dot_dimension_numbers<[1], [0], [0], [1], [0, 0, 1, 1], [], []>} : vector<2x32xbf16>, vector<32x32xbf16>, vector<2x32xf32> -> vector<2x32xf32>
    %c0_250 = arith.constant 0 : index
    %c0_251 = arith.constant 0 : index
    %471 = vector.load %arg24[%c0_250, %c0_251] : memref<1x32xf32, #tpu.memory_space<vmem>>, vector<1x32xf32>
    %472 = vector.broadcast %471 : vector<1x32xf32> to vector<2x32xf32>
    %473 = arith.addf %470, %472 : vector<2x32xf32>
    %474 = math.tanh %473 : vector<2x32xf32>
    %475 = arith.truncf %474 : vector<2x32xf32> to vector<2x32xbf16>
    %c0_252 = arith.constant 0 : index
    %c0_253 = arith.constant 0 : index
    %476 = vector.load %arg25[%c0_252, %c0_253] : memref<32x128xbf16, #tpu.memory_space<vmem>>, vector<32x128xbf16>
    %cst_254 = arith.constant dense<0.000000e+00> : vector<2x128xf32>
    %477 = tpu.matmul %475, %476, %cst_254 {dimension_numbers = #tpu.dot_dimension_numbers<[1], [0], [0], [1], [0, 0, 1, 1], [], []>} : vector<2x32xbf16>, vector<32x128xbf16>, vector<2x128xf32> -> vector<2x128xf32>
    %c0_255 = arith.constant 0 : index
    %c0_256 = arith.constant 0 : index
    %478 = vector.load %arg26[%c0_255, %c0_256] : memref<1x128xf32, #tpu.memory_space<vmem>>, vector<1x128xf32>
    %479 = vector.broadcast %478 : vector<1x128xf32> to vector<2x128xf32>
    %480 = arith.addf %477, %479 : vector<2x128xf32>
    %c0_257 = arith.constant 0 : index
    %c0_258 = arith.constant 0 : index
    %c0_259 = arith.constant 0 : index
    %481 = vector.load %arg27[%c0_257, %c0_258, %c0_259] : memref<1x2x128xf32, #tpu.memory_space<vmem>>, vector<1x2x128xf32>
    %482 = vector.shape_cast %481 : vector<1x2x128xf32> to vector<2x128xf32>
    %483 = vector.shape_cast %480 : vector<2x128xf32> to vector<1x2x128xf32>
    tpu.vector_store %arg27[%c0_257, %c0_258, %c0_259], %483 {strides = array<i32>} : memref<1x2x128xf32, #tpu.memory_space<vmem>>, vector<1x2x128xf32>,
    return
  }
  func.func @transform_0(%arg0: i32, %arg1: memref<1x16xi32, #tpu.memory_space<smem>>) -> (i32, i32, i32) {
    %c0_i32 = arith.constant 0 : i32
    %c0_i32_0 = arith.constant 0 : i32
    %c0_i32_1 = arith.constant 0 : i32
    %c0_i32_2 = arith.constant 0 : i32
    return %c0_i32, %c0_i32_0, %c0_i32_1 : i32, i32, i32
  }
  func.func @transform_1(%arg0: i32, %arg1: memref<1x16xi32, #tpu.memory_space<smem>>) -> (i32, i32) {
    %c0_i32 = arith.constant 0 : i32
    %c0_i32_0 = arith.constant 0 : i32
    %c0_i32_1 = arith.constant 0 : i32
    return %c0_i32, %c0_i32_0 : i32, i32
  }
  func.func @transform_2(%arg0: i32, %arg1: memref<1x16xi32, #tpu.memory_space<smem>>) -> (i32, i32, i32) {
    %c0_i32 = arith.constant 0 : i32
    %c0_i32_0 = arith.constant 0 : i32
    %c0_i32_1 = arith.constant 0 : i32
    return %arg0, %c0_i32, %c0_i32_0 : i32, i32, i32
  }
  func.func @transform_3(%arg0: i32, %arg1: memref<1x16xi32, #tpu.memory_space<smem>>) -> (i32, i32) {
    %c0_i32 = arith.constant 0 : i32
    %c0_i32_0 = arith.constant 0 : i32
    %c0_i32_1 = arith.constant 0 : i32
    return %c0_i32, %c0_i32_0 : i32, i32
  }
  func.func @transform_4(%arg0: i32, %arg1: memref<1x16xi32, #tpu.memory_space<smem>>) -> (i32, i32) {
    %c0_i32 = arith.constant 0 : i32
    %c0_i32_0 = arith.constant 0 : i32
    %c0_i32_1 = arith.constant 0 : i32
    return %c0_i32, %c0_i32_0 : i32, i32
  }
  func.func @transform_5(%arg0: i32, %arg1: memref<1x16xi32, #tpu.memory_space<smem>>) -> (i32, i32, i32) {
    %c0_i32 = arith.constant 0 : i32
    %c0_i32_0 = arith.constant 0 : i32
    %c0_i32_1 = arith.constant 0 : i32
    %c0_i32_2 = arith.constant 0 : i32
    return %c0_i32, %c0_i32_0, %c0_i32_1 : i32, i32, i32
  }
  func.func @transform_6(%arg0: i32, %arg1: memref<1x16xi32, #tpu.memory_space<smem>>) -> (i32, i32, i32) {
    %c0_i32 = arith.constant 0 : i32
    %c0_i32_0 = arith.constant 0 : i32
    %c0_i32_1 = arith.constant 0 : i32
    %c0_i32_2 = arith.constant 0 : i32
    return %c0_i32, %c0_i32_0, %c0_i32_1 : i32, i32, i32
  }
  func.func @transform_7(%arg0: i32, %arg1: memref<1x16xi32, #tpu.memory_space<smem>>) -> (i32, i32, i32) {
    %c0_i32 = arith.constant 0 : i32
    %c0_i32_0 = arith.constant 0 : i32
    %c0_i32_1 = arith.constant 0 : i32
    %c0_i32_2 = arith.constant 0 : i32
    return %c0_i32, %c0_i32_0, %c0_i32_1 : i32, i32, i32
  }
  func.func @transform_8(%arg0: i32, %arg1: memref<1x16xi32, #tpu.memory_space<smem>>) -> (i32, i32, i32) {
    %c0_i32 = arith.constant 0 : i32
    %c0_i32_0 = arith.constant 0 : i32
    %c0_i32_1 = arith.constant 0 : i32
    %c0_i32_2 = arith.constant 0 : i32
    return %c0_i32, %c0_i32_0, %c0_i32_1 : i32, i32, i32
  }
  func.func @transform_9(%arg0: i32, %arg1: memref<1x16xi32, #tpu.memory_space<smem>>) -> (i32, i32, i32) {
    %c0_i32 = arith.constant 0 : i32
    %c0_i32_0 = arith.constant 0 : i32
    %c0_i32_1 = arith.constant 0 : i32
    %c0_i32_2 = arith.constant 0 : i32
    return %c0_i32, %c0_i32_0, %c0_i32_1 : i32, i32, i32
  }
  func.func @transform_10(%arg0: i32, %arg1: memref<1x16xi32, #tpu.memory_space<smem>>) -> (i32, i32, i32) {
    %c0_i32 = arith.constant 0 : i32
    %c0_i32_0 = arith.constant 0 : i32
    %c0_i32_1 = arith.constant 0 : i32
    %c0_i32_2 = arith.constant 0 : i32
    return %c0_i32, %c0_i32_0, %c0_i32_1 : i32, i32, i32
  }
  func.func @transform_11(%arg0: i32, %arg1: memref<1x16xi32, #tpu.memory_space<smem>>) -> (i32, i32, i32) {
    %c0_i32 = arith.constant 0 : i32
    %c0_i32_0 = arith.constant 0 : i32
    %c0_i32_1 = arith.constant 0 : i32
    %c0_i32_2 = arith.constant 0 : i32
    return %c0_i32, %c0_i32_0, %c0_i32_1 : i32, i32, i32
  }
  func.func @transform_12(%arg0: i32, %arg1: memref<1x16xi32, #tpu.memory_space<smem>>) -> (i32, i32, i32) {
    %c0_i32 = arith.constant 0 : i32
    %c0_i32_0 = arith.constant 0 : i32
    %c0_i32_1 = arith.constant 0 : i32
    %c0_i32_2 = arith.constant 0 : i32
    return %c0_i32, %c0_i32_0, %c0_i32_1 : i32, i32, i32
  }
  func.func @transform_13(%arg0: i32, %arg1: memref<1x16xi32, #tpu.memory_space<smem>>) -> (i32, i32, i32) {
    %c0_i32 = arith.constant 0 : i32
    %c0_i32_0 = arith.constant 0 : i32
    %c0_i32_1 = arith.constant 0 : i32
    %c0_i32_2 = arith.constant 0 : i32
    return %c0_i32, %c0_i32_0, %c0_i32_1 : i32, i32, i32
  }
  func.func @transform_14(%arg0: i32, %arg1: memref<1x16xi32, #tpu.memory_space<smem>>) -> (i32, i32, i32) {
    %c0_i32 = arith.constant 0 : i32
    %c0_i32_0 = arith.constant 0 : i32
    %c0_i32_1 = arith.constant 0 : i32
    %c0_i32_2 = arith.constant 0 : i32
    return %c0_i32, %c0_i32_0, %c0_i32_1 : i32, i32, i32
  }
  func.func @transform_15(%arg0: i32, %arg1: memref<1x16xi32, #tpu.memory_space<smem>>) -> (i32, i32, i32) {
    %c0_i32 = arith.constant 0 : i32
    %c0_i32_0 = arith.constant 0 : i32
    %c0_i32_1 = arith.constant 0 : i32
    %c0_i32_2 = arith.constant 0 : i32
    return %c0_i32, %c0_i32_0, %c0_i32_1 : i32, i32, i32
  }
  func.func @transform_16(%arg0: i32, %arg1: memref<1x16xi32, #tpu.memory_space<smem>>) -> (i32, i32, i32) {
    %c0_i32 = arith.constant 0 : i32
    %c0_i32_0 = arith.constant 0 : i32
    %c0_i32_1 = arith.constant 0 : i32
    %c0_i32_2 = arith.constant 0 : i32
    return %c0_i32, %c0_i32_0, %c0_i32_1 : i32, i32, i32
  }
  func.func @transform_17(%arg0: i32, %arg1: memref<1x16xi32, #tpu.memory_space<smem>>) -> (i32, i32, i32) {
    %c0_i32 = arith.constant 0 : i32
    %c0_i32_0 = arith.constant 0 : i32
    %c0_i32_1 = arith.constant 0 : i32
    %c0_i32_2 = arith.constant 0 : i32
    return %c0_i32, %c0_i32_0, %c0_i32_1 : i32, i32, i32
  }
  func.func @transform_18(%arg0: i32, %arg1: memref<1x16xi32, #tpu.memory_space<smem>>) -> (i32, i32, i32) {
    %c0_i32 = arith.constant 0 : i32
    %c0_i32_0 = arith.constant 0 : i32
    %c0_i32_1 = arith.constant 0 : i32
    %c0_i32_2 = arith.constant 0 : i32
    return %c0_i32, %c0_i32_0, %c0_i32_1 : i32, i32, i32
  }
  func.func @transform_19(%arg0: i32, %arg1: memref<1x16xi32, #tpu.memory_space<smem>>) -> (i32, i32, i32) {
    %c0_i32 = arith.constant 0 : i32
    %c0_i32_0 = arith.constant 0 : i32
    %c0_i32_1 = arith.constant 0 : i32
    %c0_i32_2 = arith.constant 0 : i32
    return %c0_i32, %c0_i32_0, %c0_i32_1 : i32, i32, i32
  }
  func.func @transform_20(%arg0: i32, %arg1: memref<1x16xi32, #tpu.memory_space<smem>>) -> (i32, i32, i32) {
    %c0_i32 = arith.constant 0 : i32
    %c0_i32_0 = arith.constant 0 : i32
    %c0_i32_1 = arith.constant 0 : i32
    %c0_i32_2 = arith.constant 0 : i32
    return %c0_i32, %c0_i32_0, %c0_i32_1 : i32, i32, i32
  }
  func.func @transform_21(%arg0: i32, %arg1: memref<1x16xi32, #tpu.memory_space<smem>>) -> (i32, i32) {
    %c0_i32 = arith.constant 0 : i32
    %c0_i32_0 = arith.constant 0 : i32
    %c0_i32_1 = arith.constant 0 : i32
    return %c0_i32, %c0_i32_0 : i32, i32
  }
  func.func @transform_22(%arg0: i32, %arg1: memref<1x16xi32, #tpu.memory_space<smem>>) -> (i32, i32) {
    %c0_i32 = arith.constant 0 : i32
    %c0_i32_0 = arith.constant 0 : i32
    %c0_i32_1 = arith.constant 0 : i32
    return %c0_i32, %c0_i32_0 : i32, i32
  }
  func.func @transform_23(%arg0: i32, %arg1: memref<1x16xi32, #tpu.memory_space<smem>>) -> (i32, i32) {
    %c0_i32 = arith.constant 0 : i32
    %c0_i32_0 = arith.constant 0 : i32
    %c0_i32_1 = arith.constant 0 : i32
    return %c0_i32, %c0_i32_0 : i32, i32
  }
  func.func @transform_24(%arg0: i32, %arg1: memref<1x16xi32, #tpu.memory_space<smem>>) -> (i32, i32) {
    %c0_i32 = arith.constant 0 : i32
    %c0_i32_0 = arith.constant 0 : i32
    %c0_i32_1 = arith.constant 0 : i32
    return %c0_i32, %c0_i32_0 : i32, i32
  }
  func.func @transform_25(%arg0: i32, %arg1: memref<1x16xi32, #tpu.memory_space<smem>>) -> (i32, i32, i32) {
    %c0_i32 = arith.constant 0 : i32
    %c0_i32_0 = arith.constant 0 : i32
    %c0_i32_1 = arith.constant 0 : i32
    return %arg0, %c0_i32, %c0_i32_0 : i32, i32, i32
  }
}

</mosaic_0001>

<llo_original>
// kernel: forward.1
$region0: #{forward.1}
  #allocation0 [shape = 'u32[]', space=smem, size = 0x4, offset = 0x4, fixed_abs, tag = 'smem constant byte address 0x4 - core index']
  #allocation1 [shape = 'u32[144,128]{1,0:T(1,128)}', space=vmem, size = 0x12000, scoped, tag = 'internal scratch']
  #allocation2 [shape = 's32[1]{0}', space=sflag, size = 0x4, scoped, tag = 'scoped memory for forward.1']
  #allocation3 [shape = 'u8[512]{0}', space=smem, size = 0x200, scoped, tag = 'prefetched SMEM operand 0']
  %s0 = inlined_call_operand.vmem [shape: s32[1,16], index: 0, kind: input, shape index: {}]
  %s1 = inlined_call_operand.vmem [shape: f32[100,1,32], index: 1, kind: input, shape index: {}]
  %s2 = inlined_call_operand.vmem [shape: f32[16,32], index: 2, kind: input, shape index: {}]
  %s3 = inlined_call_operand.vmem [shape: f32[1,16,16], index: 3, kind: input, shape index: {}]
  %s4 = inlined_call_operand.vmem [shape: f32[1,32], index: 4, kind: input, shape index: {}]
  %s5 = inlined_call_operand.vmem [shape: f32[1,32], index: 5, kind: input, shape index: {}]
  %s6 = inlined_call_operand.vmem [shape: bf16[4,32,16], index: 6, kind: input, shape index: {}]
  %s7 = inlined_call_operand.vmem [shape: f32[4,1,16], index: 7, kind: input, shape index: {}]
  %s8 = inlined_call_operand.vmem [shape: bf16[4,32,16], index: 8, kind: input, shape index: {}]
  %s9 = inlined_call_operand.vmem [shape: f32[4,1,16], index: 9, kind: input, shape index: {}]
  %s10 = inlined_call_operand.vmem [shape: bf16[4,32,16], index: 10, kind: input, shape index: {}]
  %s11 = inlined_call_operand.vmem [shape: f32[4,1,16], index: 11, kind: input, shape index: {}]
  %s12 = inlined_call_operand.vmem [shape: bf16[4,16,32], index: 12, kind: input, shape index: {}]
  %s13 = inlined_call_operand.vmem [shape: f32[2,1,32], index: 13, kind: input, shape index: {}]
  %s14 = inlined_call_operand.vmem [shape: f32[2,1,32], index: 14, kind: input, shape index: {}]
  %s15 = inlined_call_operand.vmem [shape: f32[2,1,32], index: 15, kind: input, shape index: {}]
  %s16 = inlined_call_operand.vmem [shape: bf16[2,32,64], index: 16, kind: input, shape index: {}]
  %s17 = inlined_call_operand.vmem [shape: f32[2,1,64], index: 17, kind: input, shape index: {}]
  %s18 = inlined_call_operand.vmem [shape: bf16[2,64,32], index: 18, kind: input, shape index: {}]
  %s19 = inlined_call_operand.vmem [shape: f32[2,1,32], index: 19, kind: input, shape index: {}]
  %s20 = inlined_call_operand.vmem [shape: f32[2,1,32], index: 20, kind: input, shape index: {}]
  %s21 = inlined_call_operand.vmem [shape: f32[2,1,32], index: 21, kind: input, shape index: {}]
  %s22 = inlined_call_operand.vmem [shape: bf16[32,32], index: 22, kind: input, shape index: {}]
  %s23 = inlined_call_operand.vmem [shape: f32[1,32], index: 23, kind: input, shape index: {}]
  %s24 = inlined_call_operand.vmem [shape: bf16[32,128], index: 24, kind: input, shape index: {}]
  %s25 = inlined_call_operand.vmem [shape: f32[1,128], index: 25, kind: input, shape index: {}]
  %s26 = inlined_call_operand.hbm [shape: f32[1,2,128], index: 26, kind: output, shape index: {}]
  %s27 = sld [smem:[#allocation0]]
  $region110: #{forward.1} parent=0
    _
  %s29 = ssub.s32 1, %s27
  %s30 = scalar_select 0, %s29, %s27
  %s31 = sshll.u32 %s0, 4
  %s32 = int_to_ptr.vmem [resolvable:$true] %s31
  %34 = dma.vmem_to_smem %s32, 16, [#allocation3], [#allocation2]
  %35 = dma.done [#allocation2], 16
  %36 = sfence
  $region1: #{forward.1} parent=0
    #allocation4 [shape = 'u8[1024]{0}', space=vmem, size = 0x400, scoped, tag = 'output window, operand 0, single buffered']
    #allocation5 [shape = 's32[1]{0}', space=sflag, size = 0x4, scoped, tag = 'scoped memory for forward.1']
    %37 = vsyncpa [#allocation5], 0
    // Predicated region
    $region2: #{forward.1} parent=1 // pred_check
      _
    $region3: #{forward.1} parent=1 // pred_check_branch
      %39 = sbr.rel (0) target = $region5
    $region4: #{forward.1} parent=1 // pred_region
      _
    $region5: #{forward.1} parent=1 // pred_fallthru
      _
    // Predicated region
    $region6: #{forward.1} parent=1 // pred_check
      _
    $region7: #{forward.1} parent=1 // pred_check_branch
      %41 = sbr.rel (0) target = $region9
    $region8: #{forward.1} parent=1 // pred_region
      _
    $region9: #{forward.1} parent=1 // pred_fallthru
      _
    // Predicated region
    $region10: #{forward.1} parent=1 // pred_check
      _
    $region11: #{forward.1} parent=1 // pred_check_branch
      %43 = sbr.rel (0) target = $region13
    $region12: #{forward.1} parent=1 // pred_region
      _
    $region13: #{forward.1} parent=1 // pred_fallthru
      _
    // Predicated region
    $region14: #{forward.1} parent=1 // pred_check
      _
    $region15: #{forward.1} parent=1 // pred_check_branch
      %45 = sbr.rel (0) target = $region17
    $region16: #{forward.1} parent=1 // pred_region
      _
    $region17: #{forward.1} parent=1 // pred_fallthru
      _
    // Predicated region
    $region18: #{forward.1} parent=1 // pred_check
      _
    $region19: #{forward.1} parent=1 // pred_check_branch
      %47 = sbr.rel (0) target = $region21
    $region20: #{forward.1} parent=1 // pred_region
      _
    $region21: #{forward.1} parent=1 // pred_fallthru
      _
    // Predicated region
    $region22: #{forward.1} parent=1 // pred_check
      _
    $region23: #{forward.1} parent=1 // pred_check_branch
      %49 = sbr.rel (0) target = $region25
    $region24: #{forward.1} parent=1 // pred_region
      _
    $region25: #{forward.1} parent=1 // pred_fallthru
      _
    // Predicated region
    $region26: #{forward.1} parent=1 // pred_check
      _
    $region27: #{forward.1} parent=1 // pred_check_branch
      %51 = sbr.rel (0) target = $region29
    $region28: #{forward.1} parent=1 // pred_region
      _
    $region29: #{forward.1} parent=1 // pred_fallthru
      _
    // Predicated region
    $region30: #{forward.1} parent=1 // pred_check
      _
    $region31: #{forward.1} parent=1 // pred_check_branch
      %53 = sbr.rel (0) target = $region33
    $region32: #{forward.1} parent=1 // pred_region
      _
    $region33: #{forward.1} parent=1 // pred_fallthru
      _
    // Predicated region
    $region34: #{forward.1} parent=1 // pred_check
      _
    $region35: #{forward.1} parent=1 // pred_check_branch
      %55 = sbr.rel (0) target = $region37
    $region36: #{forward.1} parent=1 // pred_region
      _
    $region37: #{forward.1} parent=1 // pred_fallthru
      _
    // Predicated region
    $region38: #{forward.1} parent=1 // pred_check
      _
    $region39: #{forward.1} parent=1 // pred_check_branch
      %57 = sbr.rel (0) target = $region41
    $region40: #{forward.1} parent=1 // pred_region
      _
    $region41: #{forward.1} parent=1 // pred_fallthru
      _
    // Predicated region
    $region42: #{forward.1} parent=1 // pred_check
      _
    $region43: #{forward.1} parent=1 // pred_check_branch
      %59 = sbr.rel (0) target = $region45
    $region44: #{forward.1} parent=1 // pred_region
      _
    $region45: #{forward.1} parent=1 // pred_fallthru
      _
    // Predicated region
    $region46: #{forward.1} parent=1 // pred_check
      _
    $region47: #{forward.1} parent=1 // pred_check_branch
      %61 = sbr.rel (0) target = $region49
    $region48: #{forward.1} parent=1 // pred_region
      _
    $region49: #{forward.1} parent=1 // pred_fallthru
      _
    // Predicated region
    $region50: #{forward.1} parent=1 // pred_check
      _
    $region51: #{forward.1} parent=1 // pred_check_branch
      %63 = sbr.rel (0) target = $region53
    $region52: #{forward.1} parent=1 // pred_region
      _
    $region53: #{forward.1} parent=1 // pred_fallthru
      _
    // Predicated region
    $region54: #{forward.1} parent=1 // pred_check
      _
    $region55: #{forward.1} parent=1 // pred_check_branch
      %65 = sbr.rel (0) target = $region57
    $region56: #{forward.1} parent=1 // pred_region
      _
    $region57: #{forward.1} parent=1 // pred_fallthru
      _
    // Predicated region
    $region58: #{forward.1} parent=1 // pred_check
      _
    $region59: #{forward.1} parent=1 // pred_check_branch
      %67 = sbr.rel (0) target = $region61
    $region60: #{forward.1} parent=1 // pred_region
      _
    $region61: #{forward.1} parent=1 // pred_fallthru
      _
    // Predicated region
    $region62: #{forward.1} parent=1 // pred_check
      _
    $region63: #{forward.1} parent=1 // pred_check_branch
      %69 = sbr.rel (0) target = $region65
    $region64: #{forward.1} parent=1 // pred_region
      _
    $region65: #{forward.1} parent=1 // pred_fallthru
      _
    // Predicated region
    $region66: #{forward.1} parent=1 // pred_check
      _
    $region67: #{forward.1} parent=1 // pred_check_branch
      %71 = sbr.rel (0) target = $region69
    $region68: #{forward.1} parent=1 // pred_region
      _
    $region69: #{forward.1} parent=1 // pred_fallthru
      _
    // Predicated region
    $region70: #{forward.1} parent=1 // pred_check
      _
    $region71: #{forward.1} parent=1 // pred_check_branch
      %73 = sbr.rel (0) target = $region73
    $region72: #{forward.1} parent=1 // pred_region
      _
    $region73: #{forward.1} parent=1 // pred_fallthru
      _
    // Predicated region
    $region74: #{forward.1} parent=1 // pred_check
      _
    $region75: #{forward.1} parent=1 // pred_check_branch
      %75 = sbr.rel (0) target = $region77
    $region76: #{forward.1} parent=1 // pred_region
      _
    $region77: #{forward.1} parent=1 // pred_fallthru
      _
    // Predicated region
    $region78: #{forward.1} parent=1 // pred_check
      _
    $region79: #{forward.1} parent=1 // pred_check_branch
      %77 = sbr.rel (0) target = $region81
    $region80: #{forward.1} parent=1 // pred_region
      _
    $region81: #{forward.1} parent=1 // pred_fallthru
      _
    // Predicated region
    $region82: #{forward.1} parent=1 // pred_check
      _
    $region83: #{forward.1} parent=1 // pred_check_branch
      %79 = sbr.rel (0) target = $region85
    $region84: #{forward.1} parent=1 // pred_region
      _
    $region85: #{forward.1} parent=1 // pred_fallthru
      _
    // Predicated region
    $region86: #{forward.1} parent=1 // pred_check
      _
    $region87: #{forward.1} parent=1 // pred_check_branch
      %81 = sbr.rel (0) target = $region89
    $region88: #{forward.1} parent=1 // pred_region
      _
    $region89: #{forward.1} parent=1 // pred_fallthru
      _
    // Predicated region
    $region90: #{forward.1} parent=1 // pred_check
      _
    $region91: #{forward.1} parent=1 // pred_check_branch
      %83 = sbr.rel (0) target = $region93
    $region92: #{forward.1} parent=1 // pred_region
      _
    $region93: #{forward.1} parent=1 // pred_fallthru
      _
    // Predicated region
    $region94: #{forward.1} parent=1 // pred_check
      _
    $region95: #{forward.1} parent=1 // pred_check_branch
      %85 = sbr.rel (0) target = $region97
    $region96: #{forward.1} parent=1 // pred_region
      _
    $region97: #{forward.1} parent=1 // pred_fallthru
      _
    // Predicated region
    $region98: #{forward.1} parent=1 // pred_check
      _
    $region99: #{forward.1} parent=1 // pred_check_branch
      %87 = sbr.rel (0) target = $region101
    $region100: #{forward.1} parent=1 // pred_region
      _
    $region101: #{forward.1} parent=1 // pred_fallthru
      _
    %s89 = smul.u32 0, 128
    %s90 = sld [smem:[#allocation3 + %s89]]
    %s91 = scalar_lea.vmem %s1, %s90
    %v92 = vld [vmem:[%s91] sm:$0x1]
    %s93 = sadd.s32 %s89, 1
    %s94 = sld [smem:[#allocation3 + %s93]]
    %s95 = scalar_lea.vmem %s1, %s94
    %v96 = vld [vmem:[%s95] sm:$0x1]
    %s97 = sadd.s32 %s89, 2
    %s98 = sld [smem:[#allocation3 + %s97]]
    %s99 = scalar_lea.vmem %s1, %s98
    %v100 = vld [vmem:[%s99] sm:$0x1]
    %s101 = sadd.s32 %s89, 3
    %s102 = sld [smem:[#allocation3 + %s101]]
    %s103 = scalar_lea.vmem %s1, %s102
    %v104 = vld [vmem:[%s103] sm:$0x1]
    %s105 = sadd.s32 %s89, 4
    %s106 = sld [smem:[#allocation3 + %s105]]
    %s107 = scalar_lea.vmem %s1, %s106
    %v108 = vld [vmem:[%s107] sm:$0x1]
    %s109 = sadd.s32 %s89, 5
    %s110 = sld [smem:[#allocation3 + %s109]]
    %s111 = scalar_lea.vmem %s1, %s110
    %v112 = vld [vmem:[%s111] sm:$0x1]
    %s113 = sadd.s32 %s89, 6
    %s114 = sld [smem:[#allocation3 + %s113]]
    %s115 = scalar_lea.vmem %s1, %s114
    %v116 = vld [vmem:[%s115] sm:$0x1]
    %s117 = sadd.s32 %s89, 7
    %s118 = sld [smem:[#allocation3 + %s117]]
    %s119 = scalar_lea.vmem %s1, %s118
    %v120 = vld [vmem:[%s119] sm:$0x1]
    %s121 = sadd.s32 %s89, 8
    %s122 = sld [smem:[#allocation3 + %s121]]
    %s123 = scalar_lea.vmem %s1, %s122
    %v124 = vld [vmem:[%s123] sm:$0x1]
    %s125 = sadd.s32 %s89, 9
    %s126 = sld [smem:[#allocation3 + %s125]]
    %s127 = scalar_lea.vmem %s1, %s126
    %v128 = vld [vmem:[%s127] sm:$0x1]
    %s129 = sadd.s32 %s89, 10
    %s130 = sld [smem:[#allocation3 + %s129]]
    %s131 = scalar_lea.vmem %s1, %s130
    %v132 = vld [vmem:[%s131] sm:$0x1]
    %s133 = sadd.s32 %s89, 11
    %s134 = sld [smem:[#allocation3 + %s133]]
    %s135 = scalar_lea.vmem %s1, %s134
    %v136 = vld [vmem:[%s135] sm:$0x1]
    %s137 = sadd.s32 %s89, 12
    %s138 = sld [smem:[#allocation3 + %s137]]
    %s139 = scalar_lea.vmem %s1, %s138
    %v140 = vld [vmem:[%s139] sm:$0x1]
    %s141 = sadd.s32 %s89, 13
    %s142 = sld [smem:[#allocation3 + %s141]]
    %s143 = scalar_lea.vmem %s1, %s142
    %v144 = vld [vmem:[%s143] sm:$0x1]
    %s145 = sadd.s32 %s89, 14
    %s146 = sld [smem:[#allocation3 + %s145]]
    %s147 = scalar_lea.vmem %s1, %s146
    %v148 = vld [vmem:[%s147] sm:$0x1]
    %s149 = sadd.s32 %s89, 15
    %s150 = sld [smem:[#allocation3 + %s149]]
    %s151 = scalar_lea.vmem %s1, %s150
    %v152 = vld [vmem:[%s151] sm:$0x1]
    %v154 = vlaneseq
    %v155 = vshrl.u32 %v154, 7
    %v156 = vsub.s32 0, %v155
    %v157 = vrot.slane %v96, %v156
    %v160 = vlaneseq
    %v161 = vshrl.u32 %v160, 7
    %v162 = vsub.s32 0, %v161
    %v163 = vrot.slane %v100, %v162
    %v166 = vlaneseq
    %v167 = vshrl.u32 %v166, 7
    %v168 = vsub.s32 0, %v167
    %v169 = vrot.slane %v104, %v168
    %v172 = vlaneseq
    %v173 = vshrl.u32 %v172, 7
    %v174 = vsub.s32 0, %v173
    %v175 = vrot.slane %v108, %v174
    %v178 = vlaneseq
    %v179 = vshrl.u32 %v178, 7
    %v180 = vsub.s32 0, %v179
    %v181 = vrot.slane %v112, %v180
    %v184 = vlaneseq
    %v185 = vshrl.u32 %v184, 7
    %v186 = vsub.s32 0, %v185
    %v187 = vrot.slane %v116, %v186
    %v190 = vlaneseq
    %v191 = vshrl.u32 %v190, 7
    %v192 = vsub.s32 0, %v191
    %v193 = vrot.slane %v120, %v192
    %v196 = vlaneseq
    %v197 = vshrl.u32 %v196, 7
    %v198 = vsub.s32 0, %v197
    %v199 = vrot.slane %v128, %v198
    %v202 = vlaneseq
    %v203 = vshrl.u32 %v202, 7
    %v204 = vsub.s32 0, %v203
    %v205 = vrot.slane %v132, %v204
    %v208 = vlaneseq
    %v209 = vshrl.u32 %v208, 7
    %v210 = vsub.s32 0, %v209
    %v211 = vrot.slane %v136, %v210
    %v214 = vlaneseq
    %v215 = vshrl.u32 %v214, 7
    %v216 = vsub.s32 0, %v215
    %v217 = vrot.slane %v140, %v216
    %v220 = vlaneseq
    %v221 = vshrl.u32 %v220, 7
    %v222 = vsub.s32 0, %v221
    %v223 = vrot.slane %v144, %v222
    %v226 = vlaneseq
    %v227 = vshrl.u32 %v226, 7
    %v228 = vsub.s32 0, %v227
    %v229 = vrot.slane %v148, %v228
    %v232 = vlaneseq
    %v233 = vshrl.u32 %v232, 7
    %v234 = vsub.s32 0, %v233
    %v235 = vrot.slane %v152, %v234
    %vm237 = vcmask 1040384
    %v238 = vsel %vm237, %v92, %v157
    %vm239 = vcmask 1041408
    %v240 = vsel %vm239, %v238, %v163
    %vm241 = vcmask 1042432
    %v242 = vsel %vm241, %v240, %v169
    %vm243 = vcmask 1043456
    %v244 = vsel %vm243, %v242, %v175
    %vm245 = vcmask 1044480
    %v246 = vsel %vm245, %v244, %v181
    %vm247 = vcmask 1045504
    %v248 = vsel %vm247, %v246, %v187
    %vm249 = vcmask 1046528
    %v250 = vsel %vm249, %v248, %v193
    %v251 = vsel %vm237, %v124, %v199
    %v252 = vsel %vm239, %v251, %v205
    %v253 = vsel %vm241, %v252, %v211
    %v254 = vsel %vm243, %v253, %v217
    %v255 = vsel %vm245, %v254, %v223
    %v256 = vsel %vm247, %v255, %v229
    %v257 = vsel %vm249, %v256, %v235
    %v258 = vld [vmem:[%s2] sm:$0xff]
    %v259 = vld [vmem:[%s2 + $0x8] sm:$0xff]
    %v260 = vadd.f32 %v250, %v258
    %v261 = vadd.f32 %v257, %v259
    %v262 = vld [vmem:[%s4] sm:$0x1]
    %v263 = vld [vmem:[%s5] sm:$0x1]
    %vm264 = vcmask 261120
    %v265 = vsel %vm264, %v260, 0.0
    %266 = vadd.xlane.f32.xlu0 %v265
    %v267 = vpop.xlane.xlu0 %266
    %v268 = vsel %vm264, %v261, 0.0
    %269 = vadd.xlane.f32.xlu0 %v268
    %v270 = vpop.xlane.xlu0 %269
    %v271 = vrcp.pop 32.0
    %v272 = vmul.f32 %v267, %v271
    %v273 = vmul.f32 %v270, %v271
    %v274 = vsub.f32 %v260, %v272
    %v275 = vsub.f32 %v261, %v273
    %v276 = vmul.f32 %v274, %v274
    %v277 = vmul.f32 %v275, %v275
    %v278 = vsel %vm264, %v276, 0.0
    %279 = vadd.xlane.f32.xlu0 %v278
    %v280 = vpop.xlane.xlu0 %279
    %v281 = vsel %vm264, %v277, 0.0
    %282 = vadd.xlane.f32.xlu0 %v281
    %v283 = vpop.xlane.xlu0 %282
    %v284 = vmul.f32 %v280, %v271
    %v285 = vmul.f32 %v283, %v271
    %v286 = vadd.f32 %v284, 1e-12
    %v287 = vadd.f32 %v285, 1e-12
    %v288 = vrsqrt.pop %v286
    %v289 = vrsqrt.pop %v287
    %v290 = vmul.f32 %v274, %v288
    %v291 = vmul.f32 %v275, %v289
    %v293 = vlaneseq
    %v294 = vshrl.u32 %v293, 7
    %v295 = vsub.s32 0, %v294
    %v296 = vrot.slane %v262, %v295
    %v298 = vmul.f32 %v290, %v296
    %v299 = vmul.f32 %v291, %v296
    %v301 = vlaneseq
    %v302 = vshrl.u32 %v301, 7
    %v303 = vsub.s32 0, %v302
    %v304 = vrot.slane %v263, %v303
    %v306 = vadd.f32 %v298, %v304
    %v307 = vadd.f32 %v299, %v304
    %v308 = vld [vmem:[%s3] sm:$0xff]
    %v309 = vld [vmem:[%s3 + $0x8] sm:$0xff]
    %v310 = vpack.c.bf16 %v307, %v306
    %v311 = vld [vmem:[%s13] sm:$0x1]
    %v312 = vld [vmem:[%s6] sm:$0xf]
    %v313 = vld [vmem:[%s6 + $0x4] sm:$0xf]
    %v314 = vld [vmem:[%s6 + $0x8] sm:$0xf]
    %v315 = vld [vmem:[%s6 + $0xc] sm:$0xf]
    %v316 = vld [vmem:[%s7] sm:$0x1]
    %v318 = vlaneseq
    %v319 = vshrl.u32 %v318, 7
    %v320 = vsub.s32 0, %v319
    %v321 = vrot.slane %v316, %v320
    %v327 = vunpack.c.l.b16 %v312
    %v328 = vunpack.c.l.b16 %v313
    %v329 = vunpack.c.l.b16 %v314
    %v330 = vunpack.c.l.b16 %v315
    %v331 = vpack.c.b16 %v328, %v327
    %v332 = vpack.c.b16 %v330, %v329
    %v336 = vsel %vm264, %v310, 0
    %338 = vmatprep.subr.bf16.mxu0 0
    %339 = vmatpush1.bf16.msra.mxu0 %v331
    %340 = vmatprep.subr.bf16.mxu0 0
    %341 = vmatpush1.bf16.msra.mxu0 %v332
    %342 = vmatprep.subr.bf16.mxu0 0
    %343 = vmatpush1.bf16.msra.mxu0 0
    %344 = vmatprep.subr.bf16.mxu0 0
    %345 = vmatpush1.bf16.msra.mxu0 0
    %346 = vmatprep.subr.bf16.mxu0 0
    %347 = vmatpush1.bf16.msra.mxu0 0
    %348 = vmatprep.subr.bf16.mxu0 0
    %349 = vmatpush1.bf16.msra.mxu0 0
    %350 = vmatprep.subr.bf16.mxu0 0
    %351 = vmatpush1.bf16.msra.mxu0 0
    %352 = vmatprep.subr.bf16.mxu0 0
    %353 = vmatpush1.bf16.msra.mxu0 0
    %354 = vmatprep.subr.bf16.mxu0 0
    %355 = vmatpush1.bf16.msra.mxu0 0
    %356 = vmatprep.subr.bf16.mxu0 0
    %357 = vmatpush1.bf16.msra.mxu0 0
    %358 = vmatprep.subr.bf16.mxu0 0
    %359 = vmatpush1.bf16.msra.mxu0 0
    %360 = vmatprep.subr.bf16.mxu0 0
    %361 = vmatpush1.bf16.msra.mxu0 0
    %362 = vmatprep.subr.bf16.mxu0 0
    %363 = vmatpush1.bf16.msra.mxu0 0
    %364 = vmatprep.subr.bf16.mxu0 0
    %365 = vmatpush1.bf16.msra.mxu0 0
    %366 = vmatprep.subr.bf16.mxu0 0
    %367 = vmatpush1.bf16.msra.mxu0 0
    %368 = vmatprep.subr.bf16.mxu0 0
    %369 = vmatpush1.bf16.msra.mxu0 0
    %370 = vmatprep.mubr.bf16.mxu0 0
    %371 = vmatmul.mubr.bf16.gmra.mrb[0].mxu0 %v336
    %v372 = vpop.f32.mrb[0].mxu0
    %v373 = vadd.f32 %v321, %v372
    %v374 = vpop.f32.mrb[0].mxu0
    %v375 = vpop.f32.mrb[0].mxu0
    %v376 = vadd.f32 %v321, %v375
    %v377 = vpop.f32.mrb[0].mxu0
    %378 = vdwg.mxu0
    %v379 = vld [vmem:[%s8] sm:$0xf]
    %v380 = vld [vmem:[%s8 + $0x4] sm:$0xf]
    %v381 = vld [vmem:[%s8 + $0x8] sm:$0xf]
    %v382 = vld [vmem:[%s8 + $0xc] sm:$0xf]
    %v383 = vld [vmem:[%s9] sm:$0x1]
    %v385 = vlaneseq
    %v386 = vshrl.u32 %v385, 7
    %v387 = vsub.s32 0, %v386
    %v388 = vrot.slane %v383, %v387
    %v394 = vunpack.c.l.b16 %v379
    %v395 = vunpack.c.l.b16 %v380
    %v396 = vunpack.c.l.b16 %v381
    %v397 = vunpack.c.l.b16 %v382
    %v398 = vpack.c.b16 %v395, %v394
    %v399 = vpack.c.b16 %v397, %v396
    %402 = vmatprep.subr.bf16.mxu0 0
    %403 = vmatpush1.bf16.msra.mxu0 %v398
    %404 = vmatprep.subr.bf16.mxu0 0
    %405 = vmatpush1.bf16.msra.mxu0 %v399
    %406 = vmatprep.subr.bf16.mxu0 0
    %407 = vmatpush1.bf16.msra.mxu0 0
    %408 = vmatprep.subr.bf16.mxu0 0
    %409 = vmatpush1.bf16.msra.mxu0 0
    %410 = vmatprep.subr.bf16.mxu0 0
    %411 = vmatpush1.bf16.msra.mxu0 0
    %412 = vmatprep.subr.bf16.mxu0 0
    %413 = vmatpush1.bf16.msra.mxu0 0
    %414 = vmatprep.subr.bf16.mxu0 0
    %415 = vmatpush1.bf16.msra.mxu0 0
    %416 = vmatprep.subr.bf16.mxu0 0
    %417 = vmatpush1.bf16.msra.mxu0 0
    %418 = vmatprep.subr.bf16.mxu0 0
    %419 = vmatpush1.bf16.msra.mxu0 0
    %420 = vmatprep.subr.bf16.mxu0 0
    %421 = vmatpush1.bf16.msra.mxu0 0
    %422 = vmatprep.subr.bf16.mxu0 0
    %423 = vmatpush1.bf16.msra.mxu0 0
    %424 = vmatprep.subr.bf16.mxu0 0
    %425 = vmatpush1.bf16.msra.mxu0 0
    %426 = vmatprep.subr.bf16.mxu0 0
    %427 = vmatpush1.bf16.msra.mxu0 0
    %428 = vmatprep.subr.bf16.mxu0 0
    %429 = vmatpush1.bf16.msra.mxu0 0
    %430 = vmatprep.subr.bf16.mxu0 0
    %431 = vmatpush1.bf16.msra.mxu0 0
    %432 = vmatprep.subr.bf16.mxu0 0
    %433 = vmatpush1.bf16.msra.mxu0 0
    %434 = vmatprep.mubr.bf16.mxu0 0
    %435 = vmatmul.mubr.bf16.gmra.mrb[0].mxu0 %v336
    %v436 = vpop.f32.mrb[0].mxu0
    %v437 = vadd.f32 %v388, %v436
    %v438 = vpop.f32.mrb[0].mxu0
    %v439 = vpop.f32.mrb[0].mxu0
    %v440 = vadd.f32 %v388, %v439
    %v441 = vpop.f32.mrb[0].mxu0
    %442 = vdwg.mxu0
    %v443 = vld [vmem:[%s10] sm:$0xf]
    %v444 = vld [vmem:[%s10 + $0x4] sm:$0xf]
    %v445 = vld [vmem:[%s10 + $0x8] sm:$0xf]
    %v446 = vld [vmem:[%s10 + $0xc] sm:$0xf]
    %v447 = vld [vmem:[%s11] sm:$0x1]
    %v449 = vlaneseq
    %v450 = vshrl.u32 %v449, 7
    %v451 = vsub.s32 0, %v450
    %v452 = vrot.slane %v447, %v451
    %v458 = vunpack.c.l.b16 %v443
    %v459 = vunpack.c.l.b16 %v444
    %v460 = vunpack.c.l.b16 %v445
    %v461 = vunpack.c.l.b16 %v446
    %v462 = vpack.c.b16 %v459, %v458
    %v463 = vpack.c.b16 %v461, %v460
    %466 = vmatprep.subr.bf16.mxu0 0
    %467 = vmatpush1.bf16.msra.mxu0 %v462
    %468 = vmatprep.subr.bf16.mxu0 0
    %469 = vmatpush1.bf16.msra.mxu0 %v463
    %470 = vmatprep.subr.bf16.mxu0 0
    %471 = vmatpush1.bf16.msra.mxu0 0
    %472 = vmatprep.subr.bf16.mxu0 0
    %473 = vmatpush1.bf16.msra.mxu0 0
    %474 = vmatprep.subr.bf16.mxu0 0
    %475 = vmatpush1.bf16.msra.mxu0 0
    %476 = vmatprep.subr.bf16.mxu0 0
    %477 = vmatpush1.bf16.msra.mxu0 0
    %478 = vmatprep.subr.bf16.mxu0 0
    %479 = vmatpush1.bf16.msra.mxu0 0
    %480 = vmatprep.subr.bf16.mxu0 0
    %481 = vmatpush1.bf16.msra.mxu0 0
    %482 = vmatprep.subr.bf16.mxu0 0
    %483 = vmatpush1.bf16.msra.mxu0 0
    %484 = vmatprep.subr.bf16.mxu0 0
    %485 = vmatpush1.bf16.msra.mxu0 0
    %486 = vmatprep.subr.bf16.mxu0 0
    %487 = vmatpush1.bf16.msra.mxu0 0
    %488 = vmatprep.subr.bf16.mxu0 0
    %489 = vmatpush1.bf16.msra.mxu0 0
    %490 = vmatprep.subr.bf16.mxu0 0
    %491 = vmatpush1.bf16.msra.mxu0 0
    %492 = vmatprep.subr.bf16.mxu0 0
    %493 = vmatpush1.bf16.msra.mxu0 0
    %494 = vmatprep.subr.bf16.mxu0 0
    %495 = vmatpush1.bf16.msra.mxu0 0
    %496 = vmatprep.subr.bf16.mxu0 0
    %497 = vmatpush1.bf16.msra.mxu0 0
    %498 = vmatprep.mubr.bf16.mxu0 0
    %499 = vmatmul.mubr.bf16.gmra.mrb[0].mxu0 %v336
    %v500 = vpop.f32.mrb[0].mxu0
    %v501 = vadd.f32 %v452, %v500
    %v502 = vpop.f32.mrb[0].mxu0
    %v503 = vpop.f32.mrb[0].mxu0
    %v504 = vadd.f32 %v452, %v503
    %v505 = vpop.f32.mrb[0].mxu0
    %506 = vdwg.mxu0
    %v507 = vpack.c.bf16 %v376, %v373
    %v508 = vpack.c.bf16 %v440, %v437
    %vm509 = vcmask 130048
    %v511 = vsel %vm509, %v507, 0
    %v514 = vsel %vm509, %v508, 0
    %516 = vmatprep.subr.bf16.mxu0 0
    %517 = vmatpush1.bf16.xpose.msra.mxu0 %v514
    %518 = vmatprep.subr.bf16.mxu0 0
    %519 = vmatpush1.bf16.xpose.msra.mxu0 0
    %520 = vmatprep.subr.bf16.mxu0 0
    %521 = vmatpush1.bf16.xpose.msra.mxu0 0
    %522 = vmatprep.subr.bf16.mxu0 0
    %523 = vmatpush1.bf16.xpose.msra.mxu0 0
    %524 = vmatprep.subr.bf16.mxu0 0
    %525 = vmatpush1.bf16.xpose.msra.mxu0 0
    %526 = vmatprep.subr.bf16.mxu0 0
    %527 = vmatpush1.bf16.xpose.msra.mxu0 0
    %528 = vmatprep.subr.bf16.mxu0 0
    %529 = vmatpush1.bf16.xpose.msra.mxu0 0
    %530 = vmatprep.subr.bf16.mxu0 0
    %531 = vmatpush1.bf16.xpose.msra.mxu0 0
    %532 = vmatprep.subr.bf16.mxu0 0
    %533 = vmatpush1.bf16.xpose.msra.mxu0 0
    %534 = vmatprep.subr.bf16.mxu0 0
    %535 = vmatpush1.bf16.xpose.msra.mxu0 0
    %536 = vmatprep.subr.bf16.mxu0 0
    %537 = vmatpush1.bf16.xpose.msra.mxu0 0
    %538 = vmatprep.subr.bf16.mxu0 0
    %539 = vmatpush1.bf16.xpose.msra.mxu0 0
    %540 = vmatprep.subr.bf16.mxu0 0
    %541 = vmatpush1.bf16.xpose.msra.mxu0 0
    %542 = vmatprep.subr.bf16.mxu0 0
    %543 = vmatpush1.bf16.xpose.msra.mxu0 0
    %544 = vmatprep.subr.bf16.mxu0 0
    %545 = vmatpush1.bf16.xpose.msra.mxu0 0
    %546 = vmatprep.subr.bf16.mxu0 0
    %547 = vmatpush1.bf16.xpose.msra.mxu0 0
    %548 = vmatprep.mubr.bf16.mxu0 0
    %549 = vmatmul.mubr.bf16.gmra.mrb[0].mxu0 %v511
    %v550 = vpop.f32.mrb[0].mxu0
    %v551 = vadd.f32 %v308, %v550
    %v552 = vpop.f32.mrb[0].mxu0
    %v553 = vpop.f32.mrb[0].mxu0
    %v554 = vadd.f32 %v309, %v553
    %v555 = vpop.f32.mrb[0].mxu0
    %556 = vdwg.mxu0
    %v557 = vsel %vm509, %v551, -inf
    %558 = vmax.xlane.f32.xlu0 %v557
    %v559 = vpop.xlane.xlu0 %558
    %v560 = vsel %vm509, %v554, -inf
    %561 = vmax.xlane.f32.xlu0 %v560
    %v562 = vpop.xlane.xlu0 %561
    %v563 = vsub.f32 %v551, %v559
    %v564 = vsub.f32 %v554, %v562
    %v565 = vmul.f32 %v563, 1.442695
    %v566 = vpow.pop %v565
    %v567 = vmul.f32 %v564, 1.442695
    %v568 = vpow.pop %v567
    %v569 = vsel %vm509, %v566, 0.0
    %570 = vadd.xlane.f32.xlu0 %v569
    %v571 = vpop.xlane.xlu0 %570
    %v572 = vsel %vm509, %v568, 0.0
    %573 = vadd.xlane.f32.xlu0 %v572
    %v574 = vpop.xlane.xlu0 %573
    %v575 = vrcp.pop %v571
    %v576 = vrcp.pop %v574
    %v577 = vmul.f32 %v566, %v575
    %v578 = vmul.f32 %v568, %v576
    %v579 = vpack.c.bf16 %v578, %v577
    %v580 = vpack.c.bf16 %v504, %v501
    %v582 = vsel %vm509, %v579, 0
    %584 = vmatprep.subr.bf16.mxu0 0
    %585 = vmatpush1.bf16.msra.mxu0 %v580
    %586 = vmatprep.subr.bf16.mxu0 0
    %587 = vmatpush1.bf16.msra.mxu0 0
    %588 = vmatprep.subr.bf16.mxu0 0
    %589 = vmatpush1.bf16.msra.mxu0 0
    %590 = vmatprep.subr.bf16.mxu0 0
    %591 = vmatpush1.bf16.msra.mxu0 0
    %592 = vmatprep.subr.bf16.mxu0 0
    %593 = vmatpush1.bf16.msra.mxu0 0
    %594 = vmatprep.subr.bf16.mxu0 0
    %595 = vmatpush1.bf16.msra.mxu0 0
    %596 = vmatprep.subr.bf16.mxu0 0
    %597 = vmatpush1.bf16.msra.mxu0 0
    %598 = vmatprep.subr.bf16.mxu0 0
    %599 = vmatpush1.bf16.msra.mxu0 0
    %600 = vmatprep.subr.bf16.mxu0 0
    %601 = vmatpush1.bf16.msra.mxu0 0
    %602 = vmatprep.subr.bf16.mxu0 0
    %603 = vmatpush1.bf16.msra.mxu0 0
    %604 = vmatprep.subr.bf16.mxu0 0
    %605 = vmatpush1.bf16.msra.mxu0 0
    %606 = vmatprep.subr.bf16.mxu0 0
    %607 = vmatpush1.bf16.msra.mxu0 0
    %608 = vmatprep.subr.bf16.mxu0 0
    %609 = vmatpush1.bf16.msra.mxu0 0
    %610 = vmatprep.subr.bf16.mxu0 0
    %611 = vmatpush1.bf16.msra.mxu0 0
    %612 = vmatprep.subr.bf16.mxu0 0
    %613 = vmatpush1.bf16.msra.mxu0 0
    %614 = vmatprep.subr.bf16.mxu0 0
    %615 = vmatpush1.bf16.msra.mxu0 0
    %616 = vmatprep.mubr.bf16.mxu0 0
    %617 = vmatmul.mubr.bf16.gmra.mrb[0].mxu0 %v582
    %v618 = vpop.f32.mrb[0].mxu0
    %v619 = vadd.f32 0.0, %v618
    %v620 = vpop.f32.mrb[0].mxu0
    %v621 = vpop.f32.mrb[0].mxu0
    %v622 = vadd.f32 0.0, %v621
    %v623 = vpop.f32.mrb[0].mxu0
    %624 = vdwg.mxu0
    %v625 = vpack.c.bf16 %v622, %v619
    %v626 = vld [vmem:[%s12] sm:$0xf]
    %v627 = vld [vmem:[%s12 + $0x4] sm:$0xf]
    %v630 = vunpack.c.l.b16 %v626
    %v631 = vunpack.c.l.b16 %v627
    %v632 = vpack.c.b16 %v631, %v630
    %v635 = vsel %vm509, %v625, 0
    %637 = vmatprep.subr.bf16.mxu0 0
    %638 = vmatpush1.bf16.msra.mxu0 %v632
    %639 = vmatprep.subr.bf16.mxu0 0
    %640 = vmatpush1.bf16.msra.mxu0 0
    %641 = vmatprep.subr.bf16.mxu0 0
    %642 = vmatpush1.bf16.msra.mxu0 0
    %643 = vmatprep.subr.bf16.mxu0 0
    %644 = vmatpush1.bf16.msra.mxu0 0
    %645 = vmatprep.subr.bf16.mxu0 0
    %646 = vmatpush1.bf16.msra.mxu0 0
    %647 = vmatprep.subr.bf16.mxu0 0
    %648 = vmatpush1.bf16.msra.mxu0 0
    %649 = vmatprep.subr.bf16.mxu0 0
    %650 = vmatpush1.bf16.msra.mxu0 0
    %651 = vmatprep.subr.bf16.mxu0 0
    %652 = vmatpush1.bf16.msra.mxu0 0
    %653 = vmatprep.subr.bf16.mxu0 0
    %654 = vmatpush1.bf16.msra.mxu0 0
    %655 = vmatprep.subr.bf16.mxu0 0
    %656 = vmatpush1.bf16.msra.mxu0 0
    %657 = vmatprep.subr.bf16.mxu0 0
    %658 = vmatpush1.bf16.msra.mxu0 0
    %659 = vmatprep.subr.bf16.mxu0 0
    %660 = vmatpush1.bf16.msra.mxu0 0
    %661 = vmatprep.subr.bf16.mxu0 0
    %662 = vmatpush1.bf16.msra.mxu0 0
    %663 = vmatprep.subr.bf16.mxu0 0
    %664 = vmatpush1.bf16.msra.mxu0 0
    %665 = vmatprep.subr.bf16.mxu0 0
    %666 = vmatpush1.bf16.msra.mxu0 0
    %667 = vmatprep.subr.bf16.mxu0 0
    %668 = vmatpush1.bf16.msra.mxu0 0
    %669 = vmatprep.mubr.bf16.mxu0 0
    %670 = vmatmul.mubr.bf16.gmra.mrb[0].mxu0 %v635
    %v671 = vpop.f32.mrb[0].mxu0
    %v672 = vadd.f32 0.0, %v671
    %v673 = vpop.f32.mrb[0].mxu0
    %v674 = vpop.f32.mrb[0].mxu0
    %v675 = vadd.f32 0.0, %v674
    %v676 = vpop.f32.mrb[0].mxu0
    %677 = vdwg.mxu0
    %v679 = vlaneseq
    %v680 = vshrl.u32 %v679, 7
    %v681 = vsub.s32 0, %v680
    %v682 = vrot.slane %v311, %v681
    %v684 = vadd.f32 %v682, %v672
    %v685 = vadd.f32 %v682, %v675
    %s686 = scalar_lea.vmem %s6, 16
    %v687 = vld [vmem:[%s686] sm:$0xf]
    %v688 = vld [vmem:[%s686 + $0x4] sm:$0xf]
    %v689 = vld [vmem:[%s686 + $0x8] sm:$0xf]
    %v690 = vld [vmem:[%s686 + $0xc] sm:$0xf]
    %s691 = scalar_lea.vmem %s7, 1
    %v692 = vld [vmem:[%s691] sm:$0x1]
    %v694 = vlaneseq
    %v695 = vshrl.u32 %v694, 7
    %v696 = vsub.s32 0, %v695
    %v697 = vrot.slane %v692, %v696
    %v703 = vunpack.c.l.b16 %v687
    %v704 = vunpack.c.l.b16 %v688
    %v705 = vunpack.c.l.b16 %v689
    %v706 = vunpack.c.l.b16 %v690
    %v707 = vpack.c.b16 %v704, %v703
    %v708 = vpack.c.b16 %v706, %v705
    %711 = vmatprep.subr.bf16.mxu0 0
    %712 = vmatpush1.bf16.msra.mxu0 %v707
    %713 = vmatprep.subr.bf16.mxu0 0
    %714 = vmatpush1.bf16.msra.mxu0 %v708
    %715 = vmatprep.subr.bf16.mxu0 0
    %716 = vmatpush1.bf16.msra.mxu0 0
    %717 = vmatprep.subr.bf16.mxu0 0
    %718 = vmatpush1.bf16.msra.mxu0 0
    %719 = vmatprep.subr.bf16.mxu0 0
    %720 = vmatpush1.bf16.msra.mxu0 0
    %721 = vmatprep.subr.bf16.mxu0 0
    %722 = vmatpush1.bf16.msra.mxu0 0
    %723 = vmatprep.subr.bf16.mxu0 0
    %724 = vmatpush1.bf16.msra.mxu0 0
    %725 = vmatprep.subr.bf16.mxu0 0
    %726 = vmatpush1.bf16.msra.mxu0 0
    %727 = vmatprep.subr.bf16.mxu0 0
    %728 = vmatpush1.bf16.msra.mxu0 0
    %729 = vmatprep.subr.bf16.mxu0 0
    %730 = vmatpush1.bf16.msra.mxu0 0
    %731 = vmatprep.subr.bf16.mxu0 0
    %732 = vmatpush1.bf16.msra.mxu0 0
    %733 = vmatprep.subr.bf16.mxu0 0
    %734 = vmatpush1.bf16.msra.mxu0 0
    %735 = vmatprep.subr.bf16.mxu0 0
    %736 = vmatpush1.bf16.msra.mxu0 0
    %737 = vmatprep.subr.bf16.mxu0 0
    %738 = vmatpush1.bf16.msra.mxu0 0
    %739 = vmatprep.subr.bf16.mxu0 0
    %740 = vmatpush1.bf16.msra.mxu0 0
    %741 = vmatprep.subr.bf16.mxu0 0
    %742 = vmatpush1.bf16.msra.mxu0 0
    %743 = vmatprep.mubr.bf16.mxu0 0
    %744 = vmatmul.mubr.bf16.gmra.mrb[0].mxu0 %v336
    %v745 = vpop.f32.mrb[0].mxu0
    %v746 = vadd.f32 %v697, %v745
    %v747 = vpop.f32.mrb[0].mxu0
    %v748 = vpop.f32.mrb[0].mxu0
    %v749 = vadd.f32 %v697, %v748
    %v750 = vpop.f32.mrb[0].mxu0
    %751 = vdwg.mxu0
    %s752 = scalar_lea.vmem %s8, 16
    %v753 = vld [vmem:[%s752] sm:$0xf]
    %v754 = vld [vmem:[%s752 + $0x4] sm:$0xf]
    %v755 = vld [vmem:[%s752 + $0x8] sm:$0xf]
    %v756 = vld [vmem:[%s752 + $0xc] sm:$0xf]
    %s757 = scalar_lea.vmem %s9, 1
    %v758 = vld [vmem:[%s757] sm:$0x1]
    %v760 = vlaneseq
    %v761 = vshrl.u32 %v760, 7
    %v762 = vsub.s32 0, %v761
    %v763 = vrot.slane %v758, %v762
    %v769 = vunpack.c.l.b16 %v753
    %v770 = vunpack.c.l.b16 %v754
    %v771 = vunpack.c.l.b16 %v755
    %v772 = vunpack.c.l.b16 %v756
    %v773 = vpack.c.b16 %v770, %v769
    %v774 = vpack.c.b16 %v772, %v771
    %777 = vmatprep.subr.bf16.mxu0 0
    %778 = vmatpush1.bf16.msra.mxu0 %v773
    %779 = vmatprep.subr.bf16.mxu0 0
    %780 = vmatpush1.bf16.msra.mxu0 %v774
    %781 = vmatprep.subr.bf16.mxu0 0
    %782 = vmatpush1.bf16.msra.mxu0 0
    %783 = vmatprep.subr.bf16.mxu0 0
    %784 = vmatpush1.bf16.msra.mxu0 0
    %785 = vmatprep.subr.bf16.mxu0 0
    %786 = vmatpush1.bf16.msra.mxu0 0
    %787 = vmatprep.subr.bf16.mxu0 0
    %788 = vmatpush1.bf16.msra.mxu0 0
    %789 = vmatprep.subr.bf16.mxu0 0
    %790 = vmatpush1.bf16.msra.mxu0 0
    %791 = vmatprep.subr.bf16.mxu0 0
    %792 = vmatpush1.bf16.msra.mxu0 0
    %793 = vmatprep.subr.bf16.mxu0 0
    %794 = vmatpush1.bf16.msra.mxu0 0
    %795 = vmatprep.subr.bf16.mxu0 0
    %796 = vmatpush1.bf16.msra.mxu0 0
    %797 = vmatprep.subr.bf16.mxu0 0
    %798 = vmatpush1.bf16.msra.mxu0 0
    %799 = vmatprep.subr.bf16.mxu0 0
    %800 = vmatpush1.bf16.msra.mxu0 0
    %801 = vmatprep.subr.bf16.mxu0 0
    %802 = vmatpush1.bf16.msra.mxu0 0
    %803 = vmatprep.subr.bf16.mxu0 0
    %804 = vmatpush1.bf16.msra.mxu0 0
    %805 = vmatprep.subr.bf16.mxu0 0
    %806 = vmatpush1.bf16.msra.mxu0 0
    %807 = vmatprep.subr.bf16.mxu0 0
    %808 = vmatpush1.bf16.msra.mxu0 0
    %809 = vmatprep.mubr.bf16.mxu0 0
    %810 = vmatmul.mubr.bf16.gmra.mrb[0].mxu0 %v336
    %v811 = vpop.f32.mrb[0].mxu0
    %v812 = vadd.f32 %v763, %v811
    %v813 = vpop.f32.mrb[0].mxu0
    %v814 = vpop.f32.mrb[0].mxu0
    %v815 = vadd.f32 %v763, %v814
    %v816 = vpop.f32.mrb[0].mxu0
    %817 = vdwg.mxu0
    %s818 = scalar_lea.vmem %s10, 16
    %v819 = vld [vmem:[%s818] sm:$0xf]
    %v820 = vld [vmem:[%s818 + $0x4] sm:$0xf]
    %v821 = vld [vmem:[%s818 + $0x8] sm:$0xf]
    %v822 = vld [vmem:[%s818 + $0xc] sm:$0xf]
    %s823 = scalar_lea.vmem %s11, 1
    %v824 = vld [vmem:[%s823] sm:$0x1]
    %v826 = vlaneseq
    %v827 = vshrl.u32 %v826, 7
    %v828 = vsub.s32 0, %v827
    %v829 = vrot.slane %v824, %v828
    %v835 = vunpack.c.l.b16 %v819
    %v836 = vunpack.c.l.b16 %v820
    %v837 = vunpack.c.l.b16 %v821
    %v838 = vunpack.c.l.b16 %v822
    %v839 = vpack.c.b16 %v836, %v835
    %v840 = vpack.c.b16 %v838, %v837
    %843 = vmatprep.subr.bf16.mxu0 0
    %844 = vmatpush1.bf16.msra.mxu0 %v839
    %845 = vmatprep.subr.bf16.mxu0 0
    %846 = vmatpush1.bf16.msra.mxu0 %v840
    %847 = vmatprep.subr.bf16.mxu0 0
    %848 = vmatpush1.bf16.msra.mxu0 0
    %849 = vmatprep.subr.bf16.mxu0 0
    %850 = vmatpush1.bf16.msra.mxu0 0
    %851 = vmatprep.subr.bf16.mxu0 0
    %852 = vmatpush1.bf16.msra.mxu0 0
    %853 = vmatprep.subr.bf16.mxu0 0
    %854 = vmatpush1.bf16.msra.mxu0 0
    %855 = vmatprep.subr.bf16.mxu0 0
    %856 = vmatpush1.bf16.msra.mxu0 0
    %857 = vmatprep.subr.bf16.mxu0 0
    %858 = vmatpush1.bf16.msra.mxu0 0
    %859 = vmatprep.subr.bf16.mxu0 0
    %860 = vmatpush1.bf16.msra.mxu0 0
    %861 = vmatprep.subr.bf16.mxu0 0
    %862 = vmatpush1.bf16.msra.mxu0 0
    %863 = vmatprep.subr.bf16.mxu0 0
    %864 = vmatpush1.bf16.msra.mxu0 0
    %865 = vmatprep.subr.bf16.mxu0 0
    %866 = vmatpush1.bf16.msra.mxu0 0
    %867 = vmatprep.subr.bf16.mxu0 0
    %868 = vmatpush1.bf16.msra.mxu0 0
    %869 = vmatprep.subr.bf16.mxu0 0
    %870 = vmatpush1.bf16.msra.mxu0 0
    %871 = vmatprep.subr.bf16.mxu0 0
    %872 = vmatpush1.bf16.msra.mxu0 0
    %873 = vmatprep.subr.bf16.mxu0 0
    %874 = vmatpush1.bf16.msra.mxu0 0
    %875 = vmatprep.mubr.bf16.mxu0 0
    %876 = vmatmul.mubr.bf16.gmra.mrb[0].mxu0 %v336
    %v877 = vpop.f32.mrb[0].mxu0
    %v878 = vadd.f32 %v829, %v877
    %v879 = vpop.f32.mrb[0].mxu0
    %v880 = vpop.f32.mrb[0].mxu0
    %v881 = vadd.f32 %v829, %v880
    %v882 = vpop.f32.mrb[0].mxu0
    %883 = vdwg.mxu0
    %v884 = vpack.c.bf16 %v749, %v746
    %v885 = vpack.c.bf16 %v815, %v812
    %v887 = vsel %vm509, %v884, 0
    %v890 = vsel %vm509, %v885, 0
    %892 = vmatprep.subr.bf16.mxu0 0
    %893 = vmatpush1.bf16.xpose.msra.mxu0 %v890
    %894 = vmatprep.subr.bf16.mxu0 0
    %895 = vmatpush1.bf16.xpose.msra.mxu0 0
    %896 = vmatprep.subr.bf16.mxu0 0
    %897 = vmatpush1.bf16.xpose.msra.mxu0 0
    %898 = vmatprep.subr.bf16.mxu0 0
    %899 = vmatpush1.bf16.xpose.msra.mxu0 0
    %900 = vmatprep.subr.bf16.mxu0 0
    %901 = vmatpush1.bf16.xpose.msra.mxu0 0
    %902 = vmatprep.subr.bf16.mxu0 0
    %903 = vmatpush1.bf16.xpose.msra.mxu0 0
    %904 = vmatprep.subr.bf16.mxu0 0
    %905 = vmatpush1.bf16.xpose.msra.mxu0 0
    %906 = vmatprep.subr.bf16.mxu0 0
    %907 = vmatpush1.bf16.xpose.msra.mxu0 0
    %908 = vmatprep.subr.bf16.mxu0 0
    %909 = vmatpush1.bf16.xpose.msra.mxu0 0
    %910 = vmatprep.subr.bf16.mxu0 0
    %911 = vmatpush1.bf16.xpose.msra.mxu0 0
    %912 = vmatprep.subr.bf16.mxu0 0
    %913 = vmatpush1.bf16.xpose.msra.mxu0 0
    %914 = vmatprep.subr.bf16.mxu0 0
    %915 = vmatpush1.bf16.xpose.msra.mxu0 0
    %916 = vmatprep.subr.bf16.mxu0 0
    %917 = vmatpush1.bf16.xpose.msra.mxu0 0
    %918 = vmatprep.subr.bf16.mxu0 0
    %919 = vmatpush1.bf16.xpose.msra.mxu0 0
    %920 = vmatprep.subr.bf16.mxu0 0
    %921 = vmatpush1.bf16.xpose.msra.mxu0 0
    %922 = vmatprep.subr.bf16.mxu0 0
    %923 = vmatpush1.bf16.xpose.msra.mxu0 0
    %924 = vmatprep.mubr.bf16.mxu0 0
    %925 = vmatmul.mubr.bf16.gmra.mrb[0].mxu0 %v887
    %v926 = vpop.f32.mrb[0].mxu0
    %v927 = vadd.f32 %v308, %v926
    %v928 = vpop.f32.mrb[0].mxu0
    %v929 = vpop.f32.mrb[0].mxu0
    %v930 = vadd.f32 %v309, %v929
    %v931 = vpop.f32.mrb[0].mxu0
    %932 = vdwg.mxu0
    %v933 = vsel %vm509, %v927, -inf
    %934 = vmax.xlane.f32.xlu0 %v933
    %v935 = vpop.xlane.xlu0 %934
    %v936 = vsel %vm509, %v930, -inf
    %937 = vmax.xlane.f32.xlu0 %v936
    %v938 = vpop.xlane.xlu0 %937
    %v939 = vsub.f32 %v927, %v935
    %v940 = vsub.f32 %v930, %v938
    %v941 = vmul.f32 %v939, 1.442695
    %v942 = vpow.pop %v941
    %v943 = vmul.f32 %v940, 1.442695
    %v944 = vpow.pop %v943
    %v945 = vsel %vm509, %v942, 0.0
    %946 = vadd.xlane.f32.xlu0 %v945
    %v947 = vpop.xlane.xlu0 %946
    %v948 = vsel %vm509, %v944, 0.0
    %949 = vadd.xlane.f32.xlu0 %v948
    %v950 = vpop.xlane.xlu0 %949
    %v951 = vrcp.pop %v947
    %v952 = vrcp.pop %v950
    %v953 = vmul.f32 %v942, %v951
    %v954 = vmul.f32 %v944, %v952
    %v955 = vpack.c.bf16 %v954, %v953
    %v956 = vpack.c.bf16 %v881, %v878
    %v958 = vsel %vm509, %v955, 0
    %960 = vmatprep.subr.bf16.mxu0 0
    %961 = vmatpush1.bf16.msra.mxu0 %v956
    %962 = vmatprep.subr.bf16.mxu0 0
    %963 = vmatpush1.bf16.msra.mxu0 0
    %964 = vmatprep.subr.bf16.mxu0 0
    %965 = vmatpush1.bf16.msra.mxu0 0
    %966 = vmatprep.subr.bf16.mxu0 0
    %967 = vmatpush1.bf16.msra.mxu0 0
    %968 = vmatprep.subr.bf16.mxu0 0
    %969 = vmatpush1.bf16.msra.mxu0 0
    %970 = vmatprep.subr.bf16.mxu0 0
    %971 = vmatpush1.bf16.msra.mxu0 0
    %972 = vmatprep.subr.bf16.mxu0 0
    %973 = vmatpush1.bf16.msra.mxu0 0
    %974 = vmatprep.subr.bf16.mxu0 0
    %975 = vmatpush1.bf16.msra.mxu0 0
    %976 = vmatprep.subr.bf16.mxu0 0
    %977 = vmatpush1.bf16.msra.mxu0 0
    %978 = vmatprep.subr.bf16.mxu0 0
    %979 = vmatpush1.bf16.msra.mxu0 0
    %980 = vmatprep.subr.bf16.mxu0 0
    %981 = vmatpush1.bf16.msra.mxu0 0
    %982 = vmatprep.subr.bf16.mxu0 0
    %983 = vmatpush1.bf16.msra.mxu0 0
    %984 = vmatprep.subr.bf16.mxu0 0
    %985 = vmatpush1.bf16.msra.mxu0 0
    %986 = vmatprep.subr.bf16.mxu0 0
    %987 = vmatpush1.bf16.msra.mxu0 0
    %988 = vmatprep.subr.bf16.mxu0 0
    %989 = vmatpush1.bf16.msra.mxu0 0
    %990 = vmatprep.subr.bf16.mxu0 0
    %991 = vmatpush1.bf16.msra.mxu0 0
    %992 = vmatprep.mubr.bf16.mxu0 0
    %993 = vmatmul.mubr.bf16.gmra.mrb[0].mxu0 %v958
    %v994 = vpop.f32.mrb[0].mxu0
    %v995 = vadd.f32 0.0, %v994
    %v996 = vpop.f32.mrb[0].mxu0
    %v997 = vpop.f32.mrb[0].mxu0
    %v998 = vadd.f32 0.0, %v997
    %v999 = vpop.f32.mrb[0].mxu0
    %1000 = vdwg.mxu0
    %v1001 = vpack.c.bf16 %v998, %v995
    %s1002 = scalar_lea.vmem %s12, 8
    %v1003 = vld [vmem:[%s1002] sm:$0xf]
    %v1004 = vld [vmem:[%s1002 + $0x4] sm:$0xf]
    %v1007 = vunpack.c.l.b16 %v1003
    %v1008 = vunpack.c.l.b16 %v1004
    %v1009 = vpack.c.b16 %v1008, %v1007
    %v1012 = vsel %vm509, %v1001, 0
    %1014 = vmatprep.subr.bf16.mxu0 0
    %1015 = vmatpush1.bf16.msra.mxu0 %v1009
    %1016 = vmatprep.subr.bf16.mxu0 0
    %1017 = vmatpush1.bf16.msra.mxu0 0
    %1018 = vmatprep.subr.bf16.mxu0 0
    %1019 = vmatpush1.bf16.msra.mxu0 0
    %1020 = vmatprep.subr.bf16.mxu0 0
    %1021 = vmatpush1.bf16.msra.mxu0 0
    %1022 = vmatprep.subr.bf16.mxu0 0
    %1023 = vmatpush1.bf16.msra.mxu0 0
    %1024 = vmatprep.subr.bf16.mxu0 0
    %1025 = vmatpush1.bf16.msra.mxu0 0
    %1026 = vmatprep.subr.bf16.mxu0 0
    %1027 = vmatpush1.bf16.msra.mxu0 0
    %1028 = vmatprep.subr.bf16.mxu0 0
    %1029 = vmatpush1.bf16.msra.mxu0 0
    %1030 = vmatprep.subr.bf16.mxu0 0
    %1031 = vmatpush1.bf16.msra.mxu0 0
    %1032 = vmatprep.subr.bf16.mxu0 0
    %1033 = vmatpush1.bf16.msra.mxu0 0
    %1034 = vmatprep.subr.bf16.mxu0 0
    %1035 = vmatpush1.bf16.msra.mxu0 0
    %1036 = vmatprep.subr.bf16.mxu0 0
    %1037 = vmatpush1.bf16.msra.mxu0 0
    %1038 = vmatprep.subr.bf16.mxu0 0
    %1039 = vmatpush1.bf16.msra.mxu0 0
    %1040 = vmatprep.subr.bf16.mxu0 0
    %1041 = vmatpush1.bf16.msra.mxu0 0
    %1042 = vmatprep.subr.bf16.mxu0 0
    %1043 = vmatpush1.bf16.msra.mxu0 0
    %1044 = vmatprep.subr.bf16.mxu0 0
    %1045 = vmatpush1.bf16.msra.mxu0 0
    %1046 = vmatprep.mubr.bf16.mxu0 0
    %1047 = vmatmul.mubr.bf16.gmra.mrb[0].mxu0 %v1012
    %v1048 = vpop.f32.mrb[0].mxu0
    %v1049 = vadd.f32 0.0, %v1048
    %v1050 = vpop.f32.mrb[0].mxu0
    %v1051 = vpop.f32.mrb[0].mxu0
    %v1052 = vadd.f32 0.0, %v1051
    %v1053 = vpop.f32.mrb[0].mxu0
    %1054 = vdwg.mxu0
    %v1055 = vadd.f32 %v684, %v1049
    %v1056 = vadd.f32 %v685, %v1052
    %v1057 = vadd.f32 %v306, %v1055
    %v1058 = vadd.f32 %v307, %v1056
    %v1059 = vld [vmem:[%s14] sm:$0x1]
    %v1060 = vld [vmem:[%s15] sm:$0x1]
    %v1061 = vsel %vm264, %v1057, 0.0
    %1062 = vadd.xlane.f32.xlu0 %v1061
    %v1063 = vpop.xlane.xlu0 %1062
    %v1064 = vsel %vm264, %v1058, 0.0
    %1065 = vadd.xlane.f32.xlu0 %v1064
    %v1066 = vpop.xlane.xlu0 %1065
    %v1067 = vmul.f32 %v1063, %v271
    %v1068 = vmul.f32 %v1066, %v271
    %v1069 = vsub.f32 %v1057, %v1067
    %v1070 = vsub.f32 %v1058, %v1068
    %v1071 = vmul.f32 %v1069, %v1069
    %v1072 = vmul.f32 %v1070, %v1070
    %v1073 = vsel %vm264, %v1071, 0.0
    %1074 = vadd.xlane.f32.xlu0 %v1073
    %v1075 = vpop.xlane.xlu0 %1074
    %v1076 = vsel %vm264, %v1072, 0.0
    %1077 = vadd.xlane.f32.xlu0 %v1076
    %v1078 = vpop.xlane.xlu0 %1077
    %v1079 = vmul.f32 %v1075, %v271
    %v1080 = vmul.f32 %v1078, %v271
    %v1081 = vadd.f32 %v1079, 1e-12
    %v1082 = vadd.f32 %v1080, 1e-12
    %v1083 = vrsqrt.pop %v1081
    %v1084 = vrsqrt.pop %v1082
    %v1085 = vmul.f32 %v1069, %v1083
    %v1086 = vmul.f32 %v1070, %v1084
    %v1088 = vlaneseq
    %v1089 = vshrl.u32 %v1088, 7
    %v1090 = vsub.s32 0, %v1089
    %v1091 = vrot.slane %v1059, %v1090
    %v1093 = vmul.f32 %v1085, %v1091
    %v1094 = vmul.f32 %v1086, %v1091
    %v1096 = vlaneseq
    %v1097 = vshrl.u32 %v1096, 7
    %v1098 = vsub.s32 0, %v1097
    %v1099 = vrot.slane %v1060, %v1098
    %v1101 = vadd.f32 %v1093, %v1099
    %v1102 = vadd.f32 %v1094, %v1099
    %v1103 = vpack.c.bf16 %v1102, %v1101
    %v1104 = vld [vmem:[%s16] sm:$0xf]
    %v1105 = vld [vmem:[%s16 + $0x4] sm:$0xf]
    %v1106 = vld [vmem:[%s16 + $0x8] sm:$0xf]
    %v1107 = vld [vmem:[%s16 + $0xc] sm:$0xf]
    %v1108 = vld [vmem:[%s17] sm:$0x1]
    %v1110 = vlaneseq
    %v1111 = vshrl.u32 %v1110, 7
    %v1112 = vsub.s32 0, %v1111
    %v1113 = vrot.slane %v1108, %v1112
    %v1119 = vunpack.c.l.b16 %v1104
    %v1120 = vunpack.c.l.b16 %v1105
    %v1121 = vunpack.c.l.b16 %v1106
    %v1122 = vunpack.c.l.b16 %v1107
    %v1123 = vpack.c.b16 %v1120, %v1119
    %v1124 = vpack.c.b16 %v1122, %v1121
    %v1128 = vsel %vm264, %v1103, 0
    %1130 = vmatprep.subr.bf16.mxu0 0
    %1131 = vmatpush1.bf16.msra.mxu0 %v1123
    %1132 = vmatprep.subr.bf16.mxu0 0
    %1133 = vmatpush1.bf16.msra.mxu0 %v1124
    %1134 = vmatprep.subr.bf16.mxu0 0
    %1135 = vmatpush1.bf16.msra.mxu0 0
    %1136 = vmatprep.subr.bf16.mxu0 0
    %1137 = vmatpush1.bf16.msra.mxu0 0
    %1138 = vmatprep.subr.bf16.mxu0 0
    %1139 = vmatpush1.bf16.msra.mxu0 0
    %1140 = vmatprep.subr.bf16.mxu0 0
    %1141 = vmatpush1.bf16.msra.mxu0 0
    %1142 = vmatprep.subr.bf16.mxu0 0
    %1143 = vmatpush1.bf16.msra.mxu0 0
    %1144 = vmatprep.subr.bf16.mxu0 0
    %1145 = vmatpush1.bf16.msra.mxu0 0
    %1146 = vmatprep.subr.bf16.mxu0 0
    %1147 = vmatpush1.bf16.msra.mxu0 0
    %1148 = vmatprep.subr.bf16.mxu0 0
    %1149 = vmatpush1.bf16.msra.mxu0 0
    %1150 = vmatprep.subr.bf16.mxu0 0
    %1151 = vmatpush1.bf16.msra.mxu0 0
    %1152 = vmatprep.subr.bf16.mxu0 0
    %1153 = vmatpush1.bf16.msra.mxu0 0
    %1154 = vmatprep.subr.bf16.mxu0 0
    %1155 = vmatpush1.bf16.msra.mxu0 0
    %1156 = vmatprep.subr.bf16.mxu0 0
    %1157 = vmatpush1.bf16.msra.mxu0 0
    %1158 = vmatprep.subr.bf16.mxu0 0
    %1159 = vmatpush1.bf16.msra.mxu0 0
    %1160 = vmatprep.subr.bf16.mxu0 0
    %1161 = vmatpush1.bf16.msra.mxu0 0
    %1162 = vmatprep.mubr.bf16.mxu0 0
    %1163 = vmatmul.mubr.bf16.gmra.mrb[0].mxu0 %v1128
    %v1164 = vpop.f32.mrb[0].mxu0
    %v1165 = vadd.f32 %v1113, %v1164
    %v1166 = vpop.f32.mrb[0].mxu0
    %v1167 = vpop.f32.mrb[0].mxu0
    %v1168 = vadd.f32 %v1113, %v1167
    %v1169 = vpop.f32.mrb[0].mxu0
    %1170 = vdwg.mxu0
    %v1171 = vmul.f32 %v1165, 0.5
    %v1172 = vmul.f32 %v1168, 0.5
    %v1173 = vmul.f32 %v1165, 0.044715
    %v1174 = vmul.f32 %v1168, 0.044715
    %v1175 = vmul.f32 %v1173, %v1165
    %v1176 = vmul.f32 %v1174, %v1168
    %v1177 = vmul.f32 %v1175, %v1165
    %v1178 = vmul.f32 %v1176, %v1168
    %v1179 = vadd.f32 %v1165, %v1177
    %v1180 = vadd.f32 %v1168, %v1178
    %v1181 = vmul.f32 %v1179, 0.7978846
    %v1182 = vmul.f32 %v1180, 0.7978846
    %v1183 = vtanh.pop %v1181
    %v1184 = vtanh.pop %v1182
    %v1185 = vadd.f32 %v1183, 1.0
    %v1186 = vadd.f32 %v1184, 1.0
    %v1187 = vmul.f32 %v1171, %v1185
    %v1188 = vmul.f32 %v1172, %v1186
    %v1189 = vpack.c.bf16 %v1188, %v1187
    %v1190 = vld [vmem:[%s18] sm:$0xf]
    %v1191 = vld [vmem:[%s18 + $0x4] sm:$0xf]
    %v1192 = vld [vmem:[%s18 + $0x8] sm:$0xf]
    %v1193 = vld [vmem:[%s18 + $0xc] sm:$0xf]
    %v1194 = vld [vmem:[%s18 + $0x10] sm:$0xf]
    %v1195 = vld [vmem:[%s18 + $0x14] sm:$0xf]
    %v1196 = vld [vmem:[%s18 + $0x18] sm:$0xf]
    %v1197 = vld [vmem:[%s18 + $0x1c] sm:$0xf]
    %v1198 = vld [vmem:[%s19] sm:$0x1]
    %v1200 = vlaneseq
    %v1201 = vshrl.u32 %v1200, 7
    %v1202 = vsub.s32 0, %v1201
    %v1203 = vrot.slane %v1198, %v1202
    %v1213 = vunpack.c.l.b16 %v1190
    %v1214 = vunpack.c.l.b16 %v1191
    %v1215 = vunpack.c.l.b16 %v1192
    %v1216 = vunpack.c.l.b16 %v1193
    %v1217 = vunpack.c.l.b16 %v1194
    %v1218 = vunpack.c.l.b16 %v1195
    %v1219 = vunpack.c.l.b16 %v1196
    %v1220 = vunpack.c.l.b16 %v1197
    %v1221 = vpack.c.b16 %v1214, %v1213
    %v1222 = vpack.c.b16 %v1216, %v1215
    %v1223 = vpack.c.b16 %v1218, %v1217
    %v1224 = vpack.c.b16 %v1220, %v1219
    %vm1229 = vcmask 523264
    %v1231 = vsel %vm1229, %v1189, 0
    %1233 = vmatprep.subr.bf16.mxu0 0
    %1234 = vmatpush1.bf16.msra.mxu0 %v1221
    %1235 = vmatprep.subr.bf16.mxu0 0
    %1236 = vmatpush1.bf16.msra.mxu0 %v1222
    %1237 = vmatprep.subr.bf16.mxu0 0
    %1238 = vmatpush1.bf16.msra.mxu0 %v1223
    %1239 = vmatprep.subr.bf16.mxu0 0
    %1240 = vmatpush1.bf16.msra.mxu0 %v1224
    %1241 = vmatprep.subr.bf16.mxu0 0
    %1242 = vmatpush1.bf16.msra.mxu0 0
    %1243 = vmatprep.subr.bf16.mxu0 0
    %1244 = vmatpush1.bf16.msra.mxu0 0
    %1245 = vmatprep.subr.bf16.mxu0 0
    %1246 = vmatpush1.bf16.msra.mxu0 0
    %1247 = vmatprep.subr.bf16.mxu0 0
    %1248 = vmatpush1.bf16.msra.mxu0 0
    %1249 = vmatprep.subr.bf16.mxu0 0
    %1250 = vmatpush1.bf16.msra.mxu0 0
    %1251 = vmatprep.subr.bf16.mxu0 0
    %1252 = vmatpush1.bf16.msra.mxu0 0
    %1253 = vmatprep.subr.bf16.mxu0 0
    %1254 = vmatpush1.bf16.msra.mxu0 0
    %1255 = vmatprep.subr.bf16.mxu0 0
    %1256 = vmatpush1.bf16.msra.mxu0 0
    %1257 = vmatprep.subr.bf16.mxu0 0
    %1258 = vmatpush1.bf16.msra.mxu0 0
    %1259 = vmatprep.subr.bf16.mxu0 0
    %1260 = vmatpush1.bf16.msra.mxu0 0
    %1261 = vmatprep.subr.bf16.mxu0 0
    %1262 = vmatpush1.bf16.msra.mxu0 0
    %1263 = vmatprep.subr.bf16.mxu0 0
    %1264 = vmatpush1.bf16.msra.mxu0 0
    %1265 = vmatprep.mubr.bf16.mxu0 0
    %1266 = vmatmul.mubr.bf16.gmra.mrb[0].mxu0 %v1231
    %v1267 = vpop.f32.mrb[0].mxu0
    %v1268 = vadd.f32 %v1203, %v1267
    %v1269 = vpop.f32.mrb[0].mxu0
    %v1270 = vpop.f32.mrb[0].mxu0
    %v1271 = vadd.f32 %v1203, %v1270
    %v1272 = vpop.f32.mrb[0].mxu0
    %1273 = vdwg.mxu0
    %v1274 = vadd.f32 %v1101, %v1268
    %v1275 = vadd.f32 %v1102, %v1271
    %v1276 = vld [vmem:[%s20] sm:$0x1]
    %v1277 = vld [vmem:[%s21] sm:$0x1]
    %v1278 = vsel %vm264, %v1274, 0.0
    %1279 = vadd.xlane.f32.xlu0 %v1278
    %v1280 = vpop.xlane.xlu0 %1279
    %v1281 = vsel %vm264, %v1275, 0.0
    %1282 = vadd.xlane.f32.xlu0 %v1281
    %v1283 = vpop.xlane.xlu0 %1282
    %v1284 = vmul.f32 %v1280, %v271
    %v1285 = vmul.f32 %v1283, %v271
    %v1286 = vsub.f32 %v1274, %v1284
    %v1287 = vsub.f32 %v1275, %v1285
    %v1288 = vmul.f32 %v1286, %v1286
    %v1289 = vmul.f32 %v1287, %v1287
    %v1290 = vsel %vm264, %v1288, 0.0
    %1291 = vadd.xlane.f32.xlu0 %v1290
    %v1292 = vpop.xlane.xlu0 %1291
    %v1293 = vsel %vm264, %v1289, 0.0
    %1294 = vadd.xlane.f32.xlu0 %v1293
    %v1295 = vpop.xlane.xlu0 %1294
    %v1296 = vmul.f32 %v1292, %v271
    %v1297 = vmul.f32 %v1295, %v271
    %v1298 = vadd.f32 %v1296, 1e-12
    %v1299 = vadd.f32 %v1297, 1e-12
    %v1300 = vrsqrt.pop %v1298
    %v1301 = vrsqrt.pop %v1299
    %v1302 = vmul.f32 %v1286, %v1300
    %v1303 = vmul.f32 %v1287, %v1301
    %v1305 = vlaneseq
    %v1306 = vshrl.u32 %v1305, 7
    %v1307 = vsub.s32 0, %v1306
    %v1308 = vrot.slane %v1276, %v1307
    %v1310 = vmul.f32 %v1302, %v1308
    %v1311 = vmul.f32 %v1303, %v1308
    %v1313 = vlaneseq
    %v1314 = vshrl.u32 %v1313, 7
    %v1315 = vsub.s32 0, %v1314
    %v1316 = vrot.slane %v1277, %v1315
    %v1318 = vadd.f32 %v1310, %v1316
    %v1319 = vadd.f32 %v1311, %v1316
    %v1320 = vpack.c.bf16 %v1319, %v1318
    %s1321 = scalar_lea.vmem %s13, 1
    %v1322 = vld [vmem:[%s1321] sm:$0x1]
    %s1323 = scalar_lea.vmem %s6, 32
    %v1324 = vld [vmem:[%s1323] sm:$0xf]
    %v1325 = vld [vmem:[%s1323 + $0x4] sm:$0xf]
    %v1326 = vld [vmem:[%s1323 + $0x8] sm:$0xf]
    %v1327 = vld [vmem:[%s1323 + $0xc] sm:$0xf]
    %s1328 = scalar_lea.vmem %s7, 2
    %v1329 = vld [vmem:[%s1328] sm:$0x1]
    %v1331 = vlaneseq
    %v1332 = vshrl.u32 %v1331, 7
    %v1333 = vsub.s32 0, %v1332
    %v1334 = vrot.slane %v1329, %v1333
    %v1340 = vunpack.c.l.b16 %v1324
    %v1341 = vunpack.c.l.b16 %v1325
    %v1342 = vunpack.c.l.b16 %v1326
    %v1343 = vunpack.c.l.b16 %v1327
    %v1344 = vpack.c.b16 %v1341, %v1340
    %v1345 = vpack.c.b16 %v1343, %v1342
    %v1349 = vsel %vm264, %v1320, 0
    %1351 = vmatprep.subr.bf16.mxu0 0
    %1352 = vmatpush1.bf16.msra.mxu0 %v1344
    %1353 = vmatprep.subr.bf16.mxu0 0
    %1354 = vmatpush1.bf16.msra.mxu0 %v1345
    %1355 = vmatprep.subr.bf16.mxu0 0
    %1356 = vmatpush1.bf16.msra.mxu0 0
    %1357 = vmatprep.subr.bf16.mxu0 0
    %1358 = vmatpush1.bf16.msra.mxu0 0
    %1359 = vmatprep.subr.bf16.mxu0 0
    %1360 = vmatpush1.bf16.msra.mxu0 0
    %1361 = vmatprep.subr.bf16.mxu0 0
    %1362 = vmatpush1.bf16.msra.mxu0 0
    %1363 = vmatprep.subr.bf16.mxu0 0
    %1364 = vmatpush1.bf16.msra.mxu0 0
    %1365 = vmatprep.subr.bf16.mxu0 0
    %1366 = vmatpush1.bf16.msra.mxu0 0
    %1367 = vmatprep.subr.bf16.mxu0 0
    %1368 = vmatpush1.bf16.msra.mxu0 0
    %1369 = vmatprep.subr.bf16.mxu0 0
    %1370 = vmatpush1.bf16.msra.mxu0 0
    %1371 = vmatprep.subr.bf16.mxu0 0
    %1372 = vmatpush1.bf16.msra.mxu0 0
    %1373 = vmatprep.subr.bf16.mxu0 0
    %1374 = vmatpush1.bf16.msra.mxu0 0
    %1375 = vmatprep.subr.bf16.mxu0 0
    %1376 = vmatpush1.bf16.msra.mxu0 0
    %1377 = vmatprep.subr.bf16.mxu0 0
    %1378 = vmatpush1.bf16.msra.mxu0 0
    %1379 = vmatprep.subr.bf16.mxu0 0
    %1380 = vmatpush1.bf16.msra.mxu0 0
    %1381 = vmatprep.subr.bf16.mxu0 0
    %1382 = vmatpush1.bf16.msra.mxu0 0
    %1383 = vmatprep.mubr.bf16.mxu0 0
    %1384 = vmatmul.mubr.bf16.gmra.mrb[0].mxu0 %v1349
    %v1385 = vpop.f32.mrb[0].mxu0
    %v1386 = vadd.f32 %v1334, %v1385
    %v1387 = vpop.f32.mrb[0].mxu0
    %v1388 = vpop.f32.mrb[0].mxu0
    %v1389 = vadd.f32 %v1334, %v1388
    %v1390 = vpop.f32.mrb[0].mxu0
    %1391 = vdwg.mxu0
    %s1392 = scalar_lea.vmem %s8, 32
    %v1393 = vld [vmem:[%s1392] sm:$0xf]
    %v1394 = vld [vmem:[%s1392 + $0x4] sm:$0xf]
    %v1395 = vld [vmem:[%s1392 + $0x8] sm:$0xf]
    %v1396 = vld [vmem:[%s1392 + $0xc] sm:$0xf]
    %s1397 = scalar_lea.vmem %s9, 2
    %v1398 = vld [vmem:[%s1397] sm:$0x1]
    %v1400 = vlaneseq
    %v1401 = vshrl.u32 %v1400, 7
    %v1402 = vsub.s32 0, %v1401
    %v1403 = vrot.slane %v1398, %v1402
    %v1409 = vunpack.c.l.b16 %v1393
    %v1410 = vunpack.c.l.b16 %v1394
    %v1411 = vunpack.c.l.b16 %v1395
    %v1412 = vunpack.c.l.b16 %v1396
    %v1413 = vpack.c.b16 %v1410, %v1409
    %v1414 = vpack.c.b16 %v1412, %v1411
    %1417 = vmatprep.subr.bf16.mxu0 0
    %1418 = vmatpush1.bf16.msra.mxu0 %v1413
    %1419 = vmatprep.subr.bf16.mxu0 0
    %1420 = vmatpush1.bf16.msra.mxu0 %v1414
    %1421 = vmatprep.subr.bf16.mxu0 0
    %1422 = vmatpush1.bf16.msra.mxu0 0
    %1423 = vmatprep.subr.bf16.mxu0 0
    %1424 = vmatpush1.bf16.msra.mxu0 0
    %1425 = vmatprep.subr.bf16.mxu0 0
    %1426 = vmatpush1.bf16.msra.mxu0 0
    %1427 = vmatprep.subr.bf16.mxu0 0
    %1428 = vmatpush1.bf16.msra.mxu0 0
    %1429 = vmatprep.subr.bf16.mxu0 0
    %1430 = vmatpush1.bf16.msra.mxu0 0
    %1431 = vmatprep.subr.bf16.mxu0 0
    %1432 = vmatpush1.bf16.msra.mxu0 0
    %1433 = vmatprep.subr.bf16.mxu0 0
    %1434 = vmatpush1.bf16.msra.mxu0 0
    %1435 = vmatprep.subr.bf16.mxu0 0
    %1436 = vmatpush1.bf16.msra.mxu0 0
    %1437 = vmatprep.subr.bf16.mxu0 0
    %1438 = vmatpush1.bf16.msra.mxu0 0
    %1439 = vmatprep.subr.bf16.mxu0 0
    %1440 = vmatpush1.bf16.msra.mxu0 0
    %1441 = vmatprep.subr.bf16.mxu0 0
    %1442 = vmatpush1.bf16.msra.mxu0 0
    %1443 = vmatprep.subr.bf16.mxu0 0
    %1444 = vmatpush1.bf16.msra.mxu0 0
    %1445 = vmatprep.subr.bf16.mxu0 0
    %1446 = vmatpush1.bf16.msra.mxu0 0
    %1447 = vmatprep.subr.bf16.mxu0 0
    %1448 = vmatpush1.bf16.msra.mxu0 0
    %1449 = vmatprep.mubr.bf16.mxu0 0
    %1450 = vmatmul.mubr.bf16.gmra.mrb[0].mxu0 %v1349
    %v1451 = vpop.f32.mrb[0].mxu0
    %v1452 = vadd.f32 %v1403, %v1451
    %v1453 = vpop.f32.mrb[0].mxu0
    %v1454 = vpop.f32.mrb[0].mxu0
    %v1455 = vadd.f32 %v1403, %v1454
    %v1456 = vpop.f32.mrb[0].mxu0
    %1457 = vdwg.mxu0
    %s1458 = scalar_lea.vmem %s10, 32
    %v1459 = vld [vmem:[%s1458] sm:$0xf]
    %v1460 = vld [vmem:[%s1458 + $0x4] sm:$0xf]
    %v1461 = vld [vmem:[%s1458 + $0x8] sm:$0xf]
    %v1462 = vld [vmem:[%s1458 + $0xc] sm:$0xf]
    %s1463 = scalar_lea.vmem %s11, 2
    %v1464 = vld [vmem:[%s1463] sm:$0x1]
    %v1466 = vlaneseq
    %v1467 = vshrl.u32 %v1466, 7
    %v1468 = vsub.s32 0, %v1467
    %v1469 = vrot.slane %v1464, %v1468
    %v1475 = vunpack.c.l.b16 %v1459
    %v1476 = vunpack.c.l.b16 %v1460
    %v1477 = vunpack.c.l.b16 %v1461
    %v1478 = vunpack.c.l.b16 %v1462
    %v1479 = vpack.c.b16 %v1476, %v1475
    %v1480 = vpack.c.b16 %v1478, %v1477
    %1483 = vmatprep.subr.bf16.mxu0 0
    %1484 = vmatpush1.bf16.msra.mxu0 %v1479
    %1485 = vmatprep.subr.bf16.mxu0 0
    %1486 = vmatpush1.bf16.msra.mxu0 %v1480
    %1487 = vmatprep.subr.bf16.mxu0 0
    %1488 = vmatpush1.bf16.msra.mxu0 0
    %1489 = vmatprep.subr.bf16.mxu0 0
    %1490 = vmatpush1.bf16.msra.mxu0 0
    %1491 = vmatprep.subr.bf16.mxu0 0
    %1492 = vmatpush1.bf16.msra.mxu0 0
    %1493 = vmatprep.subr.bf16.mxu0 0
    %1494 = vmatpush1.bf16.msra.mxu0 0
    %1495 = vmatprep.subr.bf16.mxu0 0
    %1496 = vmatpush1.bf16.msra.mxu0 0
    %1497 = vmatprep.subr.bf16.mxu0 0
    %1498 = vmatpush1.bf16.msra.mxu0 0
    %1499 = vmatprep.subr.bf16.mxu0 0
    %1500 = vmatpush1.bf16.msra.mxu0 0
    %1501 = vmatprep.subr.bf16.mxu0 0
    %1502 = vmatpush1.bf16.msra.mxu0 0
    %1503 = vmatprep.subr.bf16.mxu0 0
    %1504 = vmatpush1.bf16.msra.mxu0 0
    %1505 = vmatprep.subr.bf16.mxu0 0
    %1506 = vmatpush1.bf16.msra.mxu0 0
    %1507 = vmatprep.subr.bf16.mxu0 0
    %1508 = vmatpush1.bf16.msra.mxu0 0
    %1509 = vmatprep.subr.bf16.mxu0 0
    %1510 = vmatpush1.bf16.msra.mxu0 0
    %1511 = vmatprep.subr.bf16.mxu0 0
    %1512 = vmatpush1.bf16.msra.mxu0 0
    %1513 = vmatprep.subr.bf16.mxu0 0
    %1514 = vmatpush1.bf16.msra.mxu0 0
    %1515 = vmatprep.mubr.bf16.mxu0 0
    %1516 = vmatmul.mubr.bf16.gmra.mrb[0].mxu0 %v1349
    %v1517 = vpop.f32.mrb[0].mxu0
    %v1518 = vadd.f32 %v1469, %v1517
    %v1519 = vpop.f32.mrb[0].mxu0
    %v1520 = vpop.f32.mrb[0].mxu0
    %v1521 = vadd.f32 %v1469, %v1520
    %v1522 = vpop.f32.mrb[0].mxu0
    %1523 = vdwg.mxu0
    %v1524 = vpack.c.bf16 %v1389, %v1386
    %v1525 = vpack.c.bf16 %v1455, %v1452
    %v1527 = vsel %vm509, %v1524, 0
    %v1530 = vsel %vm509, %v1525, 0
    %1532 = vmatprep.subr.bf16.mxu0 0
    %1533 = vmatpush1.bf16.xpose.msra.mxu0 %v1530
    %1534 = vmatprep.subr.bf16.mxu0 0
    %1535 = vmatpush1.bf16.xpose.msra.mxu0 0
    %1536 = vmatprep.subr.bf16.mxu0 0
    %1537 = vmatpush1.bf16.xpose.msra.mxu0 0
    %1538 = vmatprep.subr.bf16.mxu0 0
    %1539 = vmatpush1.bf16.xpose.msra.mxu0 0
    %1540 = vmatprep.subr.bf16.mxu0 0
    %1541 = vmatpush1.bf16.xpose.msra.mxu0 0
    %1542 = vmatprep.subr.bf16.mxu0 0
    %1543 = vmatpush1.bf16.xpose.msra.mxu0 0
    %1544 = vmatprep.subr.bf16.mxu0 0
    %1545 = vmatpush1.bf16.xpose.msra.mxu0 0
    %1546 = vmatprep.subr.bf16.mxu0 0
    %1547 = vmatpush1.bf16.xpose.msra.mxu0 0
    %1548 = vmatprep.subr.bf16.mxu0 0
    %1549 = vmatpush1.bf16.xpose.msra.mxu0 0
    %1550 = vmatprep.subr.bf16.mxu0 0
    %1551 = vmatpush1.bf16.xpose.msra.mxu0 0
    %1552 = vmatprep.subr.bf16.mxu0 0
    %1553 = vmatpush1.bf16.xpose.msra.mxu0 0
    %1554 = vmatprep.subr.bf16.mxu0 0
    %1555 = vmatpush1.bf16.xpose.msra.mxu0 0
    %1556 = vmatprep.subr.bf16.mxu0 0
    %1557 = vmatpush1.bf16.xpose.msra.mxu0 0
    %1558 = vmatprep.subr.bf16.mxu0 0
    %1559 = vmatpush1.bf16.xpose.msra.mxu0 0
    %1560 = vmatprep.subr.bf16.mxu0 0
    %1561 = vmatpush1.bf16.xpose.msra.mxu0 0
    %1562 = vmatprep.subr.bf16.mxu0 0
    %1563 = vmatpush1.bf16.xpose.msra.mxu0 0
    %1564 = vmatprep.mubr.bf16.mxu0 0
    %1565 = vmatmul.mubr.bf16.gmra.mrb[0].mxu0 %v1527
    %v1566 = vpop.f32.mrb[0].mxu0
    %v1567 = vadd.f32 %v308, %v1566
    %v1568 = vpop.f32.mrb[0].mxu0
    %v1569 = vpop.f32.mrb[0].mxu0
    %v1570 = vadd.f32 %v309, %v1569
    %v1571 = vpop.f32.mrb[0].mxu0
    %1572 = vdwg.mxu0
    %v1573 = vsel %vm509, %v1567, -inf
    %1574 = vmax.xlane.f32.xlu0 %v1573
    %v1575 = vpop.xlane.xlu0 %1574
    %v1576 = vsel %vm509, %v1570, -inf
    %1577 = vmax.xlane.f32.xlu0 %v1576
    %v1578 = vpop.xlane.xlu0 %1577
    %v1579 = vsub.f32 %v1567, %v1575
    %v1580 = vsub.f32 %v1570, %v1578
    %v1581 = vmul.f32 %v1579, 1.442695
    %v1582 = vpow.pop %v1581
    %v1583 = vmul.f32 %v1580, 1.442695
    %v1584 = vpow.pop %v1583
    %v1585 = vsel %vm509, %v1582, 0.0
    %1586 = vadd.xlane.f32.xlu0 %v1585
    %v1587 = vpop.xlane.xlu0 %1586
    %v1588 = vsel %vm509, %v1584, 0.0
    %1589 = vadd.xlane.f32.xlu0 %v1588
    %v1590 = vpop.xlane.xlu0 %1589
    %v1591 = vrcp.pop %v1587
    %v1592 = vrcp.pop %v1590
    %v1593 = vmul.f32 %v1582, %v1591
    %v1594 = vmul.f32 %v1584, %v1592
    %v1595 = vpack.c.bf16 %v1594, %v1593
    %v1596 = vpack.c.bf16 %v1521, %v1518
    %v1598 = vsel %vm509, %v1595, 0
    %1600 = vmatprep.subr.bf16.mxu0 0
    %1601 = vmatpush1.bf16.msra.mxu0 %v1596
    %1602 = vmatprep.subr.bf16.mxu0 0
    %1603 = vmatpush1.bf16.msra.mxu0 0
    %1604 = vmatprep.subr.bf16.mxu0 0
    %1605 = vmatpush1.bf16.msra.mxu0 0
    %1606 = vmatprep.subr.bf16.mxu0 0
    %1607 = vmatpush1.bf16.msra.mxu0 0
    %1608 = vmatprep.subr.bf16.mxu0 0
    %1609 = vmatpush1.bf16.msra.mxu0 0
    %1610 = vmatprep.subr.bf16.mxu0 0
    %1611 = vmatpush1.bf16.msra.mxu0 0
    %1612 = vmatprep.subr.bf16.mxu0 0
    %1613 = vmatpush1.bf16.msra.mxu0 0
    %1614 = vmatprep.subr.bf16.mxu0 0
    %1615 = vmatpush1.bf16.msra.mxu0 0
    %1616 = vmatprep.subr.bf16.mxu0 0
    %1617 = vmatpush1.bf16.msra.mxu0 0
    %1618 = vmatprep.subr.bf16.mxu0 0
    %1619 = vmatpush1.bf16.msra.mxu0 0
    %1620 = vmatprep.subr.bf16.mxu0 0
    %1621 = vmatpush1.bf16.msra.mxu0 0
    %1622 = vmatprep.subr.bf16.mxu0 0
    %1623 = vmatpush1.bf16.msra.mxu0 0
    %1624 = vmatprep.subr.bf16.mxu0 0
    %1625 = vmatpush1.bf16.msra.mxu0 0
    %1626 = vmatprep.subr.bf16.mxu0 0
    %1627 = vmatpush1.bf16.msra.mxu0 0
    %1628 = vmatprep.subr.bf16.mxu0 0
    %1629 = vmatpush1.bf16.msra.mxu0 0
    %1630 = vmatprep.subr.bf16.mxu0 0
    %1631 = vmatpush1.bf16.msra.mxu0 0
    %1632 = vmatprep.mubr.bf16.mxu0 0
    %1633 = vmatmul.mubr.bf16.gmra.mrb[0].mxu0 %v1598
    %v1634 = vpop.f32.mrb[0].mxu0
    %v1635 = vadd.f32 0.0, %v1634
    %v1636 = vpop.f32.mrb[0].mxu0
    %v1637 = vpop.f32.mrb[0].mxu0
    %v1638 = vadd.f32 0.0, %v1637
    %v1639 = vpop.f32.mrb[0].mxu0
    %1640 = vdwg.mxu0
    %v1641 = vpack.c.bf16 %v1638, %v1635
    %s1642 = scalar_lea.vmem %s12, 16
    %v1643 = vld [vmem:[%s1642] sm:$0xf]
    %v1644 = vld [vmem:[%s1642 + $0x4] sm:$0xf]
    %v1647 = vunpack.c.l.b16 %v1643
    %v1648 = vunpack.c.l.b16 %v1644
    %v1649 = vpack.c.b16 %v1648, %v1647
    %v1652 = vsel %vm509, %v1641, 0
    %1654 = vmatprep.subr.bf16.mxu0 0
    %1655 = vmatpush1.bf16.msra.mxu0 %v1649
    %1656 = vmatprep.subr.bf16.mxu0 0
    %1657 = vmatpush1.bf16.msra.mxu0 0
    %1658 = vmatprep.subr.bf16.mxu0 0
    %1659 = vmatpush1.bf16.msra.mxu0 0
    %1660 = vmatprep.subr.bf16.mxu0 0
    %1661 = vmatpush1.bf16.msra.mxu0 0
    %1662 = vmatprep.subr.bf16.mxu0 0
    %1663 = vmatpush1.bf16.msra.mxu0 0
    %1664 = vmatprep.subr.bf16.mxu0 0
    %1665 = vmatpush1.bf16.msra.mxu0 0
    %1666 = vmatprep.subr.bf16.mxu0 0
    %1667 = vmatpush1.bf16.msra.mxu0 0
    %1668 = vmatprep.subr.bf16.mxu0 0
    %1669 = vmatpush1.bf16.msra.mxu0 0
    %1670 = vmatprep.subr.bf16.mxu0 0
    %1671 = vmatpush1.bf16.msra.mxu0 0
    %1672 = vmatprep.subr.bf16.mxu0 0
    %1673 = vmatpush1.bf16.msra.mxu0 0
    %1674 = vmatprep.subr.bf16.mxu0 0
    %1675 = vmatpush1.bf16.msra.mxu0 0
    %1676 = vmatprep.subr.bf16.mxu0 0
    %1677 = vmatpush1.bf16.msra.mxu0 0
    %1678 = vmatprep.subr.bf16.mxu0 0
    %1679 = vmatpush1.bf16.msra.mxu0 0
    %1680 = vmatprep.subr.bf16.mxu0 0
    %1681 = vmatpush1.bf16.msra.mxu0 0
    %1682 = vmatprep.subr.bf16.mxu0 0
    %1683 = vmatpush1.bf16.msra.mxu0 0
    %1684 = vmatprep.subr.bf16.mxu0 0
    %1685 = vmatpush1.bf16.msra.mxu0 0
    %1686 = vmatprep.mubr.bf16.mxu0 0
    %1687 = vmatmul.mubr.bf16.gmra.mrb[0].mxu0 %v1652
    %v1688 = vpop.f32.mrb[0].mxu0
    %v1689 = vadd.f32 0.0, %v1688
    %v1690 = vpop.f32.mrb[0].mxu0
    %v1691 = vpop.f32.mrb[0].mxu0
    %v1692 = vadd.f32 0.0, %v1691
    %v1693 = vpop.f32.mrb[0].mxu0
    %1694 = vdwg.mxu0
    %v1696 = vlaneseq
    %v1697 = vshrl.u32 %v1696, 7
    %v1698 = vsub.s32 0, %v1697
    %v1699 = vrot.slane %v1322, %v1698
    %v1701 = vadd.f32 %v1699, %v1689
    %v1702 = vadd.f32 %v1699, %v1692
    %s1703 = scalar_lea.vmem %s6, 48
    %v1704 = vld [vmem:[%s1703] sm:$0xf]
    %v1705 = vld [vmem:[%s1703 + $0x4] sm:$0xf]
    %v1706 = vld [vmem:[%s1703 + $0x8] sm:$0xf]
    %v1707 = vld [vmem:[%s1703 + $0xc] sm:$0xf]
    %s1708 = scalar_lea.vmem %s7, 3
    %v1709 = vld [vmem:[%s1708] sm:$0x1]
    %v1711 = vlaneseq
    %v1712 = vshrl.u32 %v1711, 7
    %v1713 = vsub.s32 0, %v1712
    %v1714 = vrot.slane %v1709, %v1713
    %v1720 = vunpack.c.l.b16 %v1704
    %v1721 = vunpack.c.l.b16 %v1705
    %v1722 = vunpack.c.l.b16 %v1706
    %v1723 = vunpack.c.l.b16 %v1707
    %v1724 = vpack.c.b16 %v1721, %v1720
    %v1725 = vpack.c.b16 %v1723, %v1722
    %1728 = vmatprep.subr.bf16.mxu0 0
    %1729 = vmatpush1.bf16.msra.mxu0 %v1724
    %1730 = vmatprep.subr.bf16.mxu0 0
    %1731 = vmatpush1.bf16.msra.mxu0 %v1725
    %1732 = vmatprep.subr.bf16.mxu0 0
    %1733 = vmatpush1.bf16.msra.mxu0 0
    %1734 = vmatprep.subr.bf16.mxu0 0
    %1735 = vmatpush1.bf16.msra.mxu0 0
    %1736 = vmatprep.subr.bf16.mxu0 0
    %1737 = vmatpush1.bf16.msra.mxu0 0
    %1738 = vmatprep.subr.bf16.mxu0 0
    %1739 = vmatpush1.bf16.msra.mxu0 0
    %1740 = vmatprep.subr.bf16.mxu0 0
    %1741 = vmatpush1.bf16.msra.mxu0 0
    %1742 = vmatprep.subr.bf16.mxu0 0
    %1743 = vmatpush1.bf16.msra.mxu0 0
    %1744 = vmatprep.subr.bf16.mxu0 0
    %1745 = vmatpush1.bf16.msra.mxu0 0
    %1746 = vmatprep.subr.bf16.mxu0 0
    %1747 = vmatpush1.bf16.msra.mxu0 0
    %1748 = vmatprep.subr.bf16.mxu0 0
    %1749 = vmatpush1.bf16.msra.mxu0 0
    %1750 = vmatprep.subr.bf16.mxu0 0
    %1751 = vmatpush1.bf16.msra.mxu0 0
    %1752 = vmatprep.subr.bf16.mxu0 0
    %1753 = vmatpush1.bf16.msra.mxu0 0
    %1754 = vmatprep.subr.bf16.mxu0 0
    %1755 = vmatpush1.bf16.msra.mxu0 0
    %1756 = vmatprep.subr.bf16.mxu0 0
    %1757 = vmatpush1.bf16.msra.mxu0 0
    %1758 = vmatprep.subr.bf16.mxu0 0
    %1759 = vmatpush1.bf16.msra.mxu0 0
    %1760 = vmatprep.mubr.bf16.mxu0 0
    %1761 = vmatmul.mubr.bf16.gmra.mrb[0].mxu0 %v1349
    %v1762 = vpop.f32.mrb[0].mxu0
    %v1763 = vadd.f32 %v1714, %v1762
    %v1764 = vpop.f32.mrb[0].mxu0
    %v1765 = vpop.f32.mrb[0].mxu0
    %v1766 = vadd.f32 %v1714, %v1765
    %v1767 = vpop.f32.mrb[0].mxu0
    %1768 = vdwg.mxu0
    %s1769 = scalar_lea.vmem %s8, 48
    %v1770 = vld [vmem:[%s1769] sm:$0xf]
    %v1771 = vld [vmem:[%s1769 + $0x4] sm:$0xf]
    %v1772 = vld [vmem:[%s1769 + $0x8] sm:$0xf]
    %v1773 = vld [vmem:[%s1769 + $0xc] sm:$0xf]
    %s1774 = scalar_lea.vmem %s9, 3
    %v1775 = vld [vmem:[%s1774] sm:$0x1]
    %v1777 = vlaneseq
    %v1778 = vshrl.u32 %v1777, 7
    %v1779 = vsub.s32 0, %v1778
    %v1780 = vrot.slane %v1775, %v1779
    %v1786 = vunpack.c.l.b16 %v1770
    %v1787 = vunpack.c.l.b16 %v1771
    %v1788 = vunpack.c.l.b16 %v1772
    %v1789 = vunpack.c.l.b16 %v1773
    %v1790 = vpack.c.b16 %v1787, %v1786
    %v1791 = vpack.c.b16 %v1789, %v1788
    %1794 = vmatprep.subr.bf16.mxu0 0
    %1795 = vmatpush1.bf16.msra.mxu0 %v1790
    %1796 = vmatprep.subr.bf16.mxu0 0
    %1797 = vmatpush1.bf16.msra.mxu0 %v1791
    %1798 = vmatprep.subr.bf16.mxu0 0
    %1799 = vmatpush1.bf16.msra.mxu0 0
    %1800 = vmatprep.subr.bf16.mxu0 0
    %1801 = vmatpush1.bf16.msra.mxu0 0
    %1802 = vmatprep.subr.bf16.mxu0 0
    %1803 = vmatpush1.bf16.msra.mxu0 0
    %1804 = vmatprep.subr.bf16.mxu0 0
    %1805 = vmatpush1.bf16.msra.mxu0 0
    %1806 = vmatprep.subr.bf16.mxu0 0
    %1807 = vmatpush1.bf16.msra.mxu0 0
    %1808 = vmatprep.subr.bf16.mxu0 0
    %1809 = vmatpush1.bf16.msra.mxu0 0
    %1810 = vmatprep.subr.bf16.mxu0 0
    %1811 = vmatpush1.bf16.msra.mxu0 0
    %1812 = vmatprep.subr.bf16.mxu0 0
    %1813 = vmatpush1.bf16.msra.mxu0 0
    %1814 = vmatprep.subr.bf16.mxu0 0
    %1815 = vmatpush1.bf16.msra.mxu0 0
    %1816 = vmatprep.subr.bf16.mxu0 0
    %1817 = vmatpush1.bf16.msra.mxu0 0
    %1818 = vmatprep.subr.bf16.mxu0 0
    %1819 = vmatpush1.bf16.msra.mxu0 0
    %1820 = vmatprep.subr.bf16.mxu0 0
    %1821 = vmatpush1.bf16.msra.mxu0 0
    %1822 = vmatprep.subr.bf16.mxu0 0
    %1823 = vmatpush1.bf16.msra.mxu0 0
    %1824 = vmatprep.subr.bf16.mxu0 0
    %1825 = vmatpush1.bf16.msra.mxu0 0
    %1826 = vmatprep.mubr.bf16.mxu0 0
    %1827 = vmatmul.mubr.bf16.gmra.mrb[0].mxu0 %v1349
    %v1828 = vpop.f32.mrb[0].mxu0
    %v1829 = vadd.f32 %v1780, %v1828
    %v1830 = vpop.f32.mrb[0].mxu0
    %v1831 = vpop.f32.mrb[0].mxu0
    %v1832 = vadd.f32 %v1780, %v1831
    %v1833 = vpop.f32.mrb[0].mxu0
    %1834 = vdwg.mxu0
    %s1835 = scalar_lea.vmem %s10, 48
    %v1836 = vld [vmem:[%s1835] sm:$0xf]
    %v1837 = vld [vmem:[%s1835 + $0x4] sm:$0xf]
    %v1838 = vld [vmem:[%s1835 + $0x8] sm:$0xf]
    %v1839 = vld [vmem:[%s1835 + $0xc] sm:$0xf]
    %s1840 = scalar_lea.vmem %s11, 3
    %v1841 = vld [vmem:[%s1840] sm:$0x1]
    %v1843 = vlaneseq
    %v1844 = vshrl.u32 %v1843, 7
    %v1845 = vsub.s32 0, %v1844
    %v1846 = vrot.slane %v1841, %v1845
    %v1852 = vunpack.c.l.b16 %v1836
    %v1853 = vunpack.c.l.b16 %v1837
    %v1854 = vunpack.c.l.b16 %v1838
    %v1855 = vunpack.c.l.b16 %v1839
    %v1856 = vpack.c.b16 %v1853, %v1852
    %v1857 = vpack.c.b16 %v1855, %v1854
    %1860 = vmatprep.subr.bf16.mxu0 0
    %1861 = vmatpush1.bf16.msra.mxu0 %v1856
    %1862 = vmatprep.subr.bf16.mxu0 0
    %1863 = vmatpush1.bf16.msra.mxu0 %v1857
    %1864 = vmatprep.subr.bf16.mxu0 0
    %1865 = vmatpush1.bf16.msra.mxu0 0
    %1866 = vmatprep.subr.bf16.mxu0 0
    %1867 = vmatpush1.bf16.msra.mxu0 0
    %1868 = vmatprep.subr.bf16.mxu0 0
    %1869 = vmatpush1.bf16.msra.mxu0 0
    %1870 = vmatprep.subr.bf16.mxu0 0
    %1871 = vmatpush1.bf16.msra.mxu0 0
    %1872 = vmatprep.subr.bf16.mxu0 0
    %1873 = vmatpush1.bf16.msra.mxu0 0
    %1874 = vmatprep.subr.bf16.mxu0 0
    %1875 = vmatpush1.bf16.msra.mxu0 0
    %1876 = vmatprep.subr.bf16.mxu0 0
    %1877 = vmatpush1.bf16.msra.mxu0 0
    %1878 = vmatprep.subr.bf16.mxu0 0
    %1879 = vmatpush1.bf16.msra.mxu0 0
    %1880 = vmatprep.subr.bf16.mxu0 0
    %1881 = vmatpush1.bf16.msra.mxu0 0
    %1882 = vmatprep.subr.bf16.mxu0 0
    %1883 = vmatpush1.bf16.msra.mxu0 0
    %1884 = vmatprep.subr.bf16.mxu0 0
    %1885 = vmatpush1.bf16.msra.mxu0 0
    %1886 = vmatprep.subr.bf16.mxu0 0
    %1887 = vmatpush1.bf16.msra.mxu0 0
    %1888 = vmatprep.subr.bf16.mxu0 0
    %1889 = vmatpush1.bf16.msra.mxu0 0
    %1890 = vmatprep.subr.bf16.mxu0 0
    %1891 = vmatpush1.bf16.msra.mxu0 0
    %1892 = vmatprep.mubr.bf16.mxu0 0
    %1893 = vmatmul.mubr.bf16.gmra.mrb[0].mxu0 %v1349
    %v1894 = vpop.f32.mrb[0].mxu0
    %v1895 = vadd.f32 %v1846, %v1894
    %v1896 = vpop.f32.mrb[0].mxu0
    %v1897 = vpop.f32.mrb[0].mxu0
    %v1898 = vadd.f32 %v1846, %v1897
    %v1899 = vpop.f32.mrb[0].mxu0
    %1900 = vdwg.mxu0
    %v1901 = vpack.c.bf16 %v1766, %v1763
    %v1902 = vpack.c.bf16 %v1832, %v1829
    %v1904 = vsel %vm509, %v1901, 0
    %v1907 = vsel %vm509, %v1902, 0
    %1909 = vmatprep.subr.bf16.mxu0 0
    %1910 = vmatpush1.bf16.xpose.msra.mxu0 %v1907
    %1911 = vmatprep.subr.bf16.mxu0 0
    %1912 = vmatpush1.bf16.xpose.msra.mxu0 0
    %1913 = vmatprep.subr.bf16.mxu0 0
    %1914 = vmatpush1.bf16.xpose.msra.mxu0 0
    %1915 = vmatprep.subr.bf16.mxu0 0
    %1916 = vmatpush1.bf16.xpose.msra.mxu0 0
    %1917 = vmatprep.subr.bf16.mxu0 0
    %1918 = vmatpush1.bf16.xpose.msra.mxu0 0
    %1919 = vmatprep.subr.bf16.mxu0 0
    %1920 = vmatpush1.bf16.xpose.msra.mxu0 0
    %1921 = vmatprep.subr.bf16.mxu0 0
    %1922 = vmatpush1.bf16.xpose.msra.mxu0 0
    %1923 = vmatprep.subr.bf16.mxu0 0
    %1924 = vmatpush1.bf16.xpose.msra.mxu0 0
    %1925 = vmatprep.subr.bf16.mxu0 0
    %1926 = vmatpush1.bf16.xpose.msra.mxu0 0
    %1927 = vmatprep.subr.bf16.mxu0 0
    %1928 = vmatpush1.bf16.xpose.msra.mxu0 0
    %1929 = vmatprep.subr.bf16.mxu0 0
    %1930 = vmatpush1.bf16.xpose.msra.mxu0 0
    %1931 = vmatprep.subr.bf16.mxu0 0
    %1932 = vmatpush1.bf16.xpose.msra.mxu0 0
    %1933 = vmatprep.subr.bf16.mxu0 0
    %1934 = vmatpush1.bf16.xpose.msra.mxu0 0
    %1935 = vmatprep.subr.bf16.mxu0 0
    %1936 = vmatpush1.bf16.xpose.msra.mxu0 0
    %1937 = vmatprep.subr.bf16.mxu0 0
    %1938 = vmatpush1.bf16.xpose.msra.mxu0 0
    %1939 = vmatprep.subr.bf16.mxu0 0
    %1940 = vmatpush1.bf16.xpose.msra.mxu0 0
    %1941 = vmatprep.mubr.bf16.mxu0 0
    %1942 = vmatmul.mubr.bf16.gmra.mrb[0].mxu0 %v1904
    %v1943 = vpop.f32.mrb[0].mxu0
    %v1944 = vadd.f32 %v308, %v1943
    %v1945 = vpop.f32.mrb[0].mxu0
    %v1946 = vpop.f32.mrb[0].mxu0
    %v1947 = vadd.f32 %v309, %v1946
    %v1948 = vpop.f32.mrb[0].mxu0
    %1949 = vdwg.mxu0
    %v1950 = vsel %vm509, %v1944, -inf
    %1951 = vmax.xlane.f32.xlu0 %v1950
    %v1952 = vpop.xlane.xlu0 %1951
    %v1953 = vsel %vm509, %v1947, -inf
    %1954 = vmax.xlane.f32.xlu0 %v1953
    %v1955 = vpop.xlane.xlu0 %1954
    %v1956 = vsub.f32 %v1944, %v1952
    %v1957 = vsub.f32 %v1947, %v1955
    %v1958 = vmul.f32 %v1956, 1.442695
    %v1959 = vpow.pop %v1958
    %v1960 = vmul.f32 %v1957, 1.442695
    %v1961 = vpow.pop %v1960
    %v1962 = vsel %vm509, %v1959, 0.0
    %1963 = vadd.xlane.f32.xlu0 %v1962
    %v1964 = vpop.xlane.xlu0 %1963
    %v1965 = vsel %vm509, %v1961, 0.0
    %1966 = vadd.xlane.f32.xlu0 %v1965
    %v1967 = vpop.xlane.xlu0 %1966
    %v1968 = vrcp.pop %v1964
    %v1969 = vrcp.pop %v1967
    %v1970 = vmul.f32 %v1959, %v1968
    %v1971 = vmul.f32 %v1961, %v1969
    %v1972 = vpack.c.bf16 %v1971, %v1970
    %v1973 = vpack.c.bf16 %v1898, %v1895
    %v1975 = vsel %vm509, %v1972, 0
    %1977 = vmatprep.subr.bf16.mxu0 0
    %1978 = vmatpush1.bf16.msra.mxu0 %v1973
    %1979 = vmatprep.subr.bf16.mxu0 0
    %1980 = vmatpush1.bf16.msra.mxu0 0
    %1981 = vmatprep.subr.bf16.mxu0 0
    %1982 = vmatpush1.bf16.msra.mxu0 0
    %1983 = vmatprep.subr.bf16.mxu0 0
    %1984 = vmatpush1.bf16.msra.mxu0 0
    %1985 = vmatprep.subr.bf16.mxu0 0
    %1986 = vmatpush1.bf16.msra.mxu0 0
    %1987 = vmatprep.subr.bf16.mxu0 0
    %1988 = vmatpush1.bf16.msra.mxu0 0
    %1989 = vmatprep.subr.bf16.mxu0 0
    %1990 = vmatpush1.bf16.msra.mxu0 0
    %1991 = vmatprep.subr.bf16.mxu0 0
    %1992 = vmatpush1.bf16.msra.mxu0 0
    %1993 = vmatprep.subr.bf16.mxu0 0
    %1994 = vmatpush1.bf16.msra.mxu0 0
    %1995 = vmatprep.subr.bf16.mxu0 0
    %1996 = vmatpush1.bf16.msra.mxu0 0
    %1997 = vmatprep.subr.bf16.mxu0 0
    %1998 = vmatpush1.bf16.msra.mxu0 0
    %1999 = vmatprep.subr.bf16.mxu0 0
    %2000 = vmatpush1.bf16.msra.mxu0 0
    %2001 = vmatprep.subr.bf16.mxu0 0
    %2002 = vmatpush1.bf16.msra.mxu0 0
    %2003 = vmatprep.subr.bf16.mxu0 0
    %2004 = vmatpush1.bf16.msra.mxu0 0
    %2005 = vmatprep.subr.bf16.mxu0 0
    %2006 = vmatpush1.bf16.msra.mxu0 0
    %2007 = vmatprep.subr.bf16.mxu0 0
    %2008 = vmatpush1.bf16.msra.mxu0 0
    %2009 = vmatprep.mubr.bf16.mxu0 0
    %2010 = vmatmul.mubr.bf16.gmra.mrb[0].mxu0 %v1975
    %v2011 = vpop.f32.mrb[0].mxu0
    %v2012 = vadd.f32 0.0, %v2011
    %v2013 = vpop.f32.mrb[0].mxu0
    %v2014 = vpop.f32.mrb[0].mxu0
    %v2015 = vadd.f32 0.0, %v2014
    %v2016 = vpop.f32.mrb[0].mxu0
    %2017 = vdwg.mxu0
    %v2018 = vpack.c.bf16 %v2015, %v2012
    %s2019 = scalar_lea.vmem %s12, 24
    %v2020 = vld [vmem:[%s2019] sm:$0xf]
    %v2021 = vld [vmem:[%s2019 + $0x4] sm:$0xf]
    %v2024 = vunpack.c.l.b16 %v2020
    %v2025 = vunpack.c.l.b16 %v2021
    %v2026 = vpack.c.b16 %v2025, %v2024
    %v2029 = vsel %vm509, %v2018, 0
    %2031 = vmatprep.subr.bf16.mxu0 0
    %2032 = vmatpush1.bf16.msra.mxu0 %v2026
    %2033 = vmatprep.subr.bf16.mxu0 0
    %2034 = vmatpush1.bf16.msra.mxu0 0
    %2035 = vmatprep.subr.bf16.mxu0 0
    %2036 = vmatpush1.bf16.msra.mxu0 0
    %2037 = vmatprep.subr.bf16.mxu0 0
    %2038 = vmatpush1.bf16.msra.mxu0 0
    %2039 = vmatprep.subr.bf16.mxu0 0
    %2040 = vmatpush1.bf16.msra.mxu0 0
    %2041 = vmatprep.subr.bf16.mxu0 0
    %2042 = vmatpush1.bf16.msra.mxu0 0
    %2043 = vmatprep.subr.bf16.mxu0 0
    %2044 = vmatpush1.bf16.msra.mxu0 0
    %2045 = vmatprep.subr.bf16.mxu0 0
    %2046 = vmatpush1.bf16.msra.mxu0 0
    %2047 = vmatprep.subr.bf16.mxu0 0
    %2048 = vmatpush1.bf16.msra.mxu0 0
    %2049 = vmatprep.subr.bf16.mxu0 0
    %2050 = vmatpush1.bf16.msra.mxu0 0
    %2051 = vmatprep.subr.bf16.mxu0 0
    %2052 = vmatpush1.bf16.msra.mxu0 0
    %2053 = vmatprep.subr.bf16.mxu0 0
    %2054 = vmatpush1.bf16.msra.mxu0 0
    %2055 = vmatprep.subr.bf16.mxu0 0
    %2056 = vmatpush1.bf16.msra.mxu0 0
    %2057 = vmatprep.subr.bf16.mxu0 0
    %2058 = vmatpush1.bf16.msra.mxu0 0
    %2059 = vmatprep.subr.bf16.mxu0 0
    %2060 = vmatpush1.bf16.msra.mxu0 0
    %2061 = vmatprep.subr.bf16.mxu0 0
    %2062 = vmatpush1.bf16.msra.mxu0 0
    %2063 = vmatprep.mubr.bf16.mxu0 0
    %2064 = vmatmul.mubr.bf16.gmra.mrb[0].mxu0 %v2029
    %v2065 = vpop.f32.mrb[0].mxu0
    %v2066 = vadd.f32 0.0, %v2065
    %v2067 = vpop.f32.mrb[0].mxu0
    %v2068 = vpop.f32.mrb[0].mxu0
    %v2069 = vadd.f32 0.0, %v2068
    %v2070 = vpop.f32.mrb[0].mxu0
    %2071 = vdwg.mxu0
    %v2072 = vadd.f32 %v1701, %v2066
    %v2073 = vadd.f32 %v1702, %v2069
    %v2074 = vadd.f32 %v1318, %v2072
    %v2075 = vadd.f32 %v1319, %v2073
    %s2076 = scalar_lea.vmem %s14, 1
    %v2077 = vld [vmem:[%s2076] sm:$0x1]
    %s2078 = scalar_lea.vmem %s15, 1
    %v2079 = vld [vmem:[%s2078] sm:$0x1]
    %v2080 = vsel %vm264, %v2074, 0.0
    %2081 = vadd.xlane.f32.xlu0 %v2080
    %v2082 = vpop.xlane.xlu0 %2081
    %v2083 = vsel %vm264, %v2075, 0.0
    %2084 = vadd.xlane.f32.xlu0 %v2083
    %v2085 = vpop.xlane.xlu0 %2084
    %v2086 = vmul.f32 %v2082, %v271
    %v2087 = vmul.f32 %v2085, %v271
    %v2088 = vsub.f32 %v2074, %v2086
    %v2089 = vsub.f32 %v2075, %v2087
    %v2090 = vmul.f32 %v2088, %v2088
    %v2091 = vmul.f32 %v2089, %v2089
    %v2092 = vsel %vm264, %v2090, 0.0
    %2093 = vadd.xlane.f32.xlu0 %v2092
    %v2094 = vpop.xlane.xlu0 %2093
    %v2095 = vsel %vm264, %v2091, 0.0
    %2096 = vadd.xlane.f32.xlu0 %v2095
    %v2097 = vpop.xlane.xlu0 %2096
    %v2098 = vmul.f32 %v2094, %v271
    %v2099 = vmul.f32 %v2097, %v271
    %v2100 = vadd.f32 %v2098, 1e-12
    %v2101 = vadd.f32 %v2099, 1e-12
    %v2102 = vrsqrt.pop %v2100
    %v2103 = vrsqrt.pop %v2101
    %v2104 = vmul.f32 %v2088, %v2102
    %v2105 = vmul.f32 %v2089, %v2103
    %v2107 = vlaneseq
    %v2108 = vshrl.u32 %v2107, 7
    %v2109 = vsub.s32 0, %v2108
    %v2110 = vrot.slane %v2077, %v2109
    %v2112 = vmul.f32 %v2104, %v2110
    %v2113 = vmul.f32 %v2105, %v2110
    %v2115 = vlaneseq
    %v2116 = vshrl.u32 %v2115, 7
    %v2117 = vsub.s32 0, %v2116
    %v2118 = vrot.slane %v2079, %v2117
    %v2120 = vadd.f32 %v2112, %v2118
    %v2121 = vadd.f32 %v2113, %v2118
    %v2122 = vpack.c.bf16 %v2121, %v2120
    %s2123 = scalar_lea.vmem %s16, 16
    %v2124 = vld [vmem:[%s2123] sm:$0xf]
    %v2125 = vld [vmem:[%s2123 + $0x4] sm:$0xf]
    %v2126 = vld [vmem:[%s2123 + $0x8] sm:$0xf]
    %v2127 = vld [vmem:[%s2123 + $0xc] sm:$0xf]
    %s2128 = scalar_lea.vmem %s17, 1
    %v2129 = vld [vmem:[%s2128] sm:$0x1]
    %v2131 = vlaneseq
    %v2132 = vshrl.u32 %v2131, 7
    %v2133 = vsub.s32 0, %v2132
    %v2134 = vrot.slane %v2129, %v2133
    %v2140 = vunpack.c.l.b16 %v2124
    %v2141 = vunpack.c.l.b16 %v2125
    %v2142 = vunpack.c.l.b16 %v2126
    %v2143 = vunpack.c.l.b16 %v2127
    %v2144 = vpack.c.b16 %v2141, %v2140
    %v2145 = vpack.c.b16 %v2143, %v2142
    %v2149 = vsel %vm264, %v2122, 0
    %2151 = vmatprep.subr.bf16.mxu0 0
    %2152 = vmatpush1.bf16.msra.mxu0 %v2144
    %2153 = vmatprep.subr.bf16.mxu0 0
    %2154 = vmatpush1.bf16.msra.mxu0 %v2145
    %2155 = vmatprep.subr.bf16.mxu0 0
    %2156 = vmatpush1.bf16.msra.mxu0 0
    %2157 = vmatprep.subr.bf16.mxu0 0
    %2158 = vmatpush1.bf16.msra.mxu0 0
    %2159 = vmatprep.subr.bf16.mxu0 0
    %2160 = vmatpush1.bf16.msra.mxu0 0
    %2161 = vmatprep.subr.bf16.mxu0 0
    %2162 = vmatpush1.bf16.msra.mxu0 0
    %2163 = vmatprep.subr.bf16.mxu0 0
    %2164 = vmatpush1.bf16.msra.mxu0 0
    %2165 = vmatprep.subr.bf16.mxu0 0
    %2166 = vmatpush1.bf16.msra.mxu0 0
    %2167 = vmatprep.subr.bf16.mxu0 0
    %2168 = vmatpush1.bf16.msra.mxu0 0
    %2169 = vmatprep.subr.bf16.mxu0 0
    %2170 = vmatpush1.bf16.msra.mxu0 0
    %2171 = vmatprep.subr.bf16.mxu0 0
    %2172 = vmatpush1.bf16.msra.mxu0 0
    %2173 = vmatprep.subr.bf16.mxu0 0
    %2174 = vmatpush1.bf16.msra.mxu0 0
    %2175 = vmatprep.subr.bf16.mxu0 0
    %2176 = vmatpush1.bf16.msra.mxu0 0
    %2177 = vmatprep.subr.bf16.mxu0 0
    %2178 = vmatpush1.bf16.msra.mxu0 0
    %2179 = vmatprep.subr.bf16.mxu0 0
    %2180 = vmatpush1.bf16.msra.mxu0 0
    %2181 = vmatprep.subr.bf16.mxu0 0
    %2182 = vmatpush1.bf16.msra.mxu0 0
    %2183 = vmatprep.mubr.bf16.mxu0 0
    %2184 = vmatmul.mubr.bf16.gmra.mrb[0].mxu0 %v2149
    %v2185 = vpop.f32.mrb[0].mxu0
    %v2186 = vadd.f32 %v2134, %v2185
    %v2187 = vpop.f32.mrb[0].mxu0
    %v2188 = vpop.f32.mrb[0].mxu0
    %v2189 = vadd.f32 %v2134, %v2188
    %v2190 = vpop.f32.mrb[0].mxu0
    %2191 = vdwg.mxu0
    %v2192 = vmul.f32 %v2186, 0.5
    %v2193 = vmul.f32 %v2189, 0.5
    %v2194 = vmul.f32 %v2186, 0.044715
    %v2195 = vmul.f32 %v2189, 0.044715
    %v2196 = vmul.f32 %v2194, %v2186
    %v2197 = vmul.f32 %v2195, %v2189
    %v2198 = vmul.f32 %v2196, %v2186
    %v2199 = vmul.f32 %v2197, %v2189
    %v2200 = vadd.f32 %v2186, %v2198
    %v2201 = vadd.f32 %v2189, %v2199
    %v2202 = vmul.f32 %v2200, 0.7978846
    %v2203 = vmul.f32 %v2201, 0.7978846
    %v2204 = vtanh.pop %v2202
    %v2205 = vtanh.pop %v2203
    %v2206 = vadd.f32 %v2204, 1.0
    %v2207 = vadd.f32 %v2205, 1.0
    %v2208 = vmul.f32 %v2192, %v2206
    %v2209 = vmul.f32 %v2193, %v2207
    %v2210 = vpack.c.bf16 %v2209, %v2208
    %s2211 = scalar_lea.vmem %s18, 32
    %v2212 = vld [vmem:[%s2211] sm:$0xf]
    %v2213 = vld [vmem:[%s2211 + $0x4] sm:$0xf]
    %v2214 = vld [vmem:[%s2211 + $0x8] sm:$0xf]
    %v2215 = vld [vmem:[%s2211 + $0xc] sm:$0xf]
    %v2216 = vld [vmem:[%s2211 + $0x10] sm:$0xf]
    %v2217 = vld [vmem:[%s2211 + $0x14] sm:$0xf]
    %v2218 = vld [vmem:[%s2211 + $0x18] sm:$0xf]
    %v2219 = vld [vmem:[%s2211 + $0x1c] sm:$0xf]
    %s2220 = scalar_lea.vmem %s19, 1
    %v2221 = vld [vmem:[%s2220] sm:$0x1]
    %v2223 = vlaneseq
    %v2224 = vshrl.u32 %v2223, 7
    %v2225 = vsub.s32 0, %v2224
    %v2226 = vrot.slane %v2221, %v2225
    %v2236 = vunpack.c.l.b16 %v2212
    %v2237 = vunpack.c.l.b16 %v2213
    %v2238 = vunpack.c.l.b16 %v2214
    %v2239 = vunpack.c.l.b16 %v2215
    %v2240 = vunpack.c.l.b16 %v2216
    %v2241 = vunpack.c.l.b16 %v2217
    %v2242 = vunpack.c.l.b16 %v2218
    %v2243 = vunpack.c.l.b16 %v2219
    %v2244 = vpack.c.b16 %v2237, %v2236
    %v2245 = vpack.c.b16 %v2239, %v2238
    %v2246 = vpack.c.b16 %v2241, %v2240
    %v2247 = vpack.c.b16 %v2243, %v2242
    %v2253 = vsel %vm1229, %v2210, 0
    %2255 = vmatprep.subr.bf16.mxu0 0
    %2256 = vmatpush1.bf16.msra.mxu0 %v2244
    %2257 = vmatprep.subr.bf16.mxu0 0
    %2258 = vmatpush1.bf16.msra.mxu0 %v2245
    %2259 = vmatprep.subr.bf16.mxu0 0
    %2260 = vmatpush1.bf16.msra.mxu0 %v2246
    %2261 = vmatprep.subr.bf16.mxu0 0
    %2262 = vmatpush1.bf16.msra.mxu0 %v2247
    %2263 = vmatprep.subr.bf16.mxu0 0
    %2264 = vmatpush1.bf16.msra.mxu0 0
    %2265 = vmatprep.subr.bf16.mxu0 0
    %2266 = vmatpush1.bf16.msra.mxu0 0
    %2267 = vmatprep.subr.bf16.mxu0 0
    %2268 = vmatpush1.bf16.msra.mxu0 0
    %2269 = vmatprep.subr.bf16.mxu0 0
    %2270 = vmatpush1.bf16.msra.mxu0 0
    %2271 = vmatprep.subr.bf16.mxu0 0
    %2272 = vmatpush1.bf16.msra.mxu0 0
    %2273 = vmatprep.subr.bf16.mxu0 0
    %2274 = vmatpush1.bf16.msra.mxu0 0
    %2275 = vmatprep.subr.bf16.mxu0 0
    %2276 = vmatpush1.bf16.msra.mxu0 0
    %2277 = vmatprep.subr.bf16.mxu0 0
    %2278 = vmatpush1.bf16.msra.mxu0 0
    %2279 = vmatprep.subr.bf16.mxu0 0
    %2280 = vmatpush1.bf16.msra.mxu0 0
    %2281 = vmatprep.subr.bf16.mxu0 0
    %2282 = vmatpush1.bf16.msra.mxu0 0
    %2283 = vmatprep.subr.bf16.mxu0 0
    %2284 = vmatpush1.bf16.msra.mxu0 0
    %2285 = vmatprep.subr.bf16.mxu0 0
    %2286 = vmatpush1.bf16.msra.mxu0 0
    %2287 = vmatprep.mubr.bf16.mxu0 0
    %2288 = vmatmul.mubr.bf16.gmra.mrb[0].mxu0 %v2253
    %v2289 = vpop.f32.mrb[0].mxu0
    %v2290 = vadd.f32 %v2226, %v2289
    %v2291 = vpop.f32.mrb[0].mxu0
    %v2292 = vpop.f32.mrb[0].mxu0
    %v2293 = vadd.f32 %v2226, %v2292
    %v2294 = vpop.f32.mrb[0].mxu0
    %2295 = vdwg.mxu0
    %v2296 = vadd.f32 %v2120, %v2290
    %v2297 = vadd.f32 %v2121, %v2293
    %s2298 = scalar_lea.vmem %s20, 1
    %v2299 = vld [vmem:[%s2298] sm:$0x1]
    %s2300 = scalar_lea.vmem %s21, 1
    %v2301 = vld [vmem:[%s2300] sm:$0x1]
    %v2302 = vsel %vm264, %v2296, 0.0
    %2303 = vadd.xlane.f32.xlu0 %v2302
    %v2304 = vpop.xlane.xlu0 %2303
    %v2305 = vsel %vm264, %v2297, 0.0
    %2306 = vadd.xlane.f32.xlu0 %v2305
    %v2307 = vpop.xlane.xlu0 %2306
    %v2308 = vmul.f32 %v2304, %v271
    %v2309 = vmul.f32 %v2307, %v271
    %v2310 = vsub.f32 %v2296, %v2308
    %v2311 = vsub.f32 %v2297, %v2309
    %v2312 = vmul.f32 %v2310, %v2310
    %v2313 = vmul.f32 %v2311, %v2311
    %v2314 = vsel %vm264, %v2312, 0.0
    %2315 = vadd.xlane.f32.xlu0 %v2314
    %v2316 = vpop.xlane.xlu0 %2315
    %v2317 = vsel %vm264, %v2313, 0.0
    %2318 = vadd.xlane.f32.xlu0 %v2317
    %v2319 = vpop.xlane.xlu0 %2318
    %v2320 = vmul.f32 %v2316, %v271
    %v2321 = vmul.f32 %v2319, %v271
    %v2322 = vadd.f32 %v2320, 1e-12
    %v2323 = vadd.f32 %v2321, 1e-12
    %v2324 = vrsqrt.pop %v2322
    %v2325 = vrsqrt.pop %v2323
    %v2326 = vmul.f32 %v2310, %v2324
    %v2327 = vmul.f32 %v2311, %v2325
    %v2329 = vlaneseq
    %v2330 = vshrl.u32 %v2329, 7
    %v2331 = vsub.s32 0, %v2330
    %v2332 = vrot.slane %v2299, %v2331
    %v2334 = vmul.f32 %v2326, %v2332
    %v2335 = vmul.f32 %v2327, %v2332
    %v2337 = vlaneseq
    %v2338 = vshrl.u32 %v2337, 7
    %v2339 = vsub.s32 0, %v2338
    %v2340 = vrot.slane %v2301, %v2339
    %v2342 = vadd.f32 %v2334, %v2340
    %v2343 = vadd.f32 %v2335, %v2340
    %v2345 = vrot.slane %v2343, 7
    %v2347 = vsel %vm237, %v2342, %v2345
    %v2348 = vpack.c.bf16 %v2347, %v2347
    %v2349 = vld [vmem:[%s22] sm:$0xf]
    %v2350 = vld [vmem:[%s22 + $0x4] sm:$0xf]
    %v2351 = vld [vmem:[%s22 + $0x8] sm:$0xf]
    %v2352 = vld [vmem:[%s22 + $0xc] sm:$0xf]
    %v2353 = vld [vmem:[%s23] sm:$0x1]
    %v2355 = vlaneseq
    %v2356 = vshrl.u32 %v2355, 7
    %v2357 = vsub.s32 0, %v2356
    %v2358 = vrot.slane %v2353, %v2357
    %v2364 = vunpack.c.l.b16 %v2349
    %v2365 = vunpack.c.l.b16 %v2350
    %v2366 = vunpack.c.l.b16 %v2351
    %v2367 = vunpack.c.l.b16 %v2352
    %v2368 = vpack.c.b16 %v2365, %v2364
    %v2369 = vpack.c.b16 %v2367, %v2366
    %v2373 = vsel %vm264, %v2348, 0
    %2375 = vmatprep.subr.bf16.mxu0 0
    %2376 = vmatpush1.bf16.msra.mxu0 %v2368
    %2377 = vmatprep.subr.bf16.mxu0 0
    %2378 = vmatpush1.bf16.msra.mxu0 %v2369
    %2379 = vmatprep.subr.bf16.mxu0 0
    %2380 = vmatpush1.bf16.msra.mxu0 0
    %2381 = vmatprep.subr.bf16.mxu0 0
    %2382 = vmatpush1.bf16.msra.mxu0 0
    %2383 = vmatprep.subr.bf16.mxu0 0
    %2384 = vmatpush1.bf16.msra.mxu0 0
    %2385 = vmatprep.subr.bf16.mxu0 0
    %2386 = vmatpush1.bf16.msra.mxu0 0
    %2387 = vmatprep.subr.bf16.mxu0 0
    %2388 = vmatpush1.bf16.msra.mxu0 0
    %2389 = vmatprep.subr.bf16.mxu0 0
    %2390 = vmatpush1.bf16.msra.mxu0 0
    %2391 = vmatprep.subr.bf16.mxu0 0
    %2392 = vmatpush1.bf16.msra.mxu0 0
    %2393 = vmatprep.subr.bf16.mxu0 0
    %2394 = vmatpush1.bf16.msra.mxu0 0
    %2395 = vmatprep.subr.bf16.mxu0 0
    %2396 = vmatpush1.bf16.msra.mxu0 0
    %2397 = vmatprep.subr.bf16.mxu0 0
    %2398 = vmatpush1.bf16.msra.mxu0 0
    %2399 = vmatprep.subr.bf16.mxu0 0
    %2400 = vmatpush1.bf16.msra.mxu0 0
    %2401 = vmatprep.subr.bf16.mxu0 0
    %2402 = vmatpush1.bf16.msra.mxu0 0
    %2403 = vmatprep.subr.bf16.mxu0 0
    %2404 = vmatpush1.bf16.msra.mxu0 0
    %2405 = vmatprep.subr.bf16.mxu0 0
    %2406 = vmatpush1.bf16.msra.mxu0 0
    %2407 = vmatprep.mubr.bf16.mxu0 0
    %2408 = vmatmul.mubr.bf16.gmra.mrb[0].mxu0 %v2373
    %v2409 = vpop.f32.mrb[0].mxu0
    %v2410 = vadd.f32 %v2358, %v2409
    %v2411 = vpop.f32.mrb[0].mxu0
    %v2412 = vpop.f32.mrb[0].mxu0
    %v2413 = vpop.f32.mrb[0].mxu0
    %2414 = vdwg.mxu0
    %v2415 = vtanh.pop %v2410
    %v2416 = vpack.c.bf16 %v2415, %v2415
    %v2417 = vld [vmem:[%s24] sm:$0xf]
    %v2418 = vld [vmem:[%s24 + $0x4] sm:$0xf]
    %v2419 = vld [vmem:[%s24 + $0x8] sm:$0xf]
    %v2420 = vld [vmem:[%s24 + $0xc] sm:$0xf]
    %v2421 = vld [vmem:[%s25] sm:$0x1]
    %v2423 = vlaneseq
    %v2424 = vshrl.u32 %v2423, 7
    %v2425 = vsub.s32 0, %v2424
    %v2426 = vrot.slane %v2421, %v2425
    %v2432 = vunpack.c.l.b16 %v2417
    %v2433 = vunpack.c.l.b16 %v2418
    %v2434 = vunpack.c.l.b16 %v2419
    %v2435 = vunpack.c.l.b16 %v2420
    %v2436 = vpack.c.b16 %v2433, %v2432
    %v2437 = vpack.c.b16 %v2435, %v2434
    %v2441 = vsel %vm264, %v2416, 0
    %2443 = vmatprep.subr.bf16.mxu0 0
    %2444 = vmatpush1.bf16.msra.mxu0 %v2436
    %2445 = vmatprep.subr.bf16.mxu0 0
    %2446 = vmatpush1.bf16.msra.mxu0 %v2437
    %2447 = vmatprep.subr.bf16.mxu0 0
    %2448 = vmatpush1.bf16.msra.mxu0 0
    %2449 = vmatprep.subr.bf16.mxu0 0
    %2450 = vmatpush1.bf16.msra.mxu0 0
    %2451 = vmatprep.subr.bf16.mxu0 0
    %2452 = vmatpush1.bf16.msra.mxu0 0
    %2453 = vmatprep.subr.bf16.mxu0 0
    %2454 = vmatpush1.bf16.msra.mxu0 0
    %2455 = vmatprep.subr.bf16.mxu0 0
    %2456 = vmatpush1.bf16.msra.mxu0 0
    %2457 = vmatprep.subr.bf16.mxu0 0
    %2458 = vmatpush1.bf16.msra.mxu0 0
    %2459 = vmatprep.subr.bf16.mxu0 0
    %2460 = vmatpush1.bf16.msra.mxu0 0
    %2461 = vmatprep.subr.bf16.mxu0 0
    %2462 = vmatpush1.bf16.msra.mxu0 0
    %2463 = vmatprep.subr.bf16.mxu0 0
    %2464 = vmatpush1.bf16.msra.mxu0 0
    %2465 = vmatprep.subr.bf16.mxu0 0
    %2466 = vmatpush1.bf16.msra.mxu0 0
    %2467 = vmatprep.subr.bf16.mxu0 0
    %2468 = vmatpush1.bf16.msra.mxu0 0
    %2469 = vmatprep.subr.bf16.mxu0 0
    %2470 = vmatpush1.bf16.msra.mxu0 0
    %2471 = vmatprep.subr.bf16.mxu0 0
    %2472 = vmatpush1.bf16.msra.mxu0 0
    %2473 = vmatprep.subr.bf16.mxu0 0
    %2474 = vmatpush1.bf16.msra.mxu0 0
    %2475 = vmatprep.mubr.bf16.mxu0 0
    %2476 = vmatmul.mubr.bf16.gmra.mrb[0].mxu0 %v2441
    %v2477 = vpop.f32.mrb[0].mxu0
    %v2478 = vadd.f32 %v2426, %v2477
    %v2479 = vpop.f32.mrb[0].mxu0
    %v2480 = vpop.f32.mrb[0].mxu0
    %v2481 = vpop.f32.mrb[0].mxu0
    %2482 = vdwg.mxu0
    %2483 = vst [vmem:[#allocation4] sm:$0x3] %v2478
    // Predicated region
    $region102: #{forward.1} parent=1 // pred_check
      _
    $region103: #{forward.1} parent=1 // pred_check_branch
      %2485 = sbr.rel (0) target = $region105
    $region104: #{forward.1} parent=1 // pred_region
      %s2487 = ssub.s32 32, 32
      %2488 = vsyncadd [#allocation5], %s2487
      %s2490 = sshll.u32 [#allocation4], 4
      %s2491 = int_to_ptr.vmem [resolvable:$true] %s2490
      %2493 = dma.vmem_to_hbm [thread:$0]  %s2491, 32, %s26, [#allocation5]
    $region105: #{forward.1} parent=1 // pred_fallthru
      _
    // Predicated region
    $region106: #{forward.1} parent=1 // pred_check
      _
    $region107: #{forward.1} parent=1 // pred_check_branch
      %2495 = sbr.rel (0) target = $region109
    $region108: #{forward.1} parent=1 // pred_region
      %2496 = dma.done [#allocation5], 32
    $region109: #{forward.1} parent=1 // pred_fallthru
      _
    %2497 = vsyncpa [#allocation5], 1

</llo_original>
